<compile_context>
chip_gen: v6e
topology: v6e:2x2x1
jax: 0.10.0
libtpu: 0.0.40
codegen_flags: <defaults>
</compile_context>

<pallas_src>
import functools

import jax
import jax.numpy as jnp
from jax import lax
from jax.experimental import pallas as pl
from jax.experimental.pallas import tpu as pltpu

# --- scaled-down hyperparameters (same structure as the PyTorch module) ---
N_EMBD = 128          # reference: 384
N_HEADS = 4           # reference: 6
HEAD_SIZE = N_EMBD // N_HEADS
N_BLOCKS = 2          # reference: 6
BLOCK_SIZE = 64       # reference: 256 (max context)
VOCAB = 128
LN_EPS = 1e-5         # torch LayerNorm default


def _layernorm(x, gamma, beta):
    mu = jnp.mean(x, axis=-1, keepdims=True)
    var = jnp.mean(jnp.square(x - mu), axis=-1, keepdims=True)
    return (x - mu) * lax.rsqrt(var + LN_EPS) * gamma + beta


# ---------------------------------------------------------------------------
# Fused kernel: grid axis = transformer layer ("arbitrary", sequential).
# Activations (B*T, E) live in a VMEM scratch carried across layers; layer
# weights are streamed (double-buffered) by their BlockSpecs; the final
# LN + lm_head runs on the last grid step.
# ---------------------------------------------------------------------------
def _fused_kernel(B, T,
                  x_ref,
                  ln1g_ref, ln1b_ref, wqkv_ref, wproj_ref, bproj_ref,
                  ln2g_ref, ln2b_ref, w1_ref, b1_ref, w2_ref, b2_ref,
                  lnfg_ref, lnfb_ref, wlm_ref, blm_ref,
                  out_ref, x_state):
    layer = pl.program_id(0)
    n_layers = pl.num_programs(0)

    @pl.when(layer == 0)
    def _():
        x_state[...] = x_ref[...]

    x = x_state[...]                          # (M, E) float32, M = B*T
    M, E = x.shape
    H = N_HEADS
    D = E // H

    # ---------------- self-attention branch ----------------
    h = _layernorm(x, ln1g_ref[0], ln1b_ref[0])               # (M, E) f32
    h16 = h.astype(jnp.bfloat16)

    # Q,K,V for all heads in one batched MXU einsum, already head-major.
    wqkv = wqkv_ref[0]                                        # (3H, E, D) bf16
    hb = jnp.broadcast_to(h16[None], (3 * H, M, E))
    qkv = jnp.einsum("nme,ned->nmd", hb, wqkv,
                     preferred_element_type=jnp.float32)      # (3H, M, D) f32
    q, k, v = qkv[:H], qkv[H:2 * H], qkv[2 * H:]              # each (H, M, D)

    row = lax.broadcasted_iota(jnp.int32, (T, T), 0)
    col = lax.broadcasted_iota(jnp.int32, (T, T), 1)
    causal = row >= col                                       # tril mask
    neg = jnp.float32(-1e30)                                  # finite, not -inf
    wproj = wproj_ref[0]                                      # (H, D, E) bf16

    attn_rows = []
    for b in range(B):                                        # static, small B
        sl = slice(b * T, (b + 1) * T)                        # sublane row slice
        qb = q[:, sl, :].astype(jnp.bfloat16)                 # (H, T, D)
        kb = k[:, sl, :].astype(jnp.bfloat16)
        vb = v[:, sl, :].astype(jnp.bfloat16)
        # scores: scale (n_embd**-0.5) is folded into Wq at init
        s = jnp.einsum("hqd,hkd->hqk", qb, kb,
                       preferred_element_type=jnp.float32)    # (H, T, T)
        s = jnp.where(causal[None], s, neg)
        s = s - jnp.max(s, axis=-1, keepdims=True)
        p = jnp.exp(s)
        p = p * pl.reciprocal(jnp.sum(p, axis=-1, keepdims=True), approx=True)
        o = jnp.einsum("hqk,hkd->hqd", p.astype(jnp.bfloat16), vb,
                       preferred_element_type=jnp.float32)    # (H, T, D)
        # output projection folded per head: proj(concat_h O_h) = sum_h O_h @ Wp_h
        ob = jnp.einsum("hqd,hde->hqe", o.astype(jnp.bfloat16), wproj,
                        preferred_element_type=jnp.float32)   # (H, T, E)
        attn_rows.append(jnp.sum(ob, axis=0))                 # (T, E)
    attn = jnp.concatenate(attn_rows, axis=0) + bproj_ref[0]  # (M, E)

    x1 = x + attn

    # ---------------- feed-forward branch ----------------
    h2 = _layernorm(x1, ln2g_ref[0], ln2b_ref[0])
    ff = jnp.dot(h2.astype(jnp.bfloat16), w1_ref[0],
                 preferred_element_type=jnp.float32) + b1_ref[0]
    ff = jnp.maximum(ff, 0.0)
    ff = jnp.dot(ff.astype(jnp.bfloat16), w2_ref[0],
                 preferred_element_type=jnp.float32) + b2_ref[0]

    x_new = x1 + ff
    x_state[...] = x_new

    # ---------------- final LN + lm_head (last layer only) ----------------
    @pl.when(layer == n_layers - 1)
    def _():
        xf = _layernorm(x_new, lnfg_ref[...], lnfb_ref[...])
        out_ref[...] = (jnp.dot(xf.astype(jnp.bfloat16), wlm_ref[...],
                                preferred_element_type=jnp.float32)
                        + blm_ref[...])


def tiny_gpt_pallas(x, params):
    """x: (B, T, E) float32 embeddings. Returns logits (B, T, V) float32."""
    B, T, E = x.shape
    V = params["w_lm"].shape[-1]
    M = B * T
    x2 = x.reshape(M, E)

    layer_keys = ("ln1_g", "ln1_b", "w_qkv", "w_proj", "b_proj",
                  "ln2_g", "ln2_b", "w1", "b1", "w2", "b2")
    layer_args = [params[k] for k in layer_keys]
    head_args = [params["lnf_g"], params["lnf_b"], params["w_lm"], params["b_lm"]]

    def layer_spec(arr):                       # streamed per layer-grid step
        zeros = (0,) * (arr.ndim - 1)
        return pl.BlockSpec((1,) + arr.shape[1:], lambda l: (l,) + zeros)

    def const_spec(arr):                       # resident across all steps
        zeros = (0,) * arr.ndim
        return pl.BlockSpec(arr.shape, lambda l: zeros)

    out = pl.pallas_call(
        functools.partial(_fused_kernel, B, T),
        out_shape=jax.ShapeDtypeStruct((M, V), jnp.float32),
        grid_spec=pltpu.PrefetchScalarGridSpec(
            num_scalar_prefetch=0,
            grid=(N_BLOCKS,),
            in_specs=[pl.BlockSpec((M, E), lambda l: (0, 0))]
                     + [layer_spec(a) for a in layer_args]
                     + [const_spec(a) for a in head_args],
            out_specs=pl.BlockSpec((M, V), lambda l: (0, 0)),
            scratch_shapes=[pltpu.VMEM((M, E), jnp.float32)],
        ),
        compiler_params=pltpu.CompilerParams(
            # layer axis is a sequential dependency -> "arbitrary"
            dimension_semantics=("arbitrary",),
        ),
    )(x2, *layer_args, *head_args)
    return out.reshape(B, T, V)


# ---------------------------------------------------------------------------
# Parameter construction (deterministic, synthetic). Big weights in bf16.
# ---------------------------------------------------------------------------
def init_params(key, vocab_size):
    def nrm(k, shape, scale=0.02):
        return (scale * jax.random.normal(k, shape)).astype(jnp.float32)

    keys = jax.random.split(key, 3 + N_BLOCKS)
    qk_scale = float(N_EMBD) ** -0.5   # reference uses C**-0.5 with C = n_embd

    blocks = {name: [] for name in
              ("ln1_g", "ln1_b", "w_qkv", "w_proj", "b_proj",
               "ln2_g", "ln2_b", "w1", "b1", "w2", "b2")}
    for bi in range(N_BLOCKS):
        bk = jax.random.split(keys[3 + bi], 6)
        wq = nrm(bk[0], (N_HEADS, N_EMBD, HEAD_SIZE)) * qk_scale  # scale folded in
        wk = nrm(bk[1], (N_HEADS, N_EMBD, HEAD_SIZE))
        wv = nrm(bk[2], (N_HEADS, N_EMBD, HEAD_SIZE))
        blocks["ln1_g"].append(jnp.ones((1, N_EMBD), jnp.float32))
        blocks["ln1_b"].append(jnp.zeros((1, N_EMBD), jnp.float32))
        blocks["w_qkv"].append(
            jnp.concatenate([wq, wk, wv], axis=0).astype(jnp.bfloat16))
        blocks["w_proj"].append(
            nrm(bk[3], (N_HEADS, HEAD_SIZE, N_EMBD)).astype(jnp.bfloat16))
        blocks["b_proj"].append(jnp.zeros((1, N_EMBD), jnp.float32))
        blocks["ln2_g"].append(jnp.ones((1, N_EMBD), jnp.float32))
        blocks["ln2_b"].append(jnp.zeros((1, N_EMBD), jnp.float32))
        blocks["w1"].append(nrm(bk[4], (N_EMBD, 4 * N_EMBD)).astype(jnp.bfloat16))
        blocks["b1"].append(jnp.zeros((1, 4 * N_EMBD), jnp.float32))
        blocks["w2"].append(nrm(bk[5], (4 * N_EMBD, N_EMBD)).astype(jnp.bfloat16))
        blocks["b2"].append(jnp.zeros((1, N_EMBD), jnp.float32))

    params = {
        "tok_emb": nrm(keys[0], (vocab_size, N_EMBD)),
        "pos_emb": nrm(keys[1], (BLOCK_SIZE, N_EMBD)),
        "lnf_g": jnp.ones((1, N_EMBD), jnp.float32),
        "lnf_b": jnp.zeros((1, N_EMBD), jnp.float32),
        "w_lm": nrm(keys[2], (N_EMBD, vocab_size)).astype(jnp.bfloat16),
        "b_lm": jnp.zeros((1, vocab_size), jnp.float32),
    }
    params.update({k: jnp.stack(v, axis=0) for k, v in blocks.items()})
    return params


@jax.jit
def tiny_gpt_forward(idx, params):
    """idx: (B, T) int32 token ids. Returns logits (B, T, VOCAB)."""
    B, T = idx.shape
    tok_emb = jnp.take(params["tok_emb"], idx, axis=0)        # (B, T, E) — glue gather
    pos_emb = params["pos_emb"][:T]                           # (T, E)
    x = tok_emb + pos_emb[None, :, :]
    return tiny_gpt_pallas(x, params)                         # loss is None (targets=None)


if __name__ == "__main__":
    key = jax.random.PRNGKey(0)
    pkey, ikey = jax.random.split(key)
    params = init_params(pkey, VOCAB)

    B, T = 2, 16                       # small, T <= BLOCK_SIZE
    idx = jax.random.randint(ikey, (B, T), 0, VOCAB, dtype=jnp.int32)

    logits = tiny_gpt_forward(idx, params)
    logits = jax.block_until_ready(logits)
    assert logits.shape == (B, T, VOCAB)
    assert bool(jnp.all(jnp.isfinite(logits)))
    print("KERNEL_OK")
</pallas_src>

<mosaic_0001>
module attributes {stable_mosaic.version = 11 : i64} {
  func.func @_fused_kernel(%arg0: i32, %arg1: memref<32x128xf32, #tpu.memory_space<vmem>>, %arg2: memref<1x1x128xf32, #tpu.memory_space<vmem>>, %arg3: memref<1x1x128xf32, #tpu.memory_space<vmem>>, %arg4: memref<1x12x128x32xbf16, #tpu.memory_space<vmem>>, %arg5: memref<1x4x32x128xbf16, #tpu.memory_space<vmem>>, %arg6: memref<1x1x128xf32, #tpu.memory_space<vmem>>, %arg7: memref<1x1x128xf32, #tpu.memory_space<vmem>>, %arg8: memref<1x1x128xf32, #tpu.memory_space<vmem>>, %arg9: memref<1x128x512xbf16, #tpu.memory_space<vmem>>, %arg10: memref<1x1x512xf32, #tpu.memory_space<vmem>>, %arg11: memref<1x512x128xbf16, #tpu.memory_space<vmem>>, %arg12: memref<1x1x128xf32, #tpu.memory_space<vmem>>, %arg13: memref<1x128xf32, #tpu.memory_space<vmem>>, %arg14: memref<1x128xf32, #tpu.memory_space<vmem>>, %arg15: memref<128x128xbf16, #tpu.memory_space<vmem>>, %arg16: memref<1x128xf32, #tpu.memory_space<vmem>>, %arg17: memref<32x128xf32, #tpu.memory_space<vmem>>, %arg18: memref<32x128xf32, #tpu.memory_space<vmem>>) attributes {dimension_semantics = [#tpu.dimension_semantics<arbitrary>], iteration_bounds = array<i64: 2>, scalar_prefetch = 0 : i64, scratch_operands = 1 : i64, tpu.core_type = #tpu.core_type<tc>, window_params = [{pipeline_mode = #tpu.pipeline_mode<synchronous>, transform_indices = @transform_0, window_bounds = array<i64: 32, 128>}, {transform_indices = @transform_1, window_bounds = array<i64: 1, 1, 128>}, {transform_indices = @transform_2, window_bounds = array<i64: 1, 1, 128>}, {transform_indices = @transform_3, window_bounds = array<i64: 1, 12, 128, 32>}, {transform_indices = @transform_4, window_bounds = array<i64: 1, 4, 32, 128>}, {transform_indices = @transform_5, window_bounds = array<i64: 1, 1, 128>}, {transform_indices = @transform_6, window_bounds = array<i64: 1, 1, 128>}, {transform_indices = @transform_7, window_bounds = array<i64: 1, 1, 128>}, {transform_indices = @transform_8, window_bounds = array<i64: 1, 128, 512>}, {transform_indices = @transform_9, window_bounds = array<i64: 1, 1, 512>}, {transform_indices = @transform_10, window_bounds = array<i64: 1, 512, 128>}, {transform_indices = @transform_11, window_bounds = array<i64: 1, 1, 128>}, {pipeline_mode = #tpu.pipeline_mode<synchronous>, transform_indices = @transform_12, window_bounds = array<i64: 1, 128>}, {pipeline_mode = #tpu.pipeline_mode<synchronous>, transform_indices = @transform_13, window_bounds = array<i64: 1, 128>}, {pipeline_mode = #tpu.pipeline_mode<synchronous>, transform_indices = @transform_14, window_bounds = array<i64: 128, 128>}, {pipeline_mode = #tpu.pipeline_mode<synchronous>, transform_indices = @transform_15, window_bounds = array<i64: 1, 128>}, {pipeline_mode = #tpu.pipeline_mode<synchronous>, transform_indices = @transform_16, window_bounds = array<i64: 32, 128>}]} {
    %c0_i32 = arith.constant 0 : i32
    %0 = arith.cmpi eq, %arg0, %c0_i32 : i32
    %1 = arith.extui %0 : i1 to i32
    %c0_i32_0 = arith.constant 0 : i32
    %2 = arith.cmpi ne, %1, %c0_i32_0 : i32
    scf.if %2 {
      %c0_67 = arith.constant 0 : index
      %c0_68 = arith.constant 0 : index
      %154 = vector.load %arg1[%c0_67, %c0_68] : memref<32x128xf32, #tpu.memory_space<vmem>>, vector<32x128xf32>
      %c0_69 = arith.constant 0 : index
      %c0_70 = arith.constant 0 : index
      %155 = vector.load %arg18[%c0_69, %c0_70] : memref<32x128xf32, #tpu.memory_space<vmem>>, vector<32x128xf32>
      tpu.vector_store %arg18[%c0_69, %c0_70], %154 {strides = array<i32>} : memref<32x128xf32, #tpu.memory_space<vmem>>, vector<32x128xf32>,
    } else {
    }
    %c0 = arith.constant 0 : index
    %c0_1 = arith.constant 0 : index
    %3 = vector.load %arg18[%c0, %c0_1] : memref<32x128xf32, #tpu.memory_space<vmem>>, vector<32x128xf32>
    %c0_2 = arith.constant 0 : index
    %c0_3 = arith.constant 0 : index
    %c0_4 = arith.constant 0 : index
    %4 = vector.load %arg2[%c0_2, %c0_3, %c0_4] : memref<1x1x128xf32, #tpu.memory_space<vmem>>, vector<1x1x128xf32>
    %5 = vector.shape_cast %4 : vector<1x1x128xf32> to vector<1x128xf32>
    %c0_5 = arith.constant 0 : index
    %c0_6 = arith.constant 0 : index
    %c0_7 = arith.constant 0 : index
    %6 = vector.load %arg3[%c0_5, %c0_6, %c0_7] : memref<1x1x128xf32, #tpu.memory_space<vmem>>, vector<1x1x128xf32>
    %7 = vector.shape_cast %6 : vector<1x1x128xf32> to vector<1x128xf32>
    %cst = arith.constant dense<0.000000e+00> : vector<32xf32>
    %8 = vector.multi_reduction <add>, %3, %cst [1] : vector<32x128xf32> to vector<32xf32>
    %9 = vector.shape_cast %8 : vector<32xf32> to vector<32x1xf32>
    %cst_8 = arith.constant 1.280000e+02 : f32
    %10 = vector.broadcast %cst_8 : f32 to vector<32x1xf32>
    %11 = arith.divf %9, %10 : vector<32x1xf32>
    %12 = vector.broadcast %11 : vector<32x1xf32> to vector<32x128xf32>
    %13 = arith.subf %3, %12 : vector<32x128xf32>
    %14 = arith.mulf %13, %13 : vector<32x128xf32>
    %cst_9 = arith.constant dense<0.000000e+00> : vector<32xf32>
    %15 = vector.multi_reduction <add>, %14, %cst_9 [1] : vector<32x128xf32> to vector<32xf32>
    %16 = vector.shape_cast %15 : vector<32xf32> to vector<32x1xf32>
    %cst_10 = arith.constant 1.280000e+02 : f32
    %17 = vector.broadcast %cst_10 : f32 to vector<32x1xf32>
    %18 = arith.divf %16, %17 : vector<32x1xf32>
    %19 = vector.broadcast %11 : vector<32x1xf32> to vector<32x128xf32>
    %20 = arith.subf %3, %19 : vector<32x128xf32>
    %cst_11 = arith.constant 9.99999974E-6 : f32
    %21 = vector.broadcast %cst_11 : f32 to vector<32x1xf32>
    %22 = arith.addf %18, %21 : vector<32x1xf32>
    %23 = math.rsqrt %22 : vector<32x1xf32>
    %24 = vector.broadcast %23 : vector<32x1xf32> to vector<32x128xf32>
    %25 = arith.mulf %20, %24 : vector<32x128xf32>
    %26 = vector.broadcast %5 : vector<1x128xf32> to vector<32x128xf32>
    %27 = arith.mulf %25, %26 : vector<32x128xf32>
    %28 = vector.broadcast %7 : vector<1x128xf32> to vector<32x128xf32>
    %29 = arith.addf %27, %28 : vector<32x128xf32>
    %30 = arith.truncf %29 : vector<32x128xf32> to vector<32x128xbf16>
    %c0_12 = arith.constant 0 : index
    %c0_13 = arith.constant 0 : index
    %c0_14 = arith.constant 0 : index
    %c0_15 = arith.constant 0 : index
    %31 = vector.load %arg4[%c0_12, %c0_13, %c0_14, %c0_15] : memref<1x12x128x32xbf16, #tpu.memory_space<vmem>>, vector<1x12x128x32xbf16>
    %32 = vector.shape_cast %31 : vector<1x12x128x32xbf16> to vector<12x128x32xbf16>
    %33 = vector.shape_cast %30 : vector<32x128xbf16> to vector<1x32x128xbf16>
    %34 = vector.shape_cast %33 : vector<1x32x128xbf16> to vector<1x32x128xbf16>
    %35 = vector.broadcast %34 : vector<1x32x128xbf16> to vector<12x32x128xbf16>
    "tpu.trace_start"() <{level = 10 : i32, message = "nme,ned->nmd"}> : () -> ()
    %cst_16 = arith.constant dense<0.000000e+00> : vector<12x32x32xf32>
    %36 = tpu.matmul %35, %32, %cst_16 {dimension_numbers = #tpu.dot_dimension_numbers<[2], [1], [1], [2], [0, 0, 0, 1, 1, 2], [0], [0]>} : vector<12x32x128xbf16>, vector<12x128x32xbf16>, vector<12x32x32xf32> -> vector<12x32x32xf32>
    "tpu.trace_stop"() : () -> ()
    %37 = vector.extract_strided_slice %36 {offsets = [0, 0, 0], sizes = [4, 32, 32], strides = [1, 1, 1]} : vector<12x32x32xf32> to vector<4x32x32xf32>
    %38 = vector.extract_strided_slice %36 {offsets = [4, 0, 0], sizes = [4, 32, 32], strides = [1, 1, 1]} : vector<12x32x32xf32> to vector<4x32x32xf32>
    %39 = vector.extract_strided_slice %36 {offsets = [8, 0, 0], sizes = [4, 32, 32], strides = [1, 1, 1]} : vector<12x32x32xf32> to vector<4x32x32xf32>
    %40 = tpu.iota {dimensions = array<i32: 0>} : vector<16x16xi32>
    %41 = tpu.iota {dimensions = array<i32: 1>} : vector<16x16xi32>
    %42 = arith.cmpi sge, %40, %41 : vector<16x16xi32>
    %c0_17 = arith.constant 0 : index
    %c0_18 = arith.constant 0 : index
    %c0_19 = arith.constant 0 : index
    %c0_20 = arith.constant 0 : index
    %43 = vector.load %arg5[%c0_17, %c0_18, %c0_19, %c0_20] : memref<1x4x32x128xbf16, #tpu.memory_space<vmem>>, vector<1x4x32x128xbf16>
    %44 = vector.shape_cast %43 : vector<1x4x32x128xbf16> to vector<4x32x128xbf16>
    %45 = vector.extract_strided_slice %37 {offsets = [0, 0, 0], sizes = [4, 16, 32], strides = [1, 1, 1]} : vector<4x32x32xf32> to vector<4x16x32xf32>
    %46 = arith.truncf %45 : vector<4x16x32xf32> to vector<4x16x32xbf16>
    %47 = vector.extract_strided_slice %38 {offsets = [0, 0, 0], sizes = [4, 16, 32], strides = [1, 1, 1]} : vector<4x32x32xf32> to vector<4x16x32xf32>
    %48 = arith.truncf %47 : vector<4x16x32xf32> to vector<4x16x32xbf16>
    %49 = vector.extract_strided_slice %39 {offsets = [0, 0, 0], sizes = [4, 16, 32], strides = [1, 1, 1]} : vector<4x32x32xf32> to vector<4x16x32xf32>
    %50 = arith.truncf %49 : vector<4x16x32xf32> to vector<4x16x32xbf16>
    "tpu.trace_start"() <{level = 10 : i32, message = "hqd,hkd->hqk"}> : () -> ()
    %cst_21 = arith.constant dense<0.000000e+00> : vector<4x16x16xf32>
    %51 = tpu.matmul %46, %48, %cst_21 {dimension_numbers = #tpu.dot_dimension_numbers<[2], [2], [1], [1], [0, 0, 0, 1, 1, 1], [0], [0]>} : vector<4x16x32xbf16>, vector<4x16x32xbf16>, vector<4x16x16xf32> -> vector<4x16x16xf32>
    "tpu.trace_stop"() : () -> ()
    %52 = vector.shape_cast %42 : vector<16x16xi1> to vector<1x16x16xi1>
    %cst_22 = arith.constant -1.000000e+30 : f32
    %53 = vector.shape_cast %52 : vector<1x16x16xi1> to vector<1x16x16xi1>
    %54 = vector.broadcast %53 : vector<1x16x16xi1> to vector<4x16x16xi1>
    %55 = vector.broadcast %cst_22 : f32 to vector<4x16x16xf32>
    %56 = arith.select %54, %51, %55 : vector<4x16x16xi1>, vector<4x16x16xf32>
    %cst_23 = arith.constant dense<0xFF800000> : vector<4x16xf32>
    %57 = vector.multi_reduction <maximumf>, %56, %cst_23 [2] : vector<4x16x16xf32> to vector<4x16xf32>
    %58 = vector.shape_cast %57 : vector<4x16xf32> to vector<4x16x1xf32>
    %59 = vector.broadcast %58 : vector<4x16x1xf32> to vector<4x16x16xf32>
    %60 = arith.subf %56, %59 : vector<4x16x16xf32>
    %61 = math.exp %60 : vector<4x16x16xf32>
    %cst_24 = arith.constant dense<0.000000e+00> : vector<4x16xf32>
    %62 = vector.multi_reduction <add>, %61, %cst_24 [2] : vector<4x16x16xf32> to vector<4x16xf32>
    %63 = vector.shape_cast %62 : vector<4x16xf32> to vector<4x16x1xf32>
    %64 = tpu.reciprocal %63 {approx = true} : vector<4x16x1xf32> -> vector<4x16x1xf32>
    %65 = vector.broadcast %64 : vector<4x16x1xf32> to vector<4x16x16xf32>
    %66 = arith.mulf %61, %65 : vector<4x16x16xf32>
    %67 = arith.truncf %66 : vector<4x16x16xf32> to vector<4x16x16xbf16>
    "tpu.trace_start"() <{level = 10 : i32, message = "hqk,hkd->hqd"}> : () -> ()
    %cst_25 = arith.constant dense<0.000000e+00> : vector<4x16x32xf32>
    %68 = tpu.matmul %67, %50, %cst_25 {dimension_numbers = #tpu.dot_dimension_numbers<[2], [1], [1], [2], [0, 0, 0, 1, 1, 2], [0], [0]>} : vector<4x16x16xbf16>, vector<4x16x32xbf16>, vector<4x16x32xf32> -> vector<4x16x32xf32>
    "tpu.trace_stop"() : () -> ()
    %69 = arith.truncf %68 : vector<4x16x32xf32> to vector<4x16x32xbf16>
    "tpu.trace_start"() <{level = 10 : i32, message = "hqd,hde->hqe"}> : () -> ()
    %cst_26 = arith.constant dense<0.000000e+00> : vector<4x16x128xf32>
    %70 = tpu.matmul %69, %44, %cst_26 {dimension_numbers = #tpu.dot_dimension_numbers<[2], [1], [1], [2], [0, 0, 0, 1, 1, 2], [0], [0]>} : vector<4x16x32xbf16>, vector<4x32x128xbf16>, vector<4x16x128xf32> -> vector<4x16x128xf32>
    "tpu.trace_stop"() : () -> ()
    %cst_27 = arith.constant dense<0.000000e+00> : vector<16x128xf32>
    %71 = vector.multi_reduction <add>, %70, %cst_27 [0] : vector<4x16x128xf32> to vector<16x128xf32>
    %72 = vector.extract_strided_slice %37 {offsets = [0, 16, 0], sizes = [4, 16, 32], strides = [1, 1, 1]} : vector<4x32x32xf32> to vector<4x16x32xf32>
    %73 = arith.truncf %72 : vector<4x16x32xf32> to vector<4x16x32xbf16>
    %74 = vector.extract_strided_slice %38 {offsets = [0, 16, 0], sizes = [4, 16, 32], strides = [1, 1, 1]} : vector<4x32x32xf32> to vector<4x16x32xf32>
    %75 = arith.truncf %74 : vector<4x16x32xf32> to vector<4x16x32xbf16>
    %76 = vector.extract_strided_slice %39 {offsets = [0, 16, 0], sizes = [4, 16, 32], strides = [1, 1, 1]} : vector<4x32x32xf32> to vector<4x16x32xf32>
    %77 = arith.truncf %76 : vector<4x16x32xf32> to vector<4x16x32xbf16>
    "tpu.trace_start"() <{level = 10 : i32, message = "hqd,hkd->hqk"}> : () -> ()
    %cst_28 = arith.constant dense<0.000000e+00> : vector<4x16x16xf32>
    %78 = tpu.matmul %73, %75, %cst_28 {dimension_numbers = #tpu.dot_dimension_numbers<[2], [2], [1], [1], [0, 0, 0, 1, 1, 1], [0], [0]>} : vector<4x16x32xbf16>, vector<4x16x32xbf16>, vector<4x16x16xf32> -> vector<4x16x16xf32>
    "tpu.trace_stop"() : () -> ()
    %79 = vector.shape_cast %42 : vector<16x16xi1> to vector<1x16x16xi1>
    %cst_29 = arith.constant -1.000000e+30 : f32
    %80 = vector.shape_cast %79 : vector<1x16x16xi1> to vector<1x16x16xi1>
    %81 = vector.broadcast %80 : vector<1x16x16xi1> to vector<4x16x16xi1>
    %82 = vector.broadcast %cst_29 : f32 to vector<4x16x16xf32>
    %83 = arith.select %81, %78, %82 : vector<4x16x16xi1>, vector<4x16x16xf32>
    %cst_30 = arith.constant dense<0xFF800000> : vector<4x16xf32>
    %84 = vector.multi_reduction <maximumf>, %83, %cst_30 [2] : vector<4x16x16xf32> to vector<4x16xf32>
    %85 = vector.shape_cast %84 : vector<4x16xf32> to vector<4x16x1xf32>
    %86 = vector.broadcast %85 : vector<4x16x1xf32> to vector<4x16x16xf32>
    %87 = arith.subf %83, %86 : vector<4x16x16xf32>
    %88 = math.exp %87 : vector<4x16x16xf32>
    %cst_31 = arith.constant dense<0.000000e+00> : vector<4x16xf32>
    %89 = vector.multi_reduction <add>, %88, %cst_31 [2] : vector<4x16x16xf32> to vector<4x16xf32>
    %90 = vector.shape_cast %89 : vector<4x16xf32> to vector<4x16x1xf32>
    %91 = tpu.reciprocal %90 {approx = true} : vector<4x16x1xf32> -> vector<4x16x1xf32>
    %92 = vector.broadcast %91 : vector<4x16x1xf32> to vector<4x16x16xf32>
    %93 = arith.mulf %88, %92 : vector<4x16x16xf32>
    %94 = arith.truncf %93 : vector<4x16x16xf32> to vector<4x16x16xbf16>
    "tpu.trace_start"() <{level = 10 : i32, message = "hqk,hkd->hqd"}> : () -> ()
    %cst_32 = arith.constant dense<0.000000e+00> : vector<4x16x32xf32>
    %95 = tpu.matmul %94, %77, %cst_32 {dimension_numbers = #tpu.dot_dimension_numbers<[2], [1], [1], [2], [0, 0, 0, 1, 1, 2], [0], [0]>} : vector<4x16x16xbf16>, vector<4x16x32xbf16>, vector<4x16x32xf32> -> vector<4x16x32xf32>
    "tpu.trace_stop"() : () -> ()
    %96 = arith.truncf %95 : vector<4x16x32xf32> to vector<4x16x32xbf16>
    "tpu.trace_start"() <{level = 10 : i32, message = "hqd,hde->hqe"}> : () -> ()
    %cst_33 = arith.constant dense<0.000000e+00> : vector<4x16x128xf32>
    %97 = tpu.matmul %96, %44, %cst_33 {dimension_numbers = #tpu.dot_dimension_numbers<[2], [1], [1], [2], [0, 0, 0, 1, 1, 2], [0], [0]>} : vector<4x16x32xbf16>, vector<4x32x128xbf16>, vector<4x16x128xf32> -> vector<4x16x128xf32>
    "tpu.trace_stop"() : () -> ()
    %cst_34 = arith.constant dense<0.000000e+00> : vector<16x128xf32>
    %98 = vector.multi_reduction <add>, %97, %cst_34 [0] : vector<4x16x128xf32> to vector<16x128xf32>
    %99 = tpu.concatenate %71, %98 in 0 : vector<16x128xf32>, vector<16x128xf32> -> vector<32x128xf32>
    %c0_35 = arith.constant 0 : index
    %c0_36 = arith.constant 0 : index
    %c0_37 = arith.constant 0 : index
    %100 = vector.load %arg6[%c0_35, %c0_36, %c0_37] : memref<1x1x128xf32, #tpu.memory_space<vmem>>, vector<1x1x128xf32>
    %101 = vector.shape_cast %100 : vector<1x1x128xf32> to vector<1x128xf32>
    %102 = vector.broadcast %101 : vector<1x128xf32> to vector<32x128xf32>
    %103 = arith.addf %99, %102 : vector<32x128xf32>
    %104 = arith.addf %3, %103 : vector<32x128xf32>
    %c0_38 = arith.constant 0 : index
    %c0_39 = arith.constant 0 : index
    %c0_40 = arith.constant 0 : index
    %105 = vector.load %arg7[%c0_38, %c0_39, %c0_40] : memref<1x1x128xf32, #tpu.memory_space<vmem>>, vector<1x1x128xf32>
    %106 = vector.shape_cast %105 : vector<1x1x128xf32> to vector<1x128xf32>
    %c0_41 = arith.constant 0 : index
    %c0_42 = arith.constant 0 : index
    %c0_43 = arith.constant 0 : index
    %107 = vector.load %arg8[%c0_41, %c0_42, %c0_43] : memref<1x1x128xf32, #tpu.memory_space<vmem>>, vector<1x1x128xf32>
    %108 = vector.shape_cast %107 : vector<1x1x128xf32> to vector<1x128xf32>
    %cst_44 = arith.constant dense<0.000000e+00> : vector<32xf32>
    %109 = vector.multi_reduction <add>, %104, %cst_44 [1] : vector<32x128xf32> to vector<32xf32>
    %110 = vector.shape_cast %109 : vector<32xf32> to vector<32x1xf32>
    %cst_45 = arith.constant 1.280000e+02 : f32
    %111 = vector.broadcast %cst_45 : f32 to vector<32x1xf32>
    %112 = arith.divf %110, %111 : vector<32x1xf32>
    %113 = vector.broadcast %112 : vector<32x1xf32> to vector<32x128xf32>
    %114 = arith.subf %104, %113 : vector<32x128xf32>
    %115 = arith.mulf %114, %114 : vector<32x128xf32>
    %cst_46 = arith.constant dense<0.000000e+00> : vector<32xf32>
    %116 = vector.multi_reduction <add>, %115, %cst_46 [1] : vector<32x128xf32> to vector<32xf32>
    %117 = vector.shape_cast %116 : vector<32xf32> to vector<32x1xf32>
    %cst_47 = arith.constant 1.280000e+02 : f32
    %118 = vector.broadcast %cst_47 : f32 to vector<32x1xf32>
    %119 = arith.divf %117, %118 : vector<32x1xf32>
    %120 = vector.broadcast %112 : vector<32x1xf32> to vector<32x128xf32>
    %121 = arith.subf %104, %120 : vector<32x128xf32>
    %cst_48 = arith.constant 9.99999974E-6 : f32
    %122 = vector.broadcast %cst_48 : f32 to vector<32x1xf32>
    %123 = arith.addf %119, %122 : vector<32x1xf32>
    %124 = math.rsqrt %123 : vector<32x1xf32>
    %125 = vector.broadcast %124 : vector<32x1xf32> to vector<32x128xf32>
    %126 = arith.mulf %121, %125 : vector<32x128xf32>
    %127 = vector.broadcast %106 : vector<1x128xf32> to vector<32x128xf32>
    %128 = arith.mulf %126, %127 : vector<32x128xf32>
    %129 = vector.broadcast %108 : vector<1x128xf32> to vector<32x128xf32>
    %130 = arith.addf %128, %129 : vector<32x128xf32>
    %131 = arith.truncf %130 : vector<32x128xf32> to vector<32x128xbf16>
    %c0_49 = arith.constant 0 : index
    %c0_50 = arith.constant 0 : index
    %c0_51 = arith.constant 0 : index
    %132 = vector.load %arg9[%c0_49, %c0_50, %c0_51] : memref<1x128x512xbf16, #tpu.memory_space<vmem>>, vector<1x128x512xbf16>
    %133 = vector.shape_cast %132 : vector<1x128x512xbf16> to vector<128x512xbf16>
    %cst_52 = arith.constant dense<0.000000e+00> : vector<32x512xf32>
    %134 = tpu.matmul %131, %133, %cst_52 {dimension_numbers = #tpu.dot_dimension_numbers<[1], [0], [0], [1], [0, 0, 1, 1], [], []>} : vector<32x128xbf16>, vector<128x512xbf16>, vector<32x512xf32> -> vector<32x512xf32>
    %c0_53 = arith.constant 0 : index
    %c0_54 = arith.constant 0 : index
    %c0_55 = arith.constant 0 : index
    %135 = vector.load %arg10[%c0_53, %c0_54, %c0_55] : memref<1x1x512xf32, #tpu.memory_space<vmem>>, vector<1x1x512xf32>
    %136 = vector.shape_cast %135 : vector<1x1x512xf32> to vector<1x512xf32>
    %137 = vector.broadcast %136 : vector<1x512xf32> to vector<32x512xf32>
    %138 = arith.addf %134, %137 : vector<32x512xf32>
    %cst_56 = arith.constant 0.000000e+00 : f32
    %139 = vector.broadcast %cst_56 : f32 to vector<32x512xf32>
    %140 = arith.maximumf %138, %139 : vector<32x512xf32>
    %141 = arith.truncf %140 : vector<32x512xf32> to vector<32x512xbf16>
    %c0_57 = arith.constant 0 : index
    %c0_58 = arith.constant 0 : index
    %c0_59 = arith.constant 0 : index
    %142 = vector.load %arg11[%c0_57, %c0_58, %c0_59] : memref<1x512x128xbf16, #tpu.memory_space<vmem>>, vector<1x512x128xbf16>
    %143 = vector.shape_cast %142 : vector<1x512x128xbf16> to vector<512x128xbf16>
    %cst_60 = arith.constant dense<0.000000e+00> : vector<32x128xf32>
    %144 = tpu.matmul %141, %143, %cst_60 {dimension_numbers = #tpu.dot_dimension_numbers<[1], [0], [0], [1], [0, 0, 1, 1], [], []>} : vector<32x512xbf16>, vector<512x128xbf16>, vector<32x128xf32> -> vector<32x128xf32>
    %c0_61 = arith.constant 0 : index
    %c0_62 = arith.constant 0 : index
    %c0_63 = arith.constant 0 : index
    %145 = vector.load %arg12[%c0_61, %c0_62, %c0_63] : memref<1x1x128xf32, #tpu.memory_space<vmem>>, vector<1x1x128xf32>
    %146 = vector.shape_cast %145 : vector<1x1x128xf32> to vector<1x128xf32>
    %147 = vector.broadcast %146 : vector<1x128xf32> to vector<32x128xf32>
    %148 = arith.addf %144, %147 : vector<32x128xf32>
    %149 = arith.addf %104, %148 : vector<32x128xf32>
    %c0_64 = arith.constant 0 : index
    %c0_65 = arith.constant 0 : index
    %150 = vector.load %arg18[%c0_64, %c0_65] : memref<32x128xf32, #tpu.memory_space<vmem>>, vector<32x128xf32>
    tpu.vector_store %arg18[%c0_64, %c0_65], %149 {strides = array<i32>} : memref<32x128xf32, #tpu.memory_space<vmem>>, vector<32x128xf32>,
    %c1_i32 = arith.constant 1 : i32
    %151 = arith.cmpi eq, %arg0, %c1_i32 : i32
    %152 = arith.extui %151 : i1 to i32
    %c0_i32_66 = arith.constant 0 : i32
    %153 = arith.cmpi ne, %152, %c0_i32_66 : i32
    scf.if %153 {
      %c0_67 = arith.constant 0 : index
      %c0_68 = arith.constant 0 : index
      %154 = vector.load %arg13[%c0_67, %c0_68] : memref<1x128xf32, #tpu.memory_space<vmem>>, vector<1x128xf32>
      %c0_69 = arith.constant 0 : index
      %c0_70 = arith.constant 0 : index
      %155 = vector.load %arg14[%c0_69, %c0_70] : memref<1x128xf32, #tpu.memory_space<vmem>>, vector<1x128xf32>
      %cst_71 = arith.constant dense<0.000000e+00> : vector<32xf32>
      %156 = vector.multi_reduction <add>, %149, %cst_71 [1] : vector<32x128xf32> to vector<32xf32>
      %157 = vector.shape_cast %156 : vector<32xf32> to vector<32x1xf32>
      %cst_72 = arith.constant 1.280000e+02 : f32
      %158 = vector.broadcast %cst_72 : f32 to vector<32x1xf32>
      %159 = arith.divf %157, %158 : vector<32x1xf32>
      %160 = vector.broadcast %159 : vector<32x1xf32> to vector<32x128xf32>
      %161 = arith.subf %149, %160 : vector<32x128xf32>
      %162 = arith.mulf %161, %161 : vector<32x128xf32>
      %cst_73 = arith.constant dense<0.000000e+00> : vector<32xf32>
      %163 = vector.multi_reduction <add>, %162, %cst_73 [1] : vector<32x128xf32> to vector<32xf32>
      %164 = vector.shape_cast %163 : vector<32xf32> to vector<32x1xf32>
      %cst_74 = arith.constant 1.280000e+02 : f32
      %165 = vector.broadcast %cst_74 : f32 to vector<32x1xf32>
      %166 = arith.divf %164, %165 : vector<32x1xf32>
      %167 = vector.broadcast %159 : vector<32x1xf32> to vector<32x128xf32>
      %168 = arith.subf %149, %167 : vector<32x128xf32>
      %cst_75 = arith.constant 9.99999974E-6 : f32
      %169 = vector.broadcast %cst_75 : f32 to vector<32x1xf32>
      %170 = arith.addf %166, %169 : vector<32x1xf32>
      %171 = math.rsqrt %170 : vector<32x1xf32>
      %172 = vector.broadcast %171 : vector<32x1xf32> to vector<32x128xf32>
      %173 = arith.mulf %168, %172 : vector<32x128xf32>
      %174 = vector.broadcast %154 : vector<1x128xf32> to vector<32x128xf32>
      %175 = arith.mulf %173, %174 : vector<32x128xf32>
      %176 = vector.broadcast %155 : vector<1x128xf32> to vector<32x128xf32>
      %177 = arith.addf %175, %176 : vector<32x128xf32>
      %178 = arith.truncf %177 : vector<32x128xf32> to vector<32x128xbf16>
      %c0_76 = arith.constant 0 : index
      %c0_77 = arith.constant 0 : index
      %179 = vector.load %arg15[%c0_76, %c0_77] : memref<128x128xbf16, #tpu.memory_space<vmem>>, vector<128x128xbf16>
      %cst_78 = arith.constant dense<0.000000e+00> : vector<32x128xf32>
      %180 = tpu.matmul %178, %179, %cst_78 {dimension_numbers = #tpu.dot_dimension_numbers<[1], [0], [0], [1], [0, 0, 1, 1], [], []>} : vector<32x128xbf16>, vector<128x128xbf16>, vector<32x128xf32> -> vector<32x128xf32>
      %c0_79 = arith.constant 0 : index
      %c0_80 = arith.constant 0 : index
      %181 = vector.load %arg16[%c0_79, %c0_80] : memref<1x128xf32, #tpu.memory_space<vmem>>, vector<1x128xf32>
      %182 = vector.broadcast %181 : vector<1x128xf32> to vector<32x128xf32>
      %183 = arith.addf %180, %182 : vector<32x128xf32>
      %c0_81 = arith.constant 0 : index
      %c0_82 = arith.constant 0 : index
      %184 = vector.load %arg17[%c0_81, %c0_82] : memref<32x128xf32, #tpu.memory_space<vmem>>, vector<32x128xf32>
      tpu.vector_store %arg17[%c0_81, %c0_82], %183 {strides = array<i32>} : memref<32x128xf32, #tpu.memory_space<vmem>>, vector<32x128xf32>,
    } else {
    }
    return
  }
  func.func @transform_0(%arg0: i32) -> (i32, i32) {
    %c0_i32 = arith.constant 0 : i32
    %c0_i32_0 = arith.constant 0 : i32
    %c0_i32_1 = arith.constant 0 : i32
    return %c0_i32, %c0_i32_0 : i32, i32
  }
  func.func @transform_1(%arg0: i32) -> (i32, i32, i32) {
    %c0_i32 = arith.constant 0 : i32
    %c0_i32_0 = arith.constant 0 : i32
    %c0_i32_1 = arith.constant 0 : i32
    return %arg0, %c0_i32, %c0_i32_0 : i32, i32, i32
  }
  func.func @transform_2(%arg0: i32) -> (i32, i32, i32) {
    %c0_i32 = arith.constant 0 : i32
    %c0_i32_0 = arith.constant 0 : i32
    %c0_i32_1 = arith.constant 0 : i32
    return %arg0, %c0_i32, %c0_i32_0 : i32, i32, i32
  }
  func.func @transform_3(%arg0: i32) -> (i32, i32, i32, i32) {
    %c0_i32 = arith.constant 0 : i32
    %c0_i32_0 = arith.constant 0 : i32
    %c0_i32_1 = arith.constant 0 : i32
    %c0_i32_2 = arith.constant 0 : i32
    return %arg0, %c0_i32, %c0_i32_0, %c0_i32_1 : i32, i32, i32, i32
  }
  func.func @transform_4(%arg0: i32) -> (i32, i32, i32, i32) {
    %c0_i32 = arith.constant 0 : i32
    %c0_i32_0 = arith.constant 0 : i32
    %c0_i32_1 = arith.constant 0 : i32
    %c0_i32_2 = arith.constant 0 : i32
    return %arg0, %c0_i32, %c0_i32_0, %c0_i32_1 : i32, i32, i32, i32
  }
  func.func @transform_5(%arg0: i32) -> (i32, i32, i32) {
    %c0_i32 = arith.constant 0 : i32
    %c0_i32_0 = arith.constant 0 : i32
    %c0_i32_1 = arith.constant 0 : i32
    return %arg0, %c0_i32, %c0_i32_0 : i32, i32, i32
  }
  func.func @transform_6(%arg0: i32) -> (i32, i32, i32) {
    %c0_i32 = arith.constant 0 : i32
    %c0_i32_0 = arith.constant 0 : i32
    %c0_i32_1 = arith.constant 0 : i32
    return %arg0, %c0_i32, %c0_i32_0 : i32, i32, i32
  }
  func.func @transform_7(%arg0: i32) -> (i32, i32, i32) {
    %c0_i32 = arith.constant 0 : i32
    %c0_i32_0 = arith.constant 0 : i32
    %c0_i32_1 = arith.constant 0 : i32
    return %arg0, %c0_i32, %c0_i32_0 : i32, i32, i32
  }
  func.func @transform_8(%arg0: i32) -> (i32, i32, i32) {
    %c0_i32 = arith.constant 0 : i32
    %c0_i32_0 = arith.constant 0 : i32
    %c0_i32_1 = arith.constant 0 : i32
    return %arg0, %c0_i32, %c0_i32_0 : i32, i32, i32
  }
  func.func @transform_9(%arg0: i32) -> (i32, i32, i32) {
    %c0_i32 = arith.constant 0 : i32
    %c0_i32_0 = arith.constant 0 : i32
    %c0_i32_1 = arith.constant 0 : i32
    return %arg0, %c0_i32, %c0_i32_0 : i32, i32, i32
  }
  func.func @transform_10(%arg0: i32) -> (i32, i32, i32) {
    %c0_i32 = arith.constant 0 : i32
    %c0_i32_0 = arith.constant 0 : i32
    %c0_i32_1 = arith.constant 0 : i32
    return %arg0, %c0_i32, %c0_i32_0 : i32, i32, i32
  }
  func.func @transform_11(%arg0: i32) -> (i32, i32, i32) {
    %c0_i32 = arith.constant 0 : i32
    %c0_i32_0 = arith.constant 0 : i32
    %c0_i32_1 = arith.constant 0 : i32
    return %arg0, %c0_i32, %c0_i32_0 : i32, i32, i32
  }
  func.func @transform_12(%arg0: i32) -> (i32, i32) {
    %c0_i32 = arith.constant 0 : i32
    %c0_i32_0 = arith.constant 0 : i32
    %c0_i32_1 = arith.constant 0 : i32
    return %c0_i32, %c0_i32_0 : i32, i32
  }
  func.func @transform_13(%arg0: i32) -> (i32, i32) {
    %c0_i32 = arith.constant 0 : i32
    %c0_i32_0 = arith.constant 0 : i32
    %c0_i32_1 = arith.constant 0 : i32
    return %c0_i32, %c0_i32_0 : i32, i32
  }
  func.func @transform_14(%arg0: i32) -> (i32, i32) {
    %c0_i32 = arith.constant 0 : i32
    %c0_i32_0 = arith.constant 0 : i32
    %c0_i32_1 = arith.constant 0 : i32
    return %c0_i32, %c0_i32_0 : i32, i32
  }
  func.func @transform_15(%arg0: i32) -> (i32, i32) {
    %c0_i32 = arith.constant 0 : i32
    %c0_i32_0 = arith.constant 0 : i32
    %c0_i32_1 = arith.constant 0 : i32
    return %c0_i32, %c0_i32_0 : i32, i32
  }
  func.func @transform_16(%arg0: i32) -> (i32, i32) {
    %c0_i32 = arith.constant 0 : i32
    %c0_i32_0 = arith.constant 0 : i32
    %c0_i32_1 = arith.constant 0 : i32
    return %c0_i32, %c0_i32_0 : i32, i32
  }
}

</mosaic_0001>

<llo_original>
// kernel: tiny_gpt_forward.1
$region0: #{tiny_gpt_forward.1}
  #allocation0 [shape = 'u32[]', space=smem, size = 0x4, offset = 0x4, fixed_abs, tag = 'smem constant byte address 0x4 - core index']
  #allocation1 [shape = 'u32[144,128]{1,0:T(1,128)}', space=vmem, size = 0x12000, scoped, tag = 'internal scratch']
  #allocation2 [shape = 'f32[32,128]{1,0:T(8,128)}', space=vmem, size = 0x4000, scoped, tag = 'scratch operand']
  %s0 = inlined_call_operand.vmem [shape: f32[32,128], index: 0, kind: input, shape index: {}]
  %s1 = inlined_call_operand.vmem [shape: f32[2,1,128], index: 1, kind: input, shape index: {}]
  %s2 = inlined_call_operand.vmem [shape: f32[2,1,128], index: 2, kind: input, shape index: {}]
  %s3 = inlined_call_operand.vmem [shape: bf16[2,12,128,32], index: 3, kind: input, shape index: {}]
  %s4 = inlined_call_operand.vmem [shape: bf16[2,4,32,128], index: 4, kind: input, shape index: {}]
  %s5 = inlined_call_operand.vmem [shape: f32[2,1,128], index: 5, kind: input, shape index: {}]
  %s6 = inlined_call_operand.vmem [shape: f32[2,1,128], index: 6, kind: input, shape index: {}]
  %s7 = inlined_call_operand.vmem [shape: f32[2,1,128], index: 7, kind: input, shape index: {}]
  %s8 = inlined_call_operand.vmem [shape: bf16[2,128,512], index: 8, kind: input, shape index: {}]
  %s9 = inlined_call_operand.vmem [shape: f32[2,1,512], index: 9, kind: input, shape index: {}]
  %s10 = inlined_call_operand.vmem [shape: bf16[2,512,128], index: 10, kind: input, shape index: {}]
  %s11 = inlined_call_operand.vmem [shape: f32[2,1,128], index: 11, kind: input, shape index: {}]
  %s12 = inlined_call_operand.vmem [shape: f32[1,128], index: 12, kind: input, shape index: {}]
  %s13 = inlined_call_operand.vmem [shape: f32[1,128], index: 13, kind: input, shape index: {}]
  %s14 = inlined_call_operand.vmem [shape: bf16[128,128], index: 14, kind: input, shape index: {}]
  %s15 = inlined_call_operand.vmem [shape: f32[1,128], index: 15, kind: input, shape index: {}]
  %s16 = inlined_call_operand.hbm [shape: f32[32,128], index: 16, kind: output, shape index: {}]
  %s17 = sld [smem:[#allocation0]]
  $region105: #{tiny_gpt_forward.1} parent=0
    _
  %s19 = ssub.s32 1, %s17
  %s20 = scalar_select 0, %s19, %s17
  $region1: #{tiny_gpt_forward.1} parent=0
    #allocation3 [shape = 'u8[16384]{0}', space=vmem, size = 0x4000, scoped, tag = 'output window, operand 0, single buffered']
    #allocation4 [shape = 's32[2]{0}', space=sflag, size = 0x8, scoped, tag = 'scoped memory for tiny_gpt_forward.1']
    %21 = vsyncpa [#allocation4], 0
    loop: start=0, step=1, limit=4
    $region2: #{tiny_gpt_forward.1} parent=1 // loop_pre_header
      _
    $region3: #{tiny_gpt_forward.1} parent=1 // loop_header
      %s23 = sphi 0, %s27
      %p24 = scmp.ge.s32.totalorder %s23, 4
      %s31 = sphi 0, %s31
      %s33 = sphi 0, %s31
      %s34 = sphi 0, %s33
      %s48 = sphi 0, %s34
      %s54 = sphi 0, %s56
      %s57 = sphi 0, %s54
      %s58 = sphi 0, %s57
      %s74 = sphi 0, %s58
      %s80 = sphi 0, %s82
      %s83 = sphi 0, %s80
      %s84 = sphi 0, %s83
      %s100 = sphi 0, %s84
      %s106 = sphi 0, %s108
      %s109 = sphi 0, %s106
      %s110 = sphi 0, %s109
      %s126 = sphi 0, %s110
      %s132 = sphi 0, %s134
      %s135 = sphi 0, %s132
      %s136 = sphi 0, %s135
      %s152 = sphi 0, %s136
      %s158 = sphi 0, %s160
      %s161 = sphi 0, %s158
      %s162 = sphi 0, %s161
      %s178 = sphi 0, %s162
      %s184 = sphi 0, %s186
      %s187 = sphi 0, %s184
      %s188 = sphi 0, %s187
      %s204 = sphi 0, %s188
      %s210 = sphi 0, %s212
      %s213 = sphi 0, %s210
      %s214 = sphi 0, %s213
      %s230 = sphi 0, %s214
      %s236 = sphi 0, %s238
      %s239 = sphi 0, %s236
      %s240 = sphi 0, %s239
      %s256 = sphi 0, %s240
      %s262 = sphi 0, %s264
      %s265 = sphi 0, %s262
      %s266 = sphi 0, %s265
      %s282 = sphi 0, %s266
      %s288 = sphi 0, %s290
      %s291 = sphi 0, %s288
      %s292 = sphi 0, %s291
      %s308 = sphi 0, %s292
      %s314 = sphi 0, %s316
      %s317 = sphi 0, %s314
      %s318 = sphi 0, %s317
      %s334 = sphi 0, %s318
      %s338 = sphi 0, %s338
      %s340 = sphi 0, %s338
      %s341 = sphi 0, %s340
      %s355 = sphi 0, %s341
      %s359 = sphi 0, %s359
      %s361 = sphi 0, %s359
      %s362 = sphi 0, %s361
      %s376 = sphi 0, %s362
      %s380 = sphi 0, %s380
      %s382 = sphi 0, %s380
      %s383 = sphi 0, %s382
      %s397 = sphi 0, %s383
      %s401 = sphi 0, %s401
      %s403 = sphi 0, %s401
      %s404 = sphi 0, %s403
      %s418 = sphi 0, %s404
      %s422 = sphi 0, %s422
      %s424 = sphi 0, %s422
      %s425 = sphi 0, %s424
      %s439 = sphi 0, %s425
    $region4: #{tiny_gpt_forward.1} parent=1 // loop_header_branch
      %26 = sbr.rel (%p24) target = $region8
    $region5: #{tiny_gpt_forward.1} parent=1 // loop_body
      %s28 = ssub.s32 %s23, 1
      %s29 = ssub.s32 %s23, 2
      %s30 = sadd.s32 %s23, 1
      %s32 = sadd.s32 %s31, 1
      %p35 = scmp.eq.s32.totalorder %s23, 1
      %p36 = scmp.ne.s32.totalorder %s31, %s33
      %p37 = scmp.eq.s32.totalorder %s23, 0
      %p38 = por %p36, %p37
      %p39 = scmp.ne.s32.totalorder %s31, %s33
      %p40 = scmp.eq.s32.totalorder %s28, 1
      %p41 = por %p39, %p40
      %p42 = scmp.ne.s32.totalorder %s33, %s34
      %p43 = scmp.eq.s32.totalorder %s28, 0
      %p44 = por %p42, %p43
      %p45 = scmp.ne.s32.totalorder %s33, %s34
      %p46 = scmp.eq.s32.totalorder %s29, 1
      %p47 = por %p45, %p46
      %p49 = scmp.ne.s32.totalorder %s34, %s48
      %p50 = scmp.eq.s32.totalorder %s29, 0
      %p51 = por %p49, %p50
      %s52 = ssub.s32 %s23, %s30
      %p53 = scmp.eq.s32.totalorder %s52, 0
      %s55 = sadd.s32 %s54, 1
      %s56 = scalar_select %p53, %s54, %s55
      %p59 = pneg %p53
      %p60 = scmp.eq.s32.totalorder %s23, 1
      %p61 = por %p59, %p60
      %p62 = scmp.ne.s32.totalorder %s54, %s57
      %p63 = scmp.eq.s32.totalorder %s23, 0
      %p64 = por %p62, %p63
      %p65 = scmp.ne.s32.totalorder %s54, %s57
      %p66 = scmp.eq.s32.totalorder %s28, 1
      %p67 = por %p65, %p66
      %p68 = scmp.ne.s32.totalorder %s57, %s58
      %p69 = scmp.eq.s32.totalorder %s28, 0
      %p70 = por %p68, %p69
      %p71 = scmp.ne.s32.totalorder %s57, %s58
      %p72 = scmp.eq.s32.totalorder %s29, 1
      %p73 = por %p71, %p72
      %p75 = scmp.ne.s32.totalorder %s58, %s74
      %p76 = scmp.eq.s32.totalorder %s29, 0
      %p77 = por %p75, %p76
      %s78 = ssub.s32 %s23, %s30
      %p79 = scmp.eq.s32.totalorder %s78, 0
      %s81 = sadd.s32 %s80, 1
      %s82 = scalar_select %p79, %s80, %s81
      %p85 = pneg %p79
      %p86 = scmp.eq.s32.totalorder %s23, 1
      %p87 = por %p85, %p86
      %p88 = scmp.ne.s32.totalorder %s80, %s83
      %p89 = scmp.eq.s32.totalorder %s23, 0
      %p90 = por %p88, %p89
      %p91 = scmp.ne.s32.totalorder %s80, %s83
      %p92 = scmp.eq.s32.totalorder %s28, 1
      %p93 = por %p91, %p92
      %p94 = scmp.ne.s32.totalorder %s83, %s84
      %p95 = scmp.eq.s32.totalorder %s28, 0
      %p96 = por %p94, %p95
      %p97 = scmp.ne.s32.totalorder %s83, %s84
      %p98 = scmp.eq.s32.totalorder %s29, 1
      %p99 = por %p97, %p98
      %p101 = scmp.ne.s32.totalorder %s84, %s100
      %p102 = scmp.eq.s32.totalorder %s29, 0
      %p103 = por %p101, %p102
      %s104 = ssub.s32 %s23, %s30
      %p105 = scmp.eq.s32.totalorder %s104, 0
      %s107 = sadd.s32 %s106, 1
      %s108 = scalar_select %p105, %s106, %s107
      %p111 = pneg %p105
      %p112 = scmp.eq.s32.totalorder %s23, 1
      %p113 = por %p111, %p112
      %p114 = scmp.ne.s32.totalorder %s106, %s109
      %p115 = scmp.eq.s32.totalorder %s23, 0
      %p116 = por %p114, %p115
      %p117 = scmp.ne.s32.totalorder %s106, %s109
      %p118 = scmp.eq.s32.totalorder %s28, 1
      %p119 = por %p117, %p118
      %p120 = scmp.ne.s32.totalorder %s109, %s110
      %p121 = scmp.eq.s32.totalorder %s28, 0
      %p122 = por %p120, %p121
      %p123 = scmp.ne.s32.totalorder %s109, %s110
      %p124 = scmp.eq.s32.totalorder %s29, 1
      %p125 = por %p123, %p124
      %p127 = scmp.ne.s32.totalorder %s110, %s126
      %p128 = scmp.eq.s32.totalorder %s29, 0
      %p129 = por %p127, %p128
      %s130 = ssub.s32 %s23, %s30
      %p131 = scmp.eq.s32.totalorder %s130, 0
      %s133 = sadd.s32 %s132, 1
      %s134 = scalar_select %p131, %s132, %s133
      %p137 = pneg %p131
      %p138 = scmp.eq.s32.totalorder %s23, 1
      %p139 = por %p137, %p138
      %p140 = scmp.ne.s32.totalorder %s132, %s135
      %p141 = scmp.eq.s32.totalorder %s23, 0
      %p142 = por %p140, %p141
      %p143 = scmp.ne.s32.totalorder %s132, %s135
      %p144 = scmp.eq.s32.totalorder %s28, 1
      %p145 = por %p143, %p144
      %p146 = scmp.ne.s32.totalorder %s135, %s136
      %p147 = scmp.eq.s32.totalorder %s28, 0
      %p148 = por %p146, %p147
      %p149 = scmp.ne.s32.totalorder %s135, %s136
      %p150 = scmp.eq.s32.totalorder %s29, 1
      %p151 = por %p149, %p150
      %p153 = scmp.ne.s32.totalorder %s136, %s152
      %p154 = scmp.eq.s32.totalorder %s29, 0
      %p155 = por %p153, %p154
      %s156 = ssub.s32 %s23, %s30
      %p157 = scmp.eq.s32.totalorder %s156, 0
      %s159 = sadd.s32 %s158, 1
      %s160 = scalar_select %p157, %s158, %s159
      %p163 = pneg %p157
      %p164 = scmp.eq.s32.totalorder %s23, 1
      %p165 = por %p163, %p164
      %p166 = scmp.ne.s32.totalorder %s158, %s161
      %p167 = scmp.eq.s32.totalorder %s23, 0
      %p168 = por %p166, %p167
      %p169 = scmp.ne.s32.totalorder %s158, %s161
      %p170 = scmp.eq.s32.totalorder %s28, 1
      %p171 = por %p169, %p170
      %p172 = scmp.ne.s32.totalorder %s161, %s162
      %p173 = scmp.eq.s32.totalorder %s28, 0
      %p174 = por %p172, %p173
      %p175 = scmp.ne.s32.totalorder %s161, %s162
      %p176 = scmp.eq.s32.totalorder %s29, 1
      %p177 = por %p175, %p176
      %p179 = scmp.ne.s32.totalorder %s162, %s178
      %p180 = scmp.eq.s32.totalorder %s29, 0
      %p181 = por %p179, %p180
      %s182 = ssub.s32 %s23, %s30
      %p183 = scmp.eq.s32.totalorder %s182, 0
      %s185 = sadd.s32 %s184, 1
      %s186 = scalar_select %p183, %s184, %s185
      %p189 = pneg %p183
      %p190 = scmp.eq.s32.totalorder %s23, 1
      %p191 = por %p189, %p190
      %p192 = scmp.ne.s32.totalorder %s184, %s187
      %p193 = scmp.eq.s32.totalorder %s23, 0
      %p194 = por %p192, %p193
      %p195 = scmp.ne.s32.totalorder %s184, %s187
      %p196 = scmp.eq.s32.totalorder %s28, 1
      %p197 = por %p195, %p196
      %p198 = scmp.ne.s32.totalorder %s187, %s188
      %p199 = scmp.eq.s32.totalorder %s28, 0
      %p200 = por %p198, %p199
      %p201 = scmp.ne.s32.totalorder %s187, %s188
      %p202 = scmp.eq.s32.totalorder %s29, 1
      %p203 = por %p201, %p202
      %p205 = scmp.ne.s32.totalorder %s188, %s204
      %p206 = scmp.eq.s32.totalorder %s29, 0
      %p207 = por %p205, %p206
      %s208 = ssub.s32 %s23, %s30
      %p209 = scmp.eq.s32.totalorder %s208, 0
      %s211 = sadd.s32 %s210, 1
      %s212 = scalar_select %p209, %s210, %s211
      %p215 = pneg %p209
      %p216 = scmp.eq.s32.totalorder %s23, 1
      %p217 = por %p215, %p216
      %p218 = scmp.ne.s32.totalorder %s210, %s213
      %p219 = scmp.eq.s32.totalorder %s23, 0
      %p220 = por %p218, %p219
      %p221 = scmp.ne.s32.totalorder %s210, %s213
      %p222 = scmp.eq.s32.totalorder %s28, 1
      %p223 = por %p221, %p222
      %p224 = scmp.ne.s32.totalorder %s213, %s214
      %p225 = scmp.eq.s32.totalorder %s28, 0
      %p226 = por %p224, %p225
      %p227 = scmp.ne.s32.totalorder %s213, %s214
      %p228 = scmp.eq.s32.totalorder %s29, 1
      %p229 = por %p227, %p228
      %p231 = scmp.ne.s32.totalorder %s214, %s230
      %p232 = scmp.eq.s32.totalorder %s29, 0
      %p233 = por %p231, %p232
      %s234 = ssub.s32 %s23, %s30
      %p235 = scmp.eq.s32.totalorder %s234, 0
      %s237 = sadd.s32 %s236, 1
      %s238 = scalar_select %p235, %s236, %s237
      %p241 = pneg %p235
      %p242 = scmp.eq.s32.totalorder %s23, 1
      %p243 = por %p241, %p242
      %p244 = scmp.ne.s32.totalorder %s236, %s239
      %p245 = scmp.eq.s32.totalorder %s23, 0
      %p246 = por %p244, %p245
      %p247 = scmp.ne.s32.totalorder %s236, %s239
      %p248 = scmp.eq.s32.totalorder %s28, 1
      %p249 = por %p247, %p248
      %p250 = scmp.ne.s32.totalorder %s239, %s240
      %p251 = scmp.eq.s32.totalorder %s28, 0
      %p252 = por %p250, %p251
      %p253 = scmp.ne.s32.totalorder %s239, %s240
      %p254 = scmp.eq.s32.totalorder %s29, 1
      %p255 = por %p253, %p254
      %p257 = scmp.ne.s32.totalorder %s240, %s256
      %p258 = scmp.eq.s32.totalorder %s29, 0
      %p259 = por %p257, %p258
      %s260 = ssub.s32 %s23, %s30
      %p261 = scmp.eq.s32.totalorder %s260, 0
      %s263 = sadd.s32 %s262, 1
      %s264 = scalar_select %p261, %s262, %s263
      %p267 = pneg %p261
      %p268 = scmp.eq.s32.totalorder %s23, 1
      %p269 = por %p267, %p268
      %p270 = scmp.ne.s32.totalorder %s262, %s265
      %p271 = scmp.eq.s32.totalorder %s23, 0
      %p272 = por %p270, %p271
      %p273 = scmp.ne.s32.totalorder %s262, %s265
      %p274 = scmp.eq.s32.totalorder %s28, 1
      %p275 = por %p273, %p274
      %p276 = scmp.ne.s32.totalorder %s265, %s266
      %p277 = scmp.eq.s32.totalorder %s28, 0
      %p278 = por %p276, %p277
      %p279 = scmp.ne.s32.totalorder %s265, %s266
      %p280 = scmp.eq.s32.totalorder %s29, 1
      %p281 = por %p279, %p280
      %p283 = scmp.ne.s32.totalorder %s266, %s282
      %p284 = scmp.eq.s32.totalorder %s29, 0
      %p285 = por %p283, %p284
      %s286 = ssub.s32 %s23, %s30
      %p287 = scmp.eq.s32.totalorder %s286, 0
      %s289 = sadd.s32 %s288, 1
      %s290 = scalar_select %p287, %s288, %s289
      %p293 = pneg %p287
      %p294 = scmp.eq.s32.totalorder %s23, 1
      %p295 = por %p293, %p294
      %p296 = scmp.ne.s32.totalorder %s288, %s291
      %p297 = scmp.eq.s32.totalorder %s23, 0
      %p298 = por %p296, %p297
      %p299 = scmp.ne.s32.totalorder %s288, %s291
      %p300 = scmp.eq.s32.totalorder %s28, 1
      %p301 = por %p299, %p300
      %p302 = scmp.ne.s32.totalorder %s291, %s292
      %p303 = scmp.eq.s32.totalorder %s28, 0
      %p304 = por %p302, %p303
      %p305 = scmp.ne.s32.totalorder %s291, %s292
      %p306 = scmp.eq.s32.totalorder %s29, 1
      %p307 = por %p305, %p306
      %p309 = scmp.ne.s32.totalorder %s292, %s308
      %p310 = scmp.eq.s32.totalorder %s29, 0
      %p311 = por %p309, %p310
      %s312 = ssub.s32 %s23, %s30
      %p313 = scmp.eq.s32.totalorder %s312, 0
      %s315 = sadd.s32 %s314, 1
      %s316 = scalar_select %p313, %s314, %s315
      %p319 = pneg %p313
      %p320 = scmp.eq.s32.totalorder %s23, 1
      %p321 = por %p319, %p320
      %p322 = scmp.ne.s32.totalorder %s314, %s317
      %p323 = scmp.eq.s32.totalorder %s23, 0
      %p324 = por %p322, %p323
      %p325 = scmp.ne.s32.totalorder %s314, %s317
      %p326 = scmp.eq.s32.totalorder %s28, 1
      %p327 = por %p325, %p326
      %p328 = scmp.ne.s32.totalorder %s317, %s318
      %p329 = scmp.eq.s32.totalorder %s28, 0
      %p330 = por %p328, %p329
      %p331 = scmp.ne.s32.totalorder %s317, %s318
      %p332 = scmp.eq.s32.totalorder %s29, 1
      %p333 = por %p331, %p332
      %p335 = scmp.ne.s32.totalorder %s318, %s334
      %p336 = scmp.eq.s32.totalorder %s29, 0
      %p337 = por %p335, %p336
      %s339 = sadd.s32 %s338, 1
      %p342 = scmp.eq.s32.totalorder %s23, 1
      %p343 = scmp.ne.s32.totalorder %s338, %s340
      %p344 = scmp.eq.s32.totalorder %s23, 0
      %p345 = por %p343, %p344
      %p346 = scmp.ne.s32.totalorder %s338, %s340
      %p347 = scmp.eq.s32.totalorder %s28, 1
      %p348 = por %p346, %p347
      %p349 = scmp.ne.s32.totalorder %s340, %s341
      %p350 = scmp.eq.s32.totalorder %s28, 0
      %p351 = por %p349, %p350
      %p352 = scmp.ne.s32.totalorder %s340, %s341
      %p353 = scmp.eq.s32.totalorder %s29, 1
      %p354 = por %p352, %p353
      %p356 = scmp.ne.s32.totalorder %s341, %s355
      %p357 = scmp.eq.s32.totalorder %s29, 0
      %p358 = por %p356, %p357
      %s360 = sadd.s32 %s359, 1
      %p363 = scmp.eq.s32.totalorder %s23, 1
      %p364 = scmp.ne.s32.totalorder %s359, %s361
      %p365 = scmp.eq.s32.totalorder %s23, 0
      %p366 = por %p364, %p365
      %p367 = scmp.ne.s32.totalorder %s359, %s361
      %p368 = scmp.eq.s32.totalorder %s28, 1
      %p369 = por %p367, %p368
      %p370 = scmp.ne.s32.totalorder %s361, %s362
      %p371 = scmp.eq.s32.totalorder %s28, 0
      %p372 = por %p370, %p371
      %p373 = scmp.ne.s32.totalorder %s361, %s362
      %p374 = scmp.eq.s32.totalorder %s29, 1
      %p375 = por %p373, %p374
      %p377 = scmp.ne.s32.totalorder %s362, %s376
      %p378 = scmp.eq.s32.totalorder %s29, 0
      %p379 = por %p377, %p378
      %s381 = sadd.s32 %s380, 1
      %p384 = scmp.eq.s32.totalorder %s23, 1
      %p385 = scmp.ne.s32.totalorder %s380, %s382
      %p386 = scmp.eq.s32.totalorder %s23, 0
      %p387 = por %p385, %p386
      %p388 = scmp.ne.s32.totalorder %s380, %s382
      %p389 = scmp.eq.s32.totalorder %s28, 1
      %p390 = por %p388, %p389
      %p391 = scmp.ne.s32.totalorder %s382, %s383
      %p392 = scmp.eq.s32.totalorder %s28, 0
      %p393 = por %p391, %p392
      %p394 = scmp.ne.s32.totalorder %s382, %s383
      %p395 = scmp.eq.s32.totalorder %s29, 1
      %p396 = por %p394, %p395
      %p398 = scmp.ne.s32.totalorder %s383, %s397
      %p399 = scmp.eq.s32.totalorder %s29, 0
      %p400 = por %p398, %p399
      %s402 = sadd.s32 %s401, 1
      %p405 = scmp.eq.s32.totalorder %s23, 1
      %p406 = scmp.ne.s32.totalorder %s401, %s403
      %p407 = scmp.eq.s32.totalorder %s23, 0
      %p408 = por %p406, %p407
      %p409 = scmp.ne.s32.totalorder %s401, %s403
      %p410 = scmp.eq.s32.totalorder %s28, 1
      %p411 = por %p409, %p410
      %p412 = scmp.ne.s32.totalorder %s403, %s404
      %p413 = scmp.eq.s32.totalorder %s28, 0
      %p414 = por %p412, %p413
      %p415 = scmp.ne.s32.totalorder %s403, %s404
      %p416 = scmp.eq.s32.totalorder %s29, 1
      %p417 = por %p415, %p416
      %p419 = scmp.ne.s32.totalorder %s404, %s418
      %p420 = scmp.eq.s32.totalorder %s29, 0
      %p421 = por %p419, %p420
      %s423 = sadd.s32 %s422, 1
      %p426 = scmp.eq.s32.totalorder %s23, 1
      %p427 = scmp.ne.s32.totalorder %s422, %s424
      %p428 = scmp.eq.s32.totalorder %s23, 0
      %p429 = por %p427, %p428
      %p430 = scmp.ne.s32.totalorder %s422, %s424
      %p431 = scmp.eq.s32.totalorder %s28, 1
      %p432 = por %p430, %p431
      %p433 = scmp.ne.s32.totalorder %s424, %s425
      %p434 = scmp.eq.s32.totalorder %s28, 0
      %p435 = por %p433, %p434
      %p436 = scmp.ne.s32.totalorder %s424, %s425
      %p437 = scmp.eq.s32.totalorder %s29, 1
      %p438 = por %p436, %p437
      %p440 = scmp.ne.s32.totalorder %s425, %s439
      %p441 = scmp.eq.s32.totalorder %s29, 0
      %p442 = por %p440, %p441
      %p443 = scmp.le.s32.totalorder 1, %s23
      %p444 = scmp.lt.s32.totalorder %s23, 3
      %p445 = pnand %p443, %p444
      %p446 = pneg %p445
      // Predicated region
      $region9: #{tiny_gpt_forward.1} parent=5 // pred_check
        _
      $region10: #{tiny_gpt_forward.1} parent=5 // pred_check_branch
        %448 = sbr.rel (%p445) target = $region12
      $region11: #{tiny_gpt_forward.1} parent=5 // pred_region
        %s449 = ssub.s32 %s23, 1
        // Predicated region
        $region13: #{tiny_gpt_forward.1} parent=11 // pred_check
          %p450 = pneg %p44
        $region14: #{tiny_gpt_forward.1} parent=11 // pred_check_branch
          %452 = sbr.rel (%p450) target = $region16
        $region15: #{tiny_gpt_forward.1} parent=11 // pred_region
          _
        $region16: #{tiny_gpt_forward.1} parent=11 // pred_fallthru
          _
        // Predicated region
        $region17: #{tiny_gpt_forward.1} parent=11 // pred_check
          %p453 = pneg %p351
        $region18: #{tiny_gpt_forward.1} parent=11 // pred_check_branch
          %455 = sbr.rel (%p453) target = $region20
        $region19: #{tiny_gpt_forward.1} parent=11 // pred_region
          _
        $region20: #{tiny_gpt_forward.1} parent=11 // pred_fallthru
          _
        // Predicated region
        $region21: #{tiny_gpt_forward.1} parent=11 // pred_check
          %p456 = pneg %p372
        $region22: #{tiny_gpt_forward.1} parent=11 // pred_check_branch
          %458 = sbr.rel (%p456) target = $region24
        $region23: #{tiny_gpt_forward.1} parent=11 // pred_region
          _
        $region24: #{tiny_gpt_forward.1} parent=11 // pred_fallthru
          _
        // Predicated region
        $region25: #{tiny_gpt_forward.1} parent=11 // pred_check
          %p459 = pneg %p393
        $region26: #{tiny_gpt_forward.1} parent=11 // pred_check_branch
          %461 = sbr.rel (%p459) target = $region28
        $region27: #{tiny_gpt_forward.1} parent=11 // pred_region
          _
        $region28: #{tiny_gpt_forward.1} parent=11 // pred_fallthru
          _
        // Predicated region
        $region29: #{tiny_gpt_forward.1} parent=11 // pred_check
          %p462 = pneg %p414
        $region30: #{tiny_gpt_forward.1} parent=11 // pred_check_branch
          %464 = sbr.rel (%p462) target = $region32
        $region31: #{tiny_gpt_forward.1} parent=11 // pred_region
          _
        $region32: #{tiny_gpt_forward.1} parent=11 // pred_fallthru
          _
      $region12: #{tiny_gpt_forward.1} parent=5 // pred_fallthru
        _
      %p465 = scmp.lt.s32.totalorder %s23, 2
      // Predicated region
      $region33: #{tiny_gpt_forward.1} parent=5 // pred_check
        %p466 = pneg %p465
      $region34: #{tiny_gpt_forward.1} parent=5 // pred_check_branch
        %468 = sbr.rel (%p466) target = $region36
      $region35: #{tiny_gpt_forward.1} parent=5 // pred_region
        // Predicated region
        $region37: #{tiny_gpt_forward.1} parent=35 // pred_check
          %p469 = pneg %p64
        $region38: #{tiny_gpt_forward.1} parent=35 // pred_check_branch
          %471 = sbr.rel (%p469) target = $region40
        $region39: #{tiny_gpt_forward.1} parent=35 // pred_region
          %p472 = scmp.lt.s32.totalorder %s23, 1
          %s473 = scalar_select %p472, %s23, 1
          %s474 = scalar_lea.vmem %s1, %s473
        $region40: #{tiny_gpt_forward.1} parent=35 // pred_fallthru
          _
        // Predicated region
        $region41: #{tiny_gpt_forward.1} parent=35 // pred_check
          %p475 = pneg %p90
        $region42: #{tiny_gpt_forward.1} parent=35 // pred_check_branch
          %477 = sbr.rel (%p475) target = $region44
        $region43: #{tiny_gpt_forward.1} parent=35 // pred_region
          %p478 = scmp.lt.s32.totalorder %s23, 1
          %s479 = scalar_select %p478, %s23, 1
          %s480 = scalar_lea.vmem %s2, %s479
        $region44: #{tiny_gpt_forward.1} parent=35 // pred_fallthru
          _
        // Predicated region
        $region45: #{tiny_gpt_forward.1} parent=35 // pred_check
          %p481 = pneg %p116
        $region46: #{tiny_gpt_forward.1} parent=35 // pred_check_branch
          %483 = sbr.rel (%p481) target = $region48
        $region47: #{tiny_gpt_forward.1} parent=35 // pred_region
          %p484 = scmp.lt.s32.totalorder %s23, 1
          %s485 = scalar_select %p484, %s23, 1
          %s486 = smul.addr %s485, 192
          %s487 = smul.addr %s486, 4
          %s488 = scalar_lea.vmem %s3, %s487
        $region48: #{tiny_gpt_forward.1} parent=35 // pred_fallthru
          _
        // Predicated region
        $region49: #{tiny_gpt_forward.1} parent=35 // pred_check
          %p489 = pneg %p142
        $region50: #{tiny_gpt_forward.1} parent=35 // pred_check_branch
          %491 = sbr.rel (%p489) target = $region52
        $region51: #{tiny_gpt_forward.1} parent=35 // pred_region
          %p492 = scmp.lt.s32.totalorder %s23, 1
          %s493 = scalar_select %p492, %s23, 1
          %s494 = smul.addr %s493, 16
          %s495 = smul.addr %s494, 4
          %s496 = scalar_lea.vmem %s4, %s495
        $region52: #{tiny_gpt_forward.1} parent=35 // pred_fallthru
          _
        // Predicated region
        $region53: #{tiny_gpt_forward.1} parent=35 // pred_check
          %p497 = pneg %p168
        $region54: #{tiny_gpt_forward.1} parent=35 // pred_check_branch
          %499 = sbr.rel (%p497) target = $region56
        $region55: #{tiny_gpt_forward.1} parent=35 // pred_region
          %p500 = scmp.lt.s32.totalorder %s23, 1
          %s501 = scalar_select %p500, %s23, 1
          %s502 = scalar_lea.vmem %s5, %s501
        $region56: #{tiny_gpt_forward.1} parent=35 // pred_fallthru
          _
        // Predicated region
        $region57: #{tiny_gpt_forward.1} parent=35 // pred_check
          %p503 = pneg %p194
        $region58: #{tiny_gpt_forward.1} parent=35 // pred_check_branch
          %505 = sbr.rel (%p503) target = $region60
        $region59: #{tiny_gpt_forward.1} parent=35 // pred_region
          %p506 = scmp.lt.s32.totalorder %s23, 1
          %s507 = scalar_select %p506, %s23, 1
          %s508 = scalar_lea.vmem %s6, %s507
        $region60: #{tiny_gpt_forward.1} parent=35 // pred_fallthru
          _
        // Predicated region
        $region61: #{tiny_gpt_forward.1} parent=35 // pred_check
          %p509 = pneg %p220
        $region62: #{tiny_gpt_forward.1} parent=35 // pred_check_branch
          %511 = sbr.rel (%p509) target = $region64
        $region63: #{tiny_gpt_forward.1} parent=35 // pred_region
          %p512 = scmp.lt.s32.totalorder %s23, 1
          %s513 = scalar_select %p512, %s23, 1
          %s514 = scalar_lea.vmem %s7, %s513
        $region64: #{tiny_gpt_forward.1} parent=35 // pred_fallthru
          _
        // Predicated region
        $region65: #{tiny_gpt_forward.1} parent=35 // pred_check
          %p515 = pneg %p246
        $region66: #{tiny_gpt_forward.1} parent=35 // pred_check_branch
          %517 = sbr.rel (%p515) target = $region68
        $region67: #{tiny_gpt_forward.1} parent=35 // pred_region
          %p518 = scmp.lt.s32.totalorder %s23, 1
          %s519 = scalar_select %p518, %s23, 1
          %s520 = smul.addr %s519, 64
          %s521 = smul.addr %s520, 4
          %s522 = scalar_lea.vmem %s8, %s521
        $region68: #{tiny_gpt_forward.1} parent=35 // pred_fallthru
          _
        // Predicated region
        $region69: #{tiny_gpt_forward.1} parent=35 // pred_check
          %p523 = pneg %p272
        $region70: #{tiny_gpt_forward.1} parent=35 // pred_check_branch
          %525 = sbr.rel (%p523) target = $region72
        $region71: #{tiny_gpt_forward.1} parent=35 // pred_region
          %p526 = scmp.lt.s32.totalorder %s23, 1
          %s527 = scalar_select %p526, %s23, 1
          %s528 = smul.addr %s527, 4
          %s529 = scalar_lea.vmem %s9, %s528
        $region72: #{tiny_gpt_forward.1} parent=35 // pred_fallthru
          _
        // Predicated region
        $region73: #{tiny_gpt_forward.1} parent=35 // pred_check
          %p530 = pneg %p298
        $region74: #{tiny_gpt_forward.1} parent=35 // pred_check_branch
          %532 = sbr.rel (%p530) target = $region76
        $region75: #{tiny_gpt_forward.1} parent=35 // pred_region
          %p533 = scmp.lt.s32.totalorder %s23, 1
          %s534 = scalar_select %p533, %s23, 1
          %s535 = smul.addr %s534, 64
          %s536 = smul.addr %s535, 4
          %s537 = scalar_lea.vmem %s10, %s536
        $region76: #{tiny_gpt_forward.1} parent=35 // pred_fallthru
          _
        // Predicated region
        $region77: #{tiny_gpt_forward.1} parent=35 // pred_check
          %p538 = pneg %p324
        $region78: #{tiny_gpt_forward.1} parent=35 // pred_check_branch
          %540 = sbr.rel (%p538) target = $region80
        $region79: #{tiny_gpt_forward.1} parent=35 // pred_region
          %p541 = scmp.lt.s32.totalorder %s23, 1
          %s542 = scalar_select %p541, %s23, 1
          %s543 = scalar_lea.vmem %s11, %s542
        $region80: #{tiny_gpt_forward.1} parent=35 // pred_fallthru
          _
      $region36: #{tiny_gpt_forward.1} parent=5 // pred_fallthru
        _
      %p544 = scmp.le.s32.totalorder 1, %s23
      %p545 = scmp.lt.s32.totalorder %s23, 3
      %p546 = pnand %p544, %p545
      %p547 = pneg %p546
      // Predicated region
      $region81: #{tiny_gpt_forward.1} parent=5 // pred_check
        _
      $region82: #{tiny_gpt_forward.1} parent=5 // pred_check_branch
        %549 = sbr.rel (%p546) target = $region84
      $region83: #{tiny_gpt_forward.1} parent=5 // pred_region
        %s550 = ssub.s32 %s23, 1
        %p551 = pneg %p44
        %p552 = pneg %p41
        %p553 = scmp.lt.s32.totalorder %s28, 1
        %s554 = scalar_select %p553, %s28, 1
        %s555 = scalar_lea.vmem %s1, %s554
        %p556 = pneg %p70
        %p557 = pneg %p67
        %p558 = scmp.lt.s32.totalorder %s28, 1
        %s559 = scalar_select %p558, %s28, 1
        %s560 = scalar_lea.vmem %s2, %s559
        %p561 = pneg %p96
        %p562 = pneg %p93
        %p563 = scmp.lt.s32.totalorder %s28, 1
        %s564 = scalar_select %p563, %s28, 1
        %s565 = smul.addr %s564, 192
        %s566 = smul.addr %s565, 4
        %s567 = scalar_lea.vmem %s3, %s566
        %p568 = pneg %p122
        %p569 = pneg %p119
        %p570 = scmp.lt.s32.totalorder %s28, 1
        %s571 = scalar_select %p570, %s28, 1
        %s572 = smul.addr %s571, 16
        %s573 = smul.addr %s572, 4
        %s574 = scalar_lea.vmem %s4, %s573
        %p575 = pneg %p148
        %p576 = pneg %p145
        %p577 = scmp.lt.s32.totalorder %s28, 1
        %s578 = scalar_select %p577, %s28, 1
        %s579 = scalar_lea.vmem %s5, %s578
        %p580 = pneg %p174
        %p581 = pneg %p171
        %p582 = scmp.lt.s32.totalorder %s28, 1
        %s583 = scalar_select %p582, %s28, 1
        %s584 = scalar_lea.vmem %s6, %s583
        %p585 = pneg %p200
        %p586 = pneg %p197
        %p587 = scmp.lt.s32.totalorder %s28, 1
        %s588 = scalar_select %p587, %s28, 1
        %s589 = scalar_lea.vmem %s7, %s588
        %p590 = pneg %p226
        %p591 = pneg %p223
        %p592 = scmp.lt.s32.totalorder %s28, 1
        %s593 = scalar_select %p592, %s28, 1
        %s594 = smul.addr %s593, 64
        %s595 = smul.addr %s594, 4
        %s596 = scalar_lea.vmem %s8, %s595
        %p597 = pneg %p252
        %p598 = pneg %p249
        %p599 = scmp.lt.s32.totalorder %s28, 1
        %s600 = scalar_select %p599, %s28, 1
        %s601 = smul.addr %s600, 4
        %s602 = scalar_lea.vmem %s9, %s601
        %p603 = pneg %p278
        %p604 = pneg %p275
        %p605 = scmp.lt.s32.totalorder %s28, 1
        %s606 = scalar_select %p605, %s28, 1
        %s607 = smul.addr %s606, 64
        %s608 = smul.addr %s607, 4
        %s609 = scalar_lea.vmem %s10, %s608
        %p610 = pneg %p304
        %p611 = pneg %p301
        %p612 = scmp.lt.s32.totalorder %s28, 1
        %s613 = scalar_select %p612, %s28, 1
        %s614 = scalar_lea.vmem %s11, %s613
        %p615 = pneg %p330
        %p616 = pneg %p327
        %p617 = pneg %p351
        %p618 = pneg %p348
        %p619 = pneg %p372
        %p620 = pneg %p369
        %p621 = pneg %p393
        %p622 = pneg %p390
        %p623 = pneg %p414
        %p624 = pneg %p411
        %p625 = pneg %p435
        %p626 = pneg %p432
        %p627 = scmp.lt.s32.totalorder %s28, 1
        %s628 = scalar_select %p627, %s28, 1
        %s629 = scalar_lea.vmem %s1, %s628
        %p630 = scmp.lt.s32.totalorder %s28, 1
        %s631 = scalar_select %p630, %s28, 1
        %s632 = scalar_lea.vmem %s2, %s631
        %p633 = scmp.lt.s32.totalorder %s28, 1
        %s634 = scalar_select %p633, %s28, 1
        %s635 = smul.addr %s634, 192
        %s636 = smul.addr %s635, 4
        %s637 = scalar_lea.vmem %s3, %s636
        %p638 = scmp.lt.s32.totalorder %s28, 1
        %s639 = scalar_select %p638, %s28, 1
        %s640 = smul.addr %s639, 16
        %s641 = smul.addr %s640, 4
        %s642 = scalar_lea.vmem %s4, %s641
        %p643 = scmp.lt.s32.totalorder %s28, 1
        %s644 = scalar_select %p643, %s28, 1
        %s645 = scalar_lea.vmem %s5, %s644
        %p646 = scmp.lt.s32.totalorder %s28, 1
        %s647 = scalar_select %p646, %s28, 1
        %s648 = scalar_lea.vmem %s6, %s647
        %p649 = scmp.lt.s32.totalorder %s28, 1
        %s650 = scalar_select %p649, %s28, 1
        %s651 = scalar_lea.vmem %s7, %s650
        %p652 = scmp.lt.s32.totalorder %s28, 1
        %s653 = scalar_select %p652, %s28, 1
        %s654 = smul.addr %s653, 64
        %s655 = smul.addr %s654, 4
        %s656 = scalar_lea.vmem %s8, %s655
        %p657 = scmp.lt.s32.totalorder %s28, 1
        %s658 = scalar_select %p657, %s28, 1
        %s659 = smul.addr %s658, 4
        %s660 = scalar_lea.vmem %s9, %s659
        %p661 = scmp.lt.s32.totalorder %s28, 1
        %s662 = scalar_select %p661, %s28, 1
        %s663 = smul.addr %s662, 64
        %s664 = smul.addr %s663, 4
        %s665 = scalar_lea.vmem %s10, %s664
        %p666 = scmp.lt.s32.totalorder %s28, 1
        %s667 = scalar_select %p666, %s28, 1
        %s668 = scalar_lea.vmem %s11, %s667
        %p670 = scmp.eq.s32.totalorder %s28, 0
        // Predicated region
        $region85: #{tiny_gpt_forward.1} parent=83 // pred_check
          %p671 = pneg %p670
        $region86: #{tiny_gpt_forward.1} parent=83 // pred_check_branch
          %673 = sbr.rel (%p671) target = $region88
        $region87: #{tiny_gpt_forward.1} parent=83 // pred_region
          %v674 = vld [vmem:[%s0] sm:$0xff]
          %v675 = vld [vmem:[%s0 + $0x8] sm:$0xff]
          %v676 = vld [vmem:[%s0 + $0x10] sm:$0xff]
          %v677 = vld [vmem:[%s0 + $0x18] sm:$0xff]
          %678 = vst [vmem:[#allocation2] sm:$0xff] %v674
          %679 = vst [vmem:[#allocation2 + $0x8] sm:$0xff] %v675
          %680 = vst [vmem:[#allocation2 + $0x10] sm:$0xff] %v676
          %681 = vst [vmem:[#allocation2 + $0x18] sm:$0xff] %v677
        $region88: #{tiny_gpt_forward.1} parent=83 // pred_fallthru
          _
        %v682 = vld [vmem:[#allocation2] sm:$0xff]
        %v683 = vld [vmem:[#allocation2 + $0x8] sm:$0xff]
        %v684 = vld [vmem:[#allocation2 + $0x10] sm:$0xff]
        %v685 = vld [vmem:[#allocation2 + $0x18] sm:$0xff]
        %v686 = vld [vmem:[%s629] sm:$0x1]
        %v687 = vld [vmem:[%s632] sm:$0x1]
        %688 = vadd.xlane.f32.xlu0 %v682
        %v689 = vpop.xlane.xlu0 %688
        %690 = vadd.xlane.f32.xlu0 %v683
        %v691 = vpop.xlane.xlu0 %690
        %692 = vadd.xlane.f32.xlu0 %v684
        %v693 = vpop.xlane.xlu0 %692
        %694 = vadd.xlane.f32.xlu0 %v685
        %v695 = vpop.xlane.xlu0 %694
        %v696 = vrcp.pop 128.0
        %v697 = vmul.f32 %v689, %v696
        %v698 = vmul.f32 %v691, %v696
        %v699 = vmul.f32 %v693, %v696
        %v700 = vmul.f32 %v695, %v696
        %v701 = vsub.f32 %v682, %v697
        %v702 = vsub.f32 %v683, %v698
        %v703 = vsub.f32 %v684, %v699
        %v704 = vsub.f32 %v685, %v700
        %v705 = vmul.f32 %v701, %v701
        %v706 = vmul.f32 %v702, %v702
        %v707 = vmul.f32 %v703, %v703
        %v708 = vmul.f32 %v704, %v704
        %709 = vadd.xlane.f32.xlu0 %v705
        %v710 = vpop.xlane.xlu0 %709
        %711 = vadd.xlane.f32.xlu0 %v706
        %v712 = vpop.xlane.xlu0 %711
        %713 = vadd.xlane.f32.xlu0 %v707
        %v714 = vpop.xlane.xlu0 %713
        %715 = vadd.xlane.f32.xlu0 %v708
        %v716 = vpop.xlane.xlu0 %715
        %v717 = vmul.f32 %v710, %v696
        %v718 = vmul.f32 %v712, %v696
        %v719 = vmul.f32 %v714, %v696
        %v720 = vmul.f32 %v716, %v696
        %v721 = vadd.f32 %v717, 1e-05
        %v722 = vadd.f32 %v718, 1e-05
        %v723 = vadd.f32 %v719, 1e-05
        %v724 = vadd.f32 %v720, 1e-05
        %v725 = vrsqrt.pop %v721
        %v726 = vrsqrt.pop %v722
        %v727 = vrsqrt.pop %v723
        %v728 = vrsqrt.pop %v724
        %v729 = vmul.f32 %v701, %v725
        %v730 = vmul.f32 %v702, %v726
        %v731 = vmul.f32 %v703, %v727
        %v732 = vmul.f32 %v704, %v728
        %v734 = vlaneseq
        %v735 = vshrl.u32 %v734, 7
        %v736 = vsub.s32 0, %v735
        %v737 = vrot.slane %v686, %v736
        %v739 = vmul.f32 %v729, %v737
        %v740 = vmul.f32 %v730, %v737
        %v741 = vmul.f32 %v731, %v737
        %v742 = vmul.f32 %v732, %v737
        %v744 = vlaneseq
        %v745 = vshrl.u32 %v744, 7
        %v746 = vsub.s32 0, %v745
        %v747 = vrot.slane %v687, %v746
        %v749 = vadd.f32 %v739, %v747
        %v750 = vadd.f32 %v740, %v747
        %v751 = vadd.f32 %v741, %v747
        %v752 = vadd.f32 %v742, %v747
        %v753 = vpack.c.bf16 %v750, %v749
        %v754 = vpack.c.bf16 %v752, %v751
        %v755 = vld [vmem:[%s637] sm:$0xf]
        %v756 = vld [vmem:[%s637 + $0x4] sm:$0xf]
        %v757 = vld [vmem:[%s637 + $0x8] sm:$0xf]
        %v758 = vld [vmem:[%s637 + $0xc] sm:$0xf]
        %v759 = vld [vmem:[%s637 + $0x10] sm:$0xf]
        %v760 = vld [vmem:[%s637 + $0x14] sm:$0xf]
        %v761 = vld [vmem:[%s637 + $0x18] sm:$0xf]
        %v762 = vld [vmem:[%s637 + $0x1c] sm:$0xf]
        %v763 = vld [vmem:[%s637 + $0x20] sm:$0xf]
        %v764 = vld [vmem:[%s637 + $0x24] sm:$0xf]
        %v765 = vld [vmem:[%s637 + $0x28] sm:$0xf]
        %v766 = vld [vmem:[%s637 + $0x2c] sm:$0xf]
        %v767 = vld [vmem:[%s637 + $0x30] sm:$0xf]
        %v768 = vld [vmem:[%s637 + $0x34] sm:$0xf]
        %v769 = vld [vmem:[%s637 + $0x38] sm:$0xf]
        %v770 = vld [vmem:[%s637 + $0x3c] sm:$0xf]
        %v771 = vld [vmem:[%s637 + $0x40] sm:$0xf]
        %v772 = vld [vmem:[%s637 + $0x44] sm:$0xf]
        %v773 = vld [vmem:[%s637 + $0x48] sm:$0xf]
        %v774 = vld [vmem:[%s637 + $0x4c] sm:$0xf]
        %v775 = vld [vmem:[%s637 + $0x50] sm:$0xf]
        %v776 = vld [vmem:[%s637 + $0x54] sm:$0xf]
        %v777 = vld [vmem:[%s637 + $0x58] sm:$0xf]
        %v778 = vld [vmem:[%s637 + $0x5c] sm:$0xf]
        %v779 = vld [vmem:[%s637 + $0x60] sm:$0xf]
        %v780 = vld [vmem:[%s637 + $0x64] sm:$0xf]
        %v781 = vld [vmem:[%s637 + $0x68] sm:$0xf]
        %v782 = vld [vmem:[%s637 + $0x6c] sm:$0xf]
        %v783 = vld [vmem:[%s637 + $0x70] sm:$0xf]
        %v784 = vld [vmem:[%s637 + $0x74] sm:$0xf]
        %v785 = vld [vmem:[%s637 + $0x78] sm:$0xf]
        %v786 = vld [vmem:[%s637 + $0x7c] sm:$0xf]
        %v787 = vld [vmem:[%s637 + $0x80] sm:$0xf]
        %v788 = vld [vmem:[%s637 + $0x84] sm:$0xf]
        %v789 = vld [vmem:[%s637 + $0x88] sm:$0xf]
        %v790 = vld [vmem:[%s637 + $0x8c] sm:$0xf]
        %v791 = vld [vmem:[%s637 + $0x90] sm:$0xf]
        %v792 = vld [vmem:[%s637 + $0x94] sm:$0xf]
        %v793 = vld [vmem:[%s637 + $0x98] sm:$0xf]
        %v794 = vld [vmem:[%s637 + $0x9c] sm:$0xf]
        %v795 = vld [vmem:[%s637 + $0xa0] sm:$0xf]
        %v796 = vld [vmem:[%s637 + $0xa4] sm:$0xf]
        %v797 = vld [vmem:[%s637 + $0xa8] sm:$0xf]
        %v798 = vld [vmem:[%s637 + $0xac] sm:$0xf]
        %v799 = vld [vmem:[%s637 + $0xb0] sm:$0xf]
        %v800 = vld [vmem:[%s637 + $0xb4] sm:$0xf]
        %v801 = vld [vmem:[%s637 + $0xb8] sm:$0xf]
        %v802 = vld [vmem:[%s637 + $0xbc] sm:$0xf]
        %v803 = vld [vmem:[%s637 + $0xc0] sm:$0xf]
        %v804 = vld [vmem:[%s637 + $0xc4] sm:$0xf]
        %v805 = vld [vmem:[%s637 + $0xc8] sm:$0xf]
        %v806 = vld [vmem:[%s637 + $0xcc] sm:$0xf]
        %v807 = vld [vmem:[%s637 + $0xd0] sm:$0xf]
        %v808 = vld [vmem:[%s637 + $0xd4] sm:$0xf]
        %v809 = vld [vmem:[%s637 + $0xd8] sm:$0xf]
        %v810 = vld [vmem:[%s637 + $0xdc] sm:$0xf]
        %v811 = vld [vmem:[%s637 + $0xe0] sm:$0xf]
        %v812 = vld [vmem:[%s637 + $0xe4] sm:$0xf]
        %v813 = vld [vmem:[%s637 + $0xe8] sm:$0xf]
        %v814 = vld [vmem:[%s637 + $0xec] sm:$0xf]
        %v815 = vld [vmem:[%s637 + $0xf0] sm:$0xf]
        %v816 = vld [vmem:[%s637 + $0xf4] sm:$0xf]
        %v817 = vld [vmem:[%s637 + $0xf8] sm:$0xf]
        %v818 = vld [vmem:[%s637 + $0xfc] sm:$0xf]
        %v819 = vld [vmem:[%s637 + $0x100] sm:$0xf]
        %v820 = vld [vmem:[%s637 + $0x104] sm:$0xf]
        %v821 = vld [vmem:[%s637 + $0x108] sm:$0xf]
        %v822 = vld [vmem:[%s637 + $0x10c] sm:$0xf]
        %v823 = vld [vmem:[%s637 + $0x110] sm:$0xf]
        %v824 = vld [vmem:[%s637 + $0x114] sm:$0xf]
        %v825 = vld [vmem:[%s637 + $0x118] sm:$0xf]
        %v826 = vld [vmem:[%s637 + $0x11c] sm:$0xf]
        %v827 = vld [vmem:[%s637 + $0x120] sm:$0xf]
        %v828 = vld [vmem:[%s637 + $0x124] sm:$0xf]
        %v829 = vld [vmem:[%s637 + $0x128] sm:$0xf]
        %v830 = vld [vmem:[%s637 + $0x12c] sm:$0xf]
        %v831 = vld [vmem:[%s637 + $0x130] sm:$0xf]
        %v832 = vld [vmem:[%s637 + $0x134] sm:$0xf]
        %v833 = vld [vmem:[%s637 + $0x138] sm:$0xf]
        %v834 = vld [vmem:[%s637 + $0x13c] sm:$0xf]
        %v835 = vld [vmem:[%s637 + $0x140] sm:$0xf]
        %v836 = vld [vmem:[%s637 + $0x144] sm:$0xf]
        %v837 = vld [vmem:[%s637 + $0x148] sm:$0xf]
        %v838 = vld [vmem:[%s637 + $0x14c] sm:$0xf]
        %v839 = vld [vmem:[%s637 + $0x150] sm:$0xf]
        %v840 = vld [vmem:[%s637 + $0x154] sm:$0xf]
        %v841 = vld [vmem:[%s637 + $0x158] sm:$0xf]
        %v842 = vld [vmem:[%s637 + $0x15c] sm:$0xf]
        %v843 = vld [vmem:[%s637 + $0x160] sm:$0xf]
        %v844 = vld [vmem:[%s637 + $0x164] sm:$0xf]
        %v845 = vld [vmem:[%s637 + $0x168] sm:$0xf]
        %v846 = vld [vmem:[%s637 + $0x16c] sm:$0xf]
        %v847 = vld [vmem:[%s637 + $0x170] sm:$0xf]
        %v848 = vld [vmem:[%s637 + $0x174] sm:$0xf]
        %v849 = vld [vmem:[%s637 + $0x178] sm:$0xf]
        %v850 = vld [vmem:[%s637 + $0x17c] sm:$0xf]
        %v851 = vld [vmem:[%s637 + $0x180] sm:$0xf]
        %v852 = vld [vmem:[%s637 + $0x184] sm:$0xf]
        %v853 = vld [vmem:[%s637 + $0x188] sm:$0xf]
        %v854 = vld [vmem:[%s637 + $0x18c] sm:$0xf]
        %v855 = vld [vmem:[%s637 + $0x190] sm:$0xf]
        %v856 = vld [vmem:[%s637 + $0x194] sm:$0xf]
        %v857 = vld [vmem:[%s637 + $0x198] sm:$0xf]
        %v858 = vld [vmem:[%s637 + $0x19c] sm:$0xf]
        %v859 = vld [vmem:[%s637 + $0x1a0] sm:$0xf]
        %v860 = vld [vmem:[%s637 + $0x1a4] sm:$0xf]
        %v861 = vld [vmem:[%s637 + $0x1a8] sm:$0xf]
        %v862 = vld [vmem:[%s637 + $0x1ac] sm:$0xf]
        %v863 = vld [vmem:[%s637 + $0x1b0] sm:$0xf]
        %v864 = vld [vmem:[%s637 + $0x1b4] sm:$0xf]
        %v865 = vld [vmem:[%s637 + $0x1b8] sm:$0xf]
        %v866 = vld [vmem:[%s637 + $0x1bc] sm:$0xf]
        %v867 = vld [vmem:[%s637 + $0x1c0] sm:$0xf]
        %v868 = vld [vmem:[%s637 + $0x1c4] sm:$0xf]
        %v869 = vld [vmem:[%s637 + $0x1c8] sm:$0xf]
        %v870 = vld [vmem:[%s637 + $0x1cc] sm:$0xf]
        %v871 = vld [vmem:[%s637 + $0x1d0] sm:$0xf]
        %v872 = vld [vmem:[%s637 + $0x1d4] sm:$0xf]
        %v873 = vld [vmem:[%s637 + $0x1d8] sm:$0xf]
        %v874 = vld [vmem:[%s637 + $0x1dc] sm:$0xf]
        %v875 = vld [vmem:[%s637 + $0x1e0] sm:$0xf]
        %v876 = vld [vmem:[%s637 + $0x1e4] sm:$0xf]
        %v877 = vld [vmem:[%s637 + $0x1e8] sm:$0xf]
        %v878 = vld [vmem:[%s637 + $0x1ec] sm:$0xf]
        %v879 = vld [vmem:[%s637 + $0x1f0] sm:$0xf]
        %v880 = vld [vmem:[%s637 + $0x1f4] sm:$0xf]
        %v881 = vld [vmem:[%s637 + $0x1f8] sm:$0xf]
        %v882 = vld [vmem:[%s637 + $0x1fc] sm:$0xf]
        %v883 = vld [vmem:[%s637 + $0x200] sm:$0xf]
        %v884 = vld [vmem:[%s637 + $0x204] sm:$0xf]
        %v885 = vld [vmem:[%s637 + $0x208] sm:$0xf]
        %v886 = vld [vmem:[%s637 + $0x20c] sm:$0xf]
        %v887 = vld [vmem:[%s637 + $0x210] sm:$0xf]
        %v888 = vld [vmem:[%s637 + $0x214] sm:$0xf]
        %v889 = vld [vmem:[%s637 + $0x218] sm:$0xf]
        %v890 = vld [vmem:[%s637 + $0x21c] sm:$0xf]
        %v891 = vld [vmem:[%s637 + $0x220] sm:$0xf]
        %v892 = vld [vmem:[%s637 + $0x224] sm:$0xf]
        %v893 = vld [vmem:[%s637 + $0x228] sm:$0xf]
        %v894 = vld [vmem:[%s637 + $0x22c] sm:$0xf]
        %v895 = vld [vmem:[%s637 + $0x230] sm:$0xf]
        %v896 = vld [vmem:[%s637 + $0x234] sm:$0xf]
        %v897 = vld [vmem:[%s637 + $0x238] sm:$0xf]
        %v898 = vld [vmem:[%s637 + $0x23c] sm:$0xf]
        %v899 = vld [vmem:[%s637 + $0x240] sm:$0xf]
        %v900 = vld [vmem:[%s637 + $0x244] sm:$0xf]
        %v901 = vld [vmem:[%s637 + $0x248] sm:$0xf]
        %v902 = vld [vmem:[%s637 + $0x24c] sm:$0xf]
        %v903 = vld [vmem:[%s637 + $0x250] sm:$0xf]
        %v904 = vld [vmem:[%s637 + $0x254] sm:$0xf]
        %v905 = vld [vmem:[%s637 + $0x258] sm:$0xf]
        %v906 = vld [vmem:[%s637 + $0x25c] sm:$0xf]
        %v907 = vld [vmem:[%s637 + $0x260] sm:$0xf]
        %v908 = vld [vmem:[%s637 + $0x264] sm:$0xf]
        %v909 = vld [vmem:[%s637 + $0x268] sm:$0xf]
        %v910 = vld [vmem:[%s637 + $0x26c] sm:$0xf]
        %v911 = vld [vmem:[%s637 + $0x270] sm:$0xf]
        %v912 = vld [vmem:[%s637 + $0x274] sm:$0xf]
        %v913 = vld [vmem:[%s637 + $0x278] sm:$0xf]
        %v914 = vld [vmem:[%s637 + $0x27c] sm:$0xf]
        %v915 = vld [vmem:[%s637 + $0x280] sm:$0xf]
        %v916 = vld [vmem:[%s637 + $0x284] sm:$0xf]
        %v917 = vld [vmem:[%s637 + $0x288] sm:$0xf]
        %v918 = vld [vmem:[%s637 + $0x28c] sm:$0xf]
        %v919 = vld [vmem:[%s637 + $0x290] sm:$0xf]
        %v920 = vld [vmem:[%s637 + $0x294] sm:$0xf]
        %v921 = vld [vmem:[%s637 + $0x298] sm:$0xf]
        %v922 = vld [vmem:[%s637 + $0x29c] sm:$0xf]
        %v923 = vld [vmem:[%s637 + $0x2a0] sm:$0xf]
        %v924 = vld [vmem:[%s637 + $0x2a4] sm:$0xf]
        %v925 = vld [vmem:[%s637 + $0x2a8] sm:$0xf]
        %v926 = vld [vmem:[%s637 + $0x2ac] sm:$0xf]
        %v927 = vld [vmem:[%s637 + $0x2b0] sm:$0xf]
        %v928 = vld [vmem:[%s637 + $0x2b4] sm:$0xf]
        %v929 = vld [vmem:[%s637 + $0x2b8] sm:$0xf]
        %v930 = vld [vmem:[%s637 + $0x2bc] sm:$0xf]
        %v931 = vld [vmem:[%s637 + $0x2c0] sm:$0xf]
        %v932 = vld [vmem:[%s637 + $0x2c4] sm:$0xf]
        %v933 = vld [vmem:[%s637 + $0x2c8] sm:$0xf]
        %v934 = vld [vmem:[%s637 + $0x2cc] sm:$0xf]
        %v935 = vld [vmem:[%s637 + $0x2d0] sm:$0xf]
        %v936 = vld [vmem:[%s637 + $0x2d4] sm:$0xf]
        %v937 = vld [vmem:[%s637 + $0x2d8] sm:$0xf]
        %v938 = vld [vmem:[%s637 + $0x2dc] sm:$0xf]
        %v939 = vld [vmem:[%s637 + $0x2e0] sm:$0xf]
        %v940 = vld [vmem:[%s637 + $0x2e4] sm:$0xf]
        %v941 = vld [vmem:[%s637 + $0x2e8] sm:$0xf]
        %v942 = vld [vmem:[%s637 + $0x2ec] sm:$0xf]
        %v943 = vld [vmem:[%s637 + $0x2f0] sm:$0xf]
        %v944 = vld [vmem:[%s637 + $0x2f4] sm:$0xf]
        %v945 = vld [vmem:[%s637 + $0x2f8] sm:$0xf]
        %v946 = vld [vmem:[%s637 + $0x2fc] sm:$0xf]
        %v963 = vunpack.c.l.b16 %v755
        %v964 = vunpack.c.l.b16 %v756
        %v965 = vunpack.c.l.b16 %v757
        %v966 = vunpack.c.l.b16 %v758
        %v967 = vunpack.c.l.b16 %v759
        %v968 = vunpack.c.l.b16 %v760
        %v969 = vunpack.c.l.b16 %v761
        %v970 = vunpack.c.l.b16 %v762
        %v971 = vunpack.c.l.b16 %v763
        %v972 = vunpack.c.l.b16 %v764
        %v973 = vunpack.c.l.b16 %v765
        %v974 = vunpack.c.l.b16 %v766
        %v975 = vunpack.c.l.b16 %v767
        %v976 = vunpack.c.l.b16 %v768
        %v977 = vunpack.c.l.b16 %v769
        %v978 = vunpack.c.l.b16 %v770
        %v979 = vpack.c.b16 %v964, %v963
        %v980 = vpack.c.b16 %v966, %v965
        %v981 = vpack.c.b16 %v968, %v967
        %v982 = vpack.c.b16 %v970, %v969
        %v983 = vpack.c.b16 %v972, %v971
        %v984 = vpack.c.b16 %v974, %v973
        %v985 = vpack.c.b16 %v976, %v975
        %v986 = vpack.c.b16 %v978, %v977
        %995 = vmatprep.subr.bf16.mxu0 0
        %996 = vmatpush1.bf16.msra.mxu0 %v986
        %997 = vmatprep.subr.bf16.mxu0 0
        %998 = vmatpush1.bf16.msra.mxu0 %v985
        %999 = vmatprep.subr.bf16.mxu0 0
        %1000 = vmatpush1.bf16.msra.mxu0 %v984
        %1001 = vmatprep.subr.bf16.mxu0 0
        %1002 = vmatpush1.bf16.msra.mxu0 %v983
        %1003 = vmatprep.subr.bf16.mxu0 0
        %1004 = vmatpush1.bf16.msra.mxu0 %v982
        %1005 = vmatprep.subr.bf16.mxu0 0
        %1006 = vmatpush1.bf16.msra.mxu0 %v981
        %1007 = vmatprep.subr.bf16.mxu0 0
        %1008 = vmatpush1.bf16.msra.mxu0 %v980
        %1009 = vmatprep.subr.bf16.mxu0 0
        %1010 = vmatpush1.bf16.msra.mxu0 %v979
        %1011 = vmatprep.subr.bf16.mxu0 0
        %1012 = vmatpush2.bf16.msra.mxu0 0
        %1013 = vmatprep.subr.bf16.mxu0 0
        %1014 = vmatpush2.bf16.msra.mxu0 0
        %1015 = vmatprep.subr.bf16.mxu0 0
        %1016 = vmatpush2.bf16.msra.mxu0 0
        %1017 = vmatprep.subr.bf16.mxu0 0
        %1018 = vmatpush2.bf16.msra.mxu0 0
        %1019 = vmatprep.subr.bf16.mxu0 0
        %1020 = vmatpush2.bf16.msra.mxu0 0
        %1021 = vmatprep.subr.bf16.mxu0 0
        %1022 = vmatpush2.bf16.msra.mxu0 0
        %1023 = vmatprep.subr.bf16.mxu0 0
        %1024 = vmatpush2.bf16.msra.mxu0 0
        %1025 = vmatprep.subr.bf16.mxu0 0
        %1026 = vmatpush2.bf16.msra.mxu0 0
        %1027 = vmatprep.mubr.bf16.mxu0 0
        %1028 = vmatmul.mubr.bf16.gmra.mxu0 %v753
        %v1029 = vpop.f32.mrf.mxu0
        %v1030 = vadd.f32 0.0, %v1029
        %v1031 = vpop.f32.mrf.mxu0
        %v1032 = vpop.f32.mrf.mxu0
        %v1033 = vadd.f32 0.0, %v1032
        %v1034 = vpop.f32.mrf.mxu0
        %1035 = vmatprep.mubr.bf16.mxu0 0
        %1036 = vmatmul.mubr.bf16.gmra.mxu0 %v754
        %v1037 = vpop.f32.mrf.mxu0
        %v1038 = vadd.f32 0.0, %v1037
        %v1039 = vpop.f32.mrf.mxu0
        %v1040 = vpop.f32.mrf.mxu0
        %v1041 = vadd.f32 0.0, %v1040
        %v1042 = vpop.f32.mrf.mxu0
        %1043 = vdwg.mxu0
        %v1060 = vunpack.c.l.b16 %v771
        %v1061 = vunpack.c.l.b16 %v772
        %v1062 = vunpack.c.l.b16 %v773
        %v1063 = vunpack.c.l.b16 %v774
        %v1064 = vunpack.c.l.b16 %v775
        %v1065 = vunpack.c.l.b16 %v776
        %v1066 = vunpack.c.l.b16 %v777
        %v1067 = vunpack.c.l.b16 %v778
        %v1068 = vunpack.c.l.b16 %v779
        %v1069 = vunpack.c.l.b16 %v780
        %v1070 = vunpack.c.l.b16 %v781
        %v1071 = vunpack.c.l.b16 %v782
        %v1072 = vunpack.c.l.b16 %v783
        %v1073 = vunpack.c.l.b16 %v784
        %v1074 = vunpack.c.l.b16 %v785
        %v1075 = vunpack.c.l.b16 %v786
        %v1076 = vpack.c.b16 %v1061, %v1060
        %v1077 = vpack.c.b16 %v1063, %v1062
        %v1078 = vpack.c.b16 %v1065, %v1064
        %v1079 = vpack.c.b16 %v1067, %v1066
        %v1080 = vpack.c.b16 %v1069, %v1068
        %v1081 = vpack.c.b16 %v1071, %v1070
        %v1082 = vpack.c.b16 %v1073, %v1072
        %v1083 = vpack.c.b16 %v1075, %v1074
        %1092 = vmatprep.subr.bf16.mxu0 0
        %1093 = vmatpush1.bf16.msra.mxu0 %v1083
        %1094 = vmatprep.subr.bf16.mxu0 0
        %1095 = vmatpush1.bf16.msra.mxu0 %v1082
        %1096 = vmatprep.subr.bf16.mxu0 0
        %1097 = vmatpush1.bf16.msra.mxu0 %v1081
        %1098 = vmatprep.subr.bf16.mxu0 0
        %1099 = vmatpush1.bf16.msra.mxu0 %v1080
        %1100 = vmatprep.subr.bf16.mxu0 0
        %1101 = vmatpush1.bf16.msra.mxu0 %v1079
        %1102 = vmatprep.subr.bf16.mxu0 0
        %1103 = vmatpush1.bf16.msra.mxu0 %v1078
        %1104 = vmatprep.subr.bf16.mxu0 0
        %1105 = vmatpush1.bf16.msra.mxu0 %v1077
        %1106 = vmatprep.subr.bf16.mxu0 0
        %1107 = vmatpush1.bf16.msra.mxu0 %v1076
        %1108 = vmatprep.subr.bf16.mxu0 0
        %1109 = vmatpush2.bf16.msra.mxu0 0
        %1110 = vmatprep.subr.bf16.mxu0 0
        %1111 = vmatpush2.bf16.msra.mxu0 0
        %1112 = vmatprep.subr.bf16.mxu0 0
        %1113 = vmatpush2.bf16.msra.mxu0 0
        %1114 = vmatprep.subr.bf16.mxu0 0
        %1115 = vmatpush2.bf16.msra.mxu0 0
        %1116 = vmatprep.subr.bf16.mxu0 0
        %1117 = vmatpush2.bf16.msra.mxu0 0
        %1118 = vmatprep.subr.bf16.mxu0 0
        %1119 = vmatpush2.bf16.msra.mxu0 0
        %1120 = vmatprep.subr.bf16.mxu0 0
        %1121 = vmatpush2.bf16.msra.mxu0 0
        %1122 = vmatprep.subr.bf16.mxu0 0
        %1123 = vmatpush2.bf16.msra.mxu0 0
        %1124 = vmatprep.mubr.bf16.mxu0 0
        %1125 = vmatmul.mubr.bf16.gmra.mxu0 %v753
        %v1126 = vpop.f32.mrf.mxu0
        %v1127 = vadd.f32 0.0, %v1126
        %v1128 = vpop.f32.mrf.mxu0
        %v1129 = vpop.f32.mrf.mxu0
        %v1130 = vadd.f32 0.0, %v1129
        %v1131 = vpop.f32.mrf.mxu0
        %1132 = vmatprep.mubr.bf16.mxu0 0
        %1133 = vmatmul.mubr.bf16.gmra.mxu0 %v754
        %v1134 = vpop.f32.mrf.mxu0
        %v1135 = vadd.f32 0.0, %v1134
        %v1136 = vpop.f32.mrf.mxu0
        %v1137 = vpop.f32.mrf.mxu0
        %v1138 = vadd.f32 0.0, %v1137
        %v1139 = vpop.f32.mrf.mxu0
        %1140 = vdwg.mxu0
        %v1157 = vunpack.c.l.b16 %v787
        %v1158 = vunpack.c.l.b16 %v788
        %v1159 = vunpack.c.l.b16 %v789
        %v1160 = vunpack.c.l.b16 %v790
        %v1161 = vunpack.c.l.b16 %v791
        %v1162 = vunpack.c.l.b16 %v792
        %v1163 = vunpack.c.l.b16 %v793
        %v1164 = vunpack.c.l.b16 %v794
        %v1165 = vunpack.c.l.b16 %v795
        %v1166 = vunpack.c.l.b16 %v796
        %v1167 = vunpack.c.l.b16 %v797
        %v1168 = vunpack.c.l.b16 %v798
        %v1169 = vunpack.c.l.b16 %v799
        %v1170 = vunpack.c.l.b16 %v800
        %v1171 = vunpack.c.l.b16 %v801
        %v1172 = vunpack.c.l.b16 %v802
        %v1173 = vpack.c.b16 %v1158, %v1157
        %v1174 = vpack.c.b16 %v1160, %v1159
        %v1175 = vpack.c.b16 %v1162, %v1161
        %v1176 = vpack.c.b16 %v1164, %v1163
        %v1177 = vpack.c.b16 %v1166, %v1165
        %v1178 = vpack.c.b16 %v1168, %v1167
        %v1179 = vpack.c.b16 %v1170, %v1169
        %v1180 = vpack.c.b16 %v1172, %v1171
        %1189 = vmatprep.subr.bf16.mxu0 0
        %1190 = vmatpush1.bf16.msra.mxu0 %v1180
        %1191 = vmatprep.subr.bf16.mxu0 0
        %1192 = vmatpush1.bf16.msra.mxu0 %v1179
        %1193 = vmatprep.subr.bf16.mxu0 0
        %1194 = vmatpush1.bf16.msra.mxu0 %v1178
        %1195 = vmatprep.subr.bf16.mxu0 0
        %1196 = vmatpush1.bf16.msra.mxu0 %v1177
        %1197 = vmatprep.subr.bf16.mxu0 0
        %1198 = vmatpush1.bf16.msra.mxu0 %v1176
        %1199 = vmatprep.subr.bf16.mxu0 0
        %1200 = vmatpush1.bf16.msra.mxu0 %v1175
        %1201 = vmatprep.subr.bf16.mxu0 0
        %1202 = vmatpush1.bf16.msra.mxu0 %v1174
        %1203 = vmatprep.subr.bf16.mxu0 0
        %1204 = vmatpush1.bf16.msra.mxu0 %v1173
        %1205 = vmatprep.subr.bf16.mxu0 0
        %1206 = vmatpush2.bf16.msra.mxu0 0
        %1207 = vmatprep.subr.bf16.mxu0 0
        %1208 = vmatpush2.bf16.msra.mxu0 0
        %1209 = vmatprep.subr.bf16.mxu0 0
        %1210 = vmatpush2.bf16.msra.mxu0 0
        %1211 = vmatprep.subr.bf16.mxu0 0
        %1212 = vmatpush2.bf16.msra.mxu0 0
        %1213 = vmatprep.subr.bf16.mxu0 0
        %1214 = vmatpush2.bf16.msra.mxu0 0
        %1215 = vmatprep.subr.bf16.mxu0 0
        %1216 = vmatpush2.bf16.msra.mxu0 0
        %1217 = vmatprep.subr.bf16.mxu0 0
        %1218 = vmatpush2.bf16.msra.mxu0 0
        %1219 = vmatprep.subr.bf16.mxu0 0
        %1220 = vmatpush2.bf16.msra.mxu0 0
        %1221 = vmatprep.mubr.bf16.mxu0 0
        %1222 = vmatmul.mubr.bf16.gmra.mxu0 %v753
        %v1223 = vpop.f32.mrf.mxu0
        %v1224 = vadd.f32 0.0, %v1223
        %v1225 = vpop.f32.mrf.mxu0
        %v1226 = vpop.f32.mrf.mxu0
        %v1227 = vadd.f32 0.0, %v1226
        %v1228 = vpop.f32.mrf.mxu0
        %1229 = vmatprep.mubr.bf16.mxu0 0
        %1230 = vmatmul.mubr.bf16.gmra.mxu0 %v754
        %v1231 = vpop.f32.mrf.mxu0
        %v1232 = vadd.f32 0.0, %v1231
        %v1233 = vpop.f32.mrf.mxu0
        %v1234 = vpop.f32.mrf.mxu0
        %v1235 = vadd.f32 0.0, %v1234
        %v1236 = vpop.f32.mrf.mxu0
        %1237 = vdwg.mxu0
        %v1254 = vunpack.c.l.b16 %v803
        %v1255 = vunpack.c.l.b16 %v804
        %v1256 = vunpack.c.l.b16 %v805
        %v1257 = vunpack.c.l.b16 %v806
        %v1258 = vunpack.c.l.b16 %v807
        %v1259 = vunpack.c.l.b16 %v808
        %v1260 = vunpack.c.l.b16 %v809
        %v1261 = vunpack.c.l.b16 %v810
        %v1262 = vunpack.c.l.b16 %v811
        %v1263 = vunpack.c.l.b16 %v812
        %v1264 = vunpack.c.l.b16 %v813
        %v1265 = vunpack.c.l.b16 %v814
        %v1266 = vunpack.c.l.b16 %v815
        %v1267 = vunpack.c.l.b16 %v816
        %v1268 = vunpack.c.l.b16 %v817
        %v1269 = vunpack.c.l.b16 %v818
        %v1270 = vpack.c.b16 %v1255, %v1254
        %v1271 = vpack.c.b16 %v1257, %v1256
        %v1272 = vpack.c.b16 %v1259, %v1258
        %v1273 = vpack.c.b16 %v1261, %v1260
        %v1274 = vpack.c.b16 %v1263, %v1262
        %v1275 = vpack.c.b16 %v1265, %v1264
        %v1276 = vpack.c.b16 %v1267, %v1266
        %v1277 = vpack.c.b16 %v1269, %v1268
        %1286 = vmatprep.subr.bf16.mxu0 0
        %1287 = vmatpush1.bf16.msra.mxu0 %v1277
        %1288 = vmatprep.subr.bf16.mxu0 0
        %1289 = vmatpush1.bf16.msra.mxu0 %v1276
        %1290 = vmatprep.subr.bf16.mxu0 0
        %1291 = vmatpush1.bf16.msra.mxu0 %v1275
        %1292 = vmatprep.subr.bf16.mxu0 0
        %1293 = vmatpush1.bf16.msra.mxu0 %v1274
        %1294 = vmatprep.subr.bf16.mxu0 0
        %1295 = vmatpush1.bf16.msra.mxu0 %v1273
        %1296 = vmatprep.subr.bf16.mxu0 0
        %1297 = vmatpush1.bf16.msra.mxu0 %v1272
        %1298 = vmatprep.subr.bf16.mxu0 0
        %1299 = vmatpush1.bf16.msra.mxu0 %v1271
        %1300 = vmatprep.subr.bf16.mxu0 0
        %1301 = vmatpush1.bf16.msra.mxu0 %v1270
        %1302 = vmatprep.subr.bf16.mxu0 0
        %1303 = vmatpush2.bf16.msra.mxu0 0
        %1304 = vmatprep.subr.bf16.mxu0 0
        %1305 = vmatpush2.bf16.msra.mxu0 0
        %1306 = vmatprep.subr.bf16.mxu0 0
        %1307 = vmatpush2.bf16.msra.mxu0 0
        %1308 = vmatprep.subr.bf16.mxu0 0
        %1309 = vmatpush2.bf16.msra.mxu0 0
        %1310 = vmatprep.subr.bf16.mxu0 0
        %1311 = vmatpush2.bf16.msra.mxu0 0
        %1312 = vmatprep.subr.bf16.mxu0 0
        %1313 = vmatpush2.bf16.msra.mxu0 0
        %1314 = vmatprep.subr.bf16.mxu0 0
        %1315 = vmatpush2.bf16.msra.mxu0 0
        %1316 = vmatprep.subr.bf16.mxu0 0
        %1317 = vmatpush2.bf16.msra.mxu0 0
        %1318 = vmatprep.mubr.bf16.mxu0 0
        %1319 = vmatmul.mubr.bf16.gmra.mxu0 %v753
        %v1320 = vpop.f32.mrf.mxu0
        %v1321 = vadd.f32 0.0, %v1320
        %v1322 = vpop.f32.mrf.mxu0
        %v1323 = vpop.f32.mrf.mxu0
        %v1324 = vadd.f32 0.0, %v1323
        %v1325 = vpop.f32.mrf.mxu0
        %1326 = vmatprep.mubr.bf16.mxu0 0
        %1327 = vmatmul.mubr.bf16.gmra.mxu0 %v754
        %v1328 = vpop.f32.mrf.mxu0
        %v1329 = vadd.f32 0.0, %v1328
        %v1330 = vpop.f32.mrf.mxu0
        %v1331 = vpop.f32.mrf.mxu0
        %v1332 = vadd.f32 0.0, %v1331
        %v1333 = vpop.f32.mrf.mxu0
        %1334 = vdwg.mxu0
        %v1351 = vunpack.c.l.b16 %v819
        %v1352 = vunpack.c.l.b16 %v820
        %v1353 = vunpack.c.l.b16 %v821
        %v1354 = vunpack.c.l.b16 %v822
        %v1355 = vunpack.c.l.b16 %v823
        %v1356 = vunpack.c.l.b16 %v824
        %v1357 = vunpack.c.l.b16 %v825
        %v1358 = vunpack.c.l.b16 %v826
        %v1359 = vunpack.c.l.b16 %v827
        %v1360 = vunpack.c.l.b16 %v828
        %v1361 = vunpack.c.l.b16 %v829
        %v1362 = vunpack.c.l.b16 %v830
        %v1363 = vunpack.c.l.b16 %v831
        %v1364 = vunpack.c.l.b16 %v832
        %v1365 = vunpack.c.l.b16 %v833
        %v1366 = vunpack.c.l.b16 %v834
        %v1367 = vpack.c.b16 %v1352, %v1351
        %v1368 = vpack.c.b16 %v1354, %v1353
        %v1369 = vpack.c.b16 %v1356, %v1355
        %v1370 = vpack.c.b16 %v1358, %v1357
        %v1371 = vpack.c.b16 %v1360, %v1359
        %v1372 = vpack.c.b16 %v1362, %v1361
        %v1373 = vpack.c.b16 %v1364, %v1363
        %v1374 = vpack.c.b16 %v1366, %v1365
        %1383 = vmatprep.subr.bf16.mxu0 0
        %1384 = vmatpush1.bf16.msra.mxu0 %v1374
        %1385 = vmatprep.subr.bf16.mxu0 0
        %1386 = vmatpush1.bf16.msra.mxu0 %v1373
        %1387 = vmatprep.subr.bf16.mxu0 0
        %1388 = vmatpush1.bf16.msra.mxu0 %v1372
        %1389 = vmatprep.subr.bf16.mxu0 0
        %1390 = vmatpush1.bf16.msra.mxu0 %v1371
        %1391 = vmatprep.subr.bf16.mxu0 0
        %1392 = vmatpush1.bf16.msra.mxu0 %v1370
        %1393 = vmatprep.subr.bf16.mxu0 0
        %1394 = vmatpush1.bf16.msra.mxu0 %v1369
        %1395 = vmatprep.subr.bf16.mxu0 0
        %1396 = vmatpush1.bf16.msra.mxu0 %v1368
        %1397 = vmatprep.subr.bf16.mxu0 0
        %1398 = vmatpush1.bf16.msra.mxu0 %v1367
        %1399 = vmatprep.subr.bf16.mxu0 0
        %1400 = vmatpush2.bf16.msra.mxu0 0
        %1401 = vmatprep.subr.bf16.mxu0 0
        %1402 = vmatpush2.bf16.msra.mxu0 0
        %1403 = vmatprep.subr.bf16.mxu0 0
        %1404 = vmatpush2.bf16.msra.mxu0 0
        %1405 = vmatprep.subr.bf16.mxu0 0
        %1406 = vmatpush2.bf16.msra.mxu0 0
        %1407 = vmatprep.subr.bf16.mxu0 0
        %1408 = vmatpush2.bf16.msra.mxu0 0
        %1409 = vmatprep.subr.bf16.mxu0 0
        %1410 = vmatpush2.bf16.msra.mxu0 0
        %1411 = vmatprep.subr.bf16.mxu0 0
        %1412 = vmatpush2.bf16.msra.mxu0 0
        %1413 = vmatprep.subr.bf16.mxu0 0
        %1414 = vmatpush2.bf16.msra.mxu0 0
        %1415 = vmatprep.mubr.bf16.mxu0 0
        %1416 = vmatmul.mubr.bf16.gmra.mxu0 %v753
        %v1417 = vpop.f32.mrf.mxu0
        %v1418 = vadd.f32 0.0, %v1417
        %v1419 = vpop.f32.mrf.mxu0
        %v1420 = vpop.f32.mrf.mxu0
        %v1421 = vadd.f32 0.0, %v1420
        %v1422 = vpop.f32.mrf.mxu0
        %1423 = vmatprep.mubr.bf16.mxu0 0
        %1424 = vmatmul.mubr.bf16.gmra.mxu0 %v754
        %v1425 = vpop.f32.mrf.mxu0
        %v1426 = vadd.f32 0.0, %v1425
        %v1427 = vpop.f32.mrf.mxu0
        %v1428 = vpop.f32.mrf.mxu0
        %v1429 = vadd.f32 0.0, %v1428
        %v1430 = vpop.f32.mrf.mxu0
        %1431 = vdwg.mxu0
        %v1448 = vunpack.c.l.b16 %v835
        %v1449 = vunpack.c.l.b16 %v836
        %v1450 = vunpack.c.l.b16 %v837
        %v1451 = vunpack.c.l.b16 %v838
        %v1452 = vunpack.c.l.b16 %v839
        %v1453 = vunpack.c.l.b16 %v840
        %v1454 = vunpack.c.l.b16 %v841
        %v1455 = vunpack.c.l.b16 %v842
        %v1456 = vunpack.c.l.b16 %v843
        %v1457 = vunpack.c.l.b16 %v844
        %v1458 = vunpack.c.l.b16 %v845
        %v1459 = vunpack.c.l.b16 %v846
        %v1460 = vunpack.c.l.b16 %v847
        %v1461 = vunpack.c.l.b16 %v848
        %v1462 = vunpack.c.l.b16 %v849
        %v1463 = vunpack.c.l.b16 %v850
        %v1464 = vpack.c.b16 %v1449, %v1448
        %v1465 = vpack.c.b16 %v1451, %v1450
        %v1466 = vpack.c.b16 %v1453, %v1452
        %v1467 = vpack.c.b16 %v1455, %v1454
        %v1468 = vpack.c.b16 %v1457, %v1456
        %v1469 = vpack.c.b16 %v1459, %v1458
        %v1470 = vpack.c.b16 %v1461, %v1460
        %v1471 = vpack.c.b16 %v1463, %v1462
        %1480 = vmatprep.subr.bf16.mxu0 0
        %1481 = vmatpush1.bf16.msra.mxu0 %v1471
        %1482 = vmatprep.subr.bf16.mxu0 0
        %1483 = vmatpush1.bf16.msra.mxu0 %v1470
        %1484 = vmatprep.subr.bf16.mxu0 0
        %1485 = vmatpush1.bf16.msra.mxu0 %v1469
        %1486 = vmatprep.subr.bf16.mxu0 0
        %1487 = vmatpush1.bf16.msra.mxu0 %v1468
        %1488 = vmatprep.subr.bf16.mxu0 0
        %1489 = vmatpush1.bf16.msra.mxu0 %v1467
        %1490 = vmatprep.subr.bf16.mxu0 0
        %1491 = vmatpush1.bf16.msra.mxu0 %v1466
        %1492 = vmatprep.subr.bf16.mxu0 0
        %1493 = vmatpush1.bf16.msra.mxu0 %v1465
        %1494 = vmatprep.subr.bf16.mxu0 0
        %1495 = vmatpush1.bf16.msra.mxu0 %v1464
        %1496 = vmatprep.subr.bf16.mxu0 0
        %1497 = vmatpush2.bf16.msra.mxu0 0
        %1498 = vmatprep.subr.bf16.mxu0 0
        %1499 = vmatpush2.bf16.msra.mxu0 0
        %1500 = vmatprep.subr.bf16.mxu0 0
        %1501 = vmatpush2.bf16.msra.mxu0 0
        %1502 = vmatprep.subr.bf16.mxu0 0
        %1503 = vmatpush2.bf16.msra.mxu0 0
        %1504 = vmatprep.subr.bf16.mxu0 0
        %1505 = vmatpush2.bf16.msra.mxu0 0
        %1506 = vmatprep.subr.bf16.mxu0 0
        %1507 = vmatpush2.bf16.msra.mxu0 0
        %1508 = vmatprep.subr.bf16.mxu0 0
        %1509 = vmatpush2.bf16.msra.mxu0 0
        %1510 = vmatprep.subr.bf16.mxu0 0
        %1511 = vmatpush2.bf16.msra.mxu0 0
        %1512 = vmatprep.mubr.bf16.mxu0 0
        %1513 = vmatmul.mubr.bf16.gmra.mxu0 %v753
        %v1514 = vpop.f32.mrf.mxu0
        %v1515 = vadd.f32 0.0, %v1514
        %v1516 = vpop.f32.mrf.mxu0
        %v1517 = vpop.f32.mrf.mxu0
        %v1518 = vadd.f32 0.0, %v1517
        %v1519 = vpop.f32.mrf.mxu0
        %1520 = vmatprep.mubr.bf16.mxu0 0
        %1521 = vmatmul.mubr.bf16.gmra.mxu0 %v754
        %v1522 = vpop.f32.mrf.mxu0
        %v1523 = vadd.f32 0.0, %v1522
        %v1524 = vpop.f32.mrf.mxu0
        %v1525 = vpop.f32.mrf.mxu0
        %v1526 = vadd.f32 0.0, %v1525
        %v1527 = vpop.f32.mrf.mxu0
        %1528 = vdwg.mxu0
        %v1545 = vunpack.c.l.b16 %v851
        %v1546 = vunpack.c.l.b16 %v852
        %v1547 = vunpack.c.l.b16 %v853
        %v1548 = vunpack.c.l.b16 %v854
        %v1549 = vunpack.c.l.b16 %v855
        %v1550 = vunpack.c.l.b16 %v856
        %v1551 = vunpack.c.l.b16 %v857
        %v1552 = vunpack.c.l.b16 %v858
        %v1553 = vunpack.c.l.b16 %v859
        %v1554 = vunpack.c.l.b16 %v860
        %v1555 = vunpack.c.l.b16 %v861
        %v1556 = vunpack.c.l.b16 %v862
        %v1557 = vunpack.c.l.b16 %v863
        %v1558 = vunpack.c.l.b16 %v864
        %v1559 = vunpack.c.l.b16 %v865
        %v1560 = vunpack.c.l.b16 %v866
        %v1561 = vpack.c.b16 %v1546, %v1545
        %v1562 = vpack.c.b16 %v1548, %v1547
        %v1563 = vpack.c.b16 %v1550, %v1549
        %v1564 = vpack.c.b16 %v1552, %v1551
        %v1565 = vpack.c.b16 %v1554, %v1553
        %v1566 = vpack.c.b16 %v1556, %v1555
        %v1567 = vpack.c.b16 %v1558, %v1557
        %v1568 = vpack.c.b16 %v1560, %v1559
        %1577 = vmatprep.subr.bf16.mxu0 0
        %1578 = vmatpush1.bf16.msra.mxu0 %v1568
        %1579 = vmatprep.subr.bf16.mxu0 0
        %1580 = vmatpush1.bf16.msra.mxu0 %v1567
        %1581 = vmatprep.subr.bf16.mxu0 0
        %1582 = vmatpush1.bf16.msra.mxu0 %v1566
        %1583 = vmatprep.subr.bf16.mxu0 0
        %1584 = vmatpush1.bf16.msra.mxu0 %v1565
        %1585 = vmatprep.subr.bf16.mxu0 0
        %1586 = vmatpush1.bf16.msra.mxu0 %v1564
        %1587 = vmatprep.subr.bf16.mxu0 0
        %1588 = vmatpush1.bf16.msra.mxu0 %v1563
        %1589 = vmatprep.subr.bf16.mxu0 0
        %1590 = vmatpush1.bf16.msra.mxu0 %v1562
        %1591 = vmatprep.subr.bf16.mxu0 0
        %1592 = vmatpush1.bf16.msra.mxu0 %v1561
        %1593 = vmatprep.subr.bf16.mxu0 0
        %1594 = vmatpush2.bf16.msra.mxu0 0
        %1595 = vmatprep.subr.bf16.mxu0 0
        %1596 = vmatpush2.bf16.msra.mxu0 0
        %1597 = vmatprep.subr.bf16.mxu0 0
        %1598 = vmatpush2.bf16.msra.mxu0 0
        %1599 = vmatprep.subr.bf16.mxu0 0
        %1600 = vmatpush2.bf16.msra.mxu0 0
        %1601 = vmatprep.subr.bf16.mxu0 0
        %1602 = vmatpush2.bf16.msra.mxu0 0
        %1603 = vmatprep.subr.bf16.mxu0 0
        %1604 = vmatpush2.bf16.msra.mxu0 0
        %1605 = vmatprep.subr.bf16.mxu0 0
        %1606 = vmatpush2.bf16.msra.mxu0 0
        %1607 = vmatprep.subr.bf16.mxu0 0
        %1608 = vmatpush2.bf16.msra.mxu0 0
        %1609 = vmatprep.mubr.bf16.mxu0 0
        %1610 = vmatmul.mubr.bf16.gmra.mxu0 %v753
        %v1611 = vpop.f32.mrf.mxu0
        %v1612 = vadd.f32 0.0, %v1611
        %v1613 = vpop.f32.mrf.mxu0
        %v1614 = vpop.f32.mrf.mxu0
        %v1615 = vadd.f32 0.0, %v1614
        %v1616 = vpop.f32.mrf.mxu0
        %1617 = vmatprep.mubr.bf16.mxu0 0
        %1618 = vmatmul.mubr.bf16.gmra.mxu0 %v754
        %v1619 = vpop.f32.mrf.mxu0
        %v1620 = vadd.f32 0.0, %v1619
        %v1621 = vpop.f32.mrf.mxu0
        %v1622 = vpop.f32.mrf.mxu0
        %v1623 = vadd.f32 0.0, %v1622
        %v1624 = vpop.f32.mrf.mxu0
        %1625 = vdwg.mxu0
        %v1642 = vunpack.c.l.b16 %v867
        %v1643 = vunpack.c.l.b16 %v868
        %v1644 = vunpack.c.l.b16 %v869
        %v1645 = vunpack.c.l.b16 %v870
        %v1646 = vunpack.c.l.b16 %v871
        %v1647 = vunpack.c.l.b16 %v872
        %v1648 = vunpack.c.l.b16 %v873
        %v1649 = vunpack.c.l.b16 %v874
        %v1650 = vunpack.c.l.b16 %v875
        %v1651 = vunpack.c.l.b16 %v876
        %v1652 = vunpack.c.l.b16 %v877
        %v1653 = vunpack.c.l.b16 %v878
        %v1654 = vunpack.c.l.b16 %v879
        %v1655 = vunpack.c.l.b16 %v880
        %v1656 = vunpack.c.l.b16 %v881
        %v1657 = vunpack.c.l.b16 %v882
        %v1658 = vpack.c.b16 %v1643, %v1642
        %v1659 = vpack.c.b16 %v1645, %v1644
        %v1660 = vpack.c.b16 %v1647, %v1646
        %v1661 = vpack.c.b16 %v1649, %v1648
        %v1662 = vpack.c.b16 %v1651, %v1650
        %v1663 = vpack.c.b16 %v1653, %v1652
        %v1664 = vpack.c.b16 %v1655, %v1654
        %v1665 = vpack.c.b16 %v1657, %v1656
        %1674 = vmatprep.subr.bf16.mxu0 0
        %1675 = vmatpush1.bf16.msra.mxu0 %v1665
        %1676 = vmatprep.subr.bf16.mxu0 0
        %1677 = vmatpush1.bf16.msra.mxu0 %v1664
        %1678 = vmatprep.subr.bf16.mxu0 0
        %1679 = vmatpush1.bf16.msra.mxu0 %v1663
        %1680 = vmatprep.subr.bf16.mxu0 0
        %1681 = vmatpush1.bf16.msra.mxu0 %v1662
        %1682 = vmatprep.subr.bf16.mxu0 0
        %1683 = vmatpush1.bf16.msra.mxu0 %v1661
        %1684 = vmatprep.subr.bf16.mxu0 0
        %1685 = vmatpush1.bf16.msra.mxu0 %v1660
        %1686 = vmatprep.subr.bf16.mxu0 0
        %1687 = vmatpush1.bf16.msra.mxu0 %v1659
        %1688 = vmatprep.subr.bf16.mxu0 0
        %1689 = vmatpush1.bf16.msra.mxu0 %v1658
        %1690 = vmatprep.subr.bf16.mxu0 0
        %1691 = vmatpush2.bf16.msra.mxu0 0
        %1692 = vmatprep.subr.bf16.mxu0 0
        %1693 = vmatpush2.bf16.msra.mxu0 0
        %1694 = vmatprep.subr.bf16.mxu0 0
        %1695 = vmatpush2.bf16.msra.mxu0 0
        %1696 = vmatprep.subr.bf16.mxu0 0
        %1697 = vmatpush2.bf16.msra.mxu0 0
        %1698 = vmatprep.subr.bf16.mxu0 0
        %1699 = vmatpush2.bf16.msra.mxu0 0
        %1700 = vmatprep.subr.bf16.mxu0 0
        %1701 = vmatpush2.bf16.msra.mxu0 0
        %1702 = vmatprep.subr.bf16.mxu0 0
        %1703 = vmatpush2.bf16.msra.mxu0 0
        %1704 = vmatprep.subr.bf16.mxu0 0
        %1705 = vmatpush2.bf16.msra.mxu0 0
        %1706 = vmatprep.mubr.bf16.mxu0 0
        %1707 = vmatmul.mubr.bf16.gmra.mxu0 %v753
        %v1708 = vpop.f32.mrf.mxu0
        %v1709 = vadd.f32 0.0, %v1708
        %v1710 = vpop.f32.mrf.mxu0
        %v1711 = vpop.f32.mrf.mxu0
        %v1712 = vadd.f32 0.0, %v1711
        %v1713 = vpop.f32.mrf.mxu0
        %1714 = vmatprep.mubr.bf16.mxu0 0
        %1715 = vmatmul.mubr.bf16.gmra.mxu0 %v754
        %v1716 = vpop.f32.mrf.mxu0
        %v1717 = vadd.f32 0.0, %v1716
        %v1718 = vpop.f32.mrf.mxu0
        %v1719 = vpop.f32.mrf.mxu0
        %v1720 = vadd.f32 0.0, %v1719
        %v1721 = vpop.f32.mrf.mxu0
        %1722 = vdwg.mxu0
        %v1739 = vunpack.c.l.b16 %v883
        %v1740 = vunpack.c.l.b16 %v884
        %v1741 = vunpack.c.l.b16 %v885
        %v1742 = vunpack.c.l.b16 %v886
        %v1743 = vunpack.c.l.b16 %v887
        %v1744 = vunpack.c.l.b16 %v888
        %v1745 = vunpack.c.l.b16 %v889
        %v1746 = vunpack.c.l.b16 %v890
        %v1747 = vunpack.c.l.b16 %v891
        %v1748 = vunpack.c.l.b16 %v892
        %v1749 = vunpack.c.l.b16 %v893
        %v1750 = vunpack.c.l.b16 %v894
        %v1751 = vunpack.c.l.b16 %v895
        %v1752 = vunpack.c.l.b16 %v896
        %v1753 = vunpack.c.l.b16 %v897
        %v1754 = vunpack.c.l.b16 %v898
        %v1755 = vpack.c.b16 %v1740, %v1739
        %v1756 = vpack.c.b16 %v1742, %v1741
        %v1757 = vpack.c.b16 %v1744, %v1743
        %v1758 = vpack.c.b16 %v1746, %v1745
        %v1759 = vpack.c.b16 %v1748, %v1747
        %v1760 = vpack.c.b16 %v1750, %v1749
        %v1761 = vpack.c.b16 %v1752, %v1751
        %v1762 = vpack.c.b16 %v1754, %v1753
        %1771 = vmatprep.subr.bf16.mxu0 0
        %1772 = vmatpush1.bf16.msra.mxu0 %v1762
        %1773 = vmatprep.subr.bf16.mxu0 0
        %1774 = vmatpush1.bf16.msra.mxu0 %v1761
        %1775 = vmatprep.subr.bf16.mxu0 0
        %1776 = vmatpush1.bf16.msra.mxu0 %v1760
        %1777 = vmatprep.subr.bf16.mxu0 0
        %1778 = vmatpush1.bf16.msra.mxu0 %v1759
        %1779 = vmatprep.subr.bf16.mxu0 0
        %1780 = vmatpush1.bf16.msra.mxu0 %v1758
        %1781 = vmatprep.subr.bf16.mxu0 0
        %1782 = vmatpush1.bf16.msra.mxu0 %v1757
        %1783 = vmatprep.subr.bf16.mxu0 0
        %1784 = vmatpush1.bf16.msra.mxu0 %v1756
        %1785 = vmatprep.subr.bf16.mxu0 0
        %1786 = vmatpush1.bf16.msra.mxu0 %v1755
        %1787 = vmatprep.subr.bf16.mxu0 0
        %1788 = vmatpush2.bf16.msra.mxu0 0
        %1789 = vmatprep.subr.bf16.mxu0 0
        %1790 = vmatpush2.bf16.msra.mxu0 0
        %1791 = vmatprep.subr.bf16.mxu0 0
        %1792 = vmatpush2.bf16.msra.mxu0 0
        %1793 = vmatprep.subr.bf16.mxu0 0
        %1794 = vmatpush2.bf16.msra.mxu0 0
        %1795 = vmatprep.subr.bf16.mxu0 0
        %1796 = vmatpush2.bf16.msra.mxu0 0
        %1797 = vmatprep.subr.bf16.mxu0 0
        %1798 = vmatpush2.bf16.msra.mxu0 0
        %1799 = vmatprep.subr.bf16.mxu0 0
        %1800 = vmatpush2.bf16.msra.mxu0 0
        %1801 = vmatprep.subr.bf16.mxu0 0
        %1802 = vmatpush2.bf16.msra.mxu0 0
        %1803 = vmatprep.mubr.bf16.mxu0 0
        %1804 = vmatmul.mubr.bf16.gmra.mxu0 %v753
        %v1805 = vpop.f32.mrf.mxu0
        %v1806 = vadd.f32 0.0, %v1805
        %v1807 = vpop.f32.mrf.mxu0
        %v1808 = vpop.f32.mrf.mxu0
        %v1809 = vadd.f32 0.0, %v1808
        %v1810 = vpop.f32.mrf.mxu0
        %1811 = vmatprep.mubr.bf16.mxu0 0
        %1812 = vmatmul.mubr.bf16.gmra.mxu0 %v754
        %v1813 = vpop.f32.mrf.mxu0
        %v1814 = vadd.f32 0.0, %v1813
        %v1815 = vpop.f32.mrf.mxu0
        %v1816 = vpop.f32.mrf.mxu0
        %v1817 = vadd.f32 0.0, %v1816
        %v1818 = vpop.f32.mrf.mxu0
        %1819 = vdwg.mxu0
        %v1836 = vunpack.c.l.b16 %v899
        %v1837 = vunpack.c.l.b16 %v900
        %v1838 = vunpack.c.l.b16 %v901
        %v1839 = vunpack.c.l.b16 %v902
        %v1840 = vunpack.c.l.b16 %v903
        %v1841 = vunpack.c.l.b16 %v904
        %v1842 = vunpack.c.l.b16 %v905
        %v1843 = vunpack.c.l.b16 %v906
        %v1844 = vunpack.c.l.b16 %v907
        %v1845 = vunpack.c.l.b16 %v908
        %v1846 = vunpack.c.l.b16 %v909
        %v1847 = vunpack.c.l.b16 %v910
        %v1848 = vunpack.c.l.b16 %v911
        %v1849 = vunpack.c.l.b16 %v912
        %v1850 = vunpack.c.l.b16 %v913
        %v1851 = vunpack.c.l.b16 %v914
        %v1852 = vpack.c.b16 %v1837, %v1836
        %v1853 = vpack.c.b16 %v1839, %v1838
        %v1854 = vpack.c.b16 %v1841, %v1840
        %v1855 = vpack.c.b16 %v1843, %v1842
        %v1856 = vpack.c.b16 %v1845, %v1844
        %v1857 = vpack.c.b16 %v1847, %v1846
        %v1858 = vpack.c.b16 %v1849, %v1848
        %v1859 = vpack.c.b16 %v1851, %v1850
        %1868 = vmatprep.subr.bf16.mxu0 0
        %1869 = vmatpush1.bf16.msra.mxu0 %v1859
        %1870 = vmatprep.subr.bf16.mxu0 0
        %1871 = vmatpush1.bf16.msra.mxu0 %v1858
        %1872 = vmatprep.subr.bf16.mxu0 0
        %1873 = vmatpush1.bf16.msra.mxu0 %v1857
        %1874 = vmatprep.subr.bf16.mxu0 0
        %1875 = vmatpush1.bf16.msra.mxu0 %v1856
        %1876 = vmatprep.subr.bf16.mxu0 0
        %1877 = vmatpush1.bf16.msra.mxu0 %v1855
        %1878 = vmatprep.subr.bf16.mxu0 0
        %1879 = vmatpush1.bf16.msra.mxu0 %v1854
        %1880 = vmatprep.subr.bf16.mxu0 0
        %1881 = vmatpush1.bf16.msra.mxu0 %v1853
        %1882 = vmatprep.subr.bf16.mxu0 0
        %1883 = vmatpush1.bf16.msra.mxu0 %v1852
        %1884 = vmatprep.subr.bf16.mxu0 0
        %1885 = vmatpush2.bf16.msra.mxu0 0
        %1886 = vmatprep.subr.bf16.mxu0 0
        %1887 = vmatpush2.bf16.msra.mxu0 0
        %1888 = vmatprep.subr.bf16.mxu0 0
        %1889 = vmatpush2.bf16.msra.mxu0 0
        %1890 = vmatprep.subr.bf16.mxu0 0
        %1891 = vmatpush2.bf16.msra.mxu0 0
        %1892 = vmatprep.subr.bf16.mxu0 0
        %1893 = vmatpush2.bf16.msra.mxu0 0
        %1894 = vmatprep.subr.bf16.mxu0 0
        %1895 = vmatpush2.bf16.msra.mxu0 0
        %1896 = vmatprep.subr.bf16.mxu0 0
        %1897 = vmatpush2.bf16.msra.mxu0 0
        %1898 = vmatprep.subr.bf16.mxu0 0
        %1899 = vmatpush2.bf16.msra.mxu0 0
        %1900 = vmatprep.mubr.bf16.mxu0 0
        %1901 = vmatmul.mubr.bf16.gmra.mxu0 %v753
        %v1902 = vpop.f32.mrf.mxu0
        %v1903 = vadd.f32 0.0, %v1902
        %v1904 = vpop.f32.mrf.mxu0
        %v1905 = vpop.f32.mrf.mxu0
        %v1906 = vadd.f32 0.0, %v1905
        %v1907 = vpop.f32.mrf.mxu0
        %1908 = vmatprep.mubr.bf16.mxu0 0
        %1909 = vmatmul.mubr.bf16.gmra.mxu0 %v754
        %v1910 = vpop.f32.mrf.mxu0
        %v1911 = vadd.f32 0.0, %v1910
        %v1912 = vpop.f32.mrf.mxu0
        %v1913 = vpop.f32.mrf.mxu0
        %v1914 = vadd.f32 0.0, %v1913
        %v1915 = vpop.f32.mrf.mxu0
        %1916 = vdwg.mxu0
        %v1933 = vunpack.c.l.b16 %v915
        %v1934 = vunpack.c.l.b16 %v916
        %v1935 = vunpack.c.l.b16 %v917
        %v1936 = vunpack.c.l.b16 %v918
        %v1937 = vunpack.c.l.b16 %v919
        %v1938 = vunpack.c.l.b16 %v920
        %v1939 = vunpack.c.l.b16 %v921
        %v1940 = vunpack.c.l.b16 %v922
        %v1941 = vunpack.c.l.b16 %v923
        %v1942 = vunpack.c.l.b16 %v924
        %v1943 = vunpack.c.l.b16 %v925
        %v1944 = vunpack.c.l.b16 %v926
        %v1945 = vunpack.c.l.b16 %v927
        %v1946 = vunpack.c.l.b16 %v928
        %v1947 = vunpack.c.l.b16 %v929
        %v1948 = vunpack.c.l.b16 %v930
        %v1949 = vpack.c.b16 %v1934, %v1933
        %v1950 = vpack.c.b16 %v1936, %v1935
        %v1951 = vpack.c.b16 %v1938, %v1937
        %v1952 = vpack.c.b16 %v1940, %v1939
        %v1953 = vpack.c.b16 %v1942, %v1941
        %v1954 = vpack.c.b16 %v1944, %v1943
        %v1955 = vpack.c.b16 %v1946, %v1945
        %v1956 = vpack.c.b16 %v1948, %v1947
        %1965 = vmatprep.subr.bf16.mxu0 0
        %1966 = vmatpush1.bf16.msra.mxu0 %v1956
        %1967 = vmatprep.subr.bf16.mxu0 0
        %1968 = vmatpush1.bf16.msra.mxu0 %v1955
        %1969 = vmatprep.subr.bf16.mxu0 0
        %1970 = vmatpush1.bf16.msra.mxu0 %v1954
        %1971 = vmatprep.subr.bf16.mxu0 0
        %1972 = vmatpush1.bf16.msra.mxu0 %v1953
        %1973 = vmatprep.subr.bf16.mxu0 0
        %1974 = vmatpush1.bf16.msra.mxu0 %v1952
        %1975 = vmatprep.subr.bf16.mxu0 0
        %1976 = vmatpush1.bf16.msra.mxu0 %v1951
        %1977 = vmatprep.subr.bf16.mxu0 0
        %1978 = vmatpush1.bf16.msra.mxu0 %v1950
        %1979 = vmatprep.subr.bf16.mxu0 0
        %1980 = vmatpush1.bf16.msra.mxu0 %v1949
        %1981 = vmatprep.subr.bf16.mxu0 0
        %1982 = vmatpush2.bf16.msra.mxu0 0
        %1983 = vmatprep.subr.bf16.mxu0 0
        %1984 = vmatpush2.bf16.msra.mxu0 0
        %1985 = vmatprep.subr.bf16.mxu0 0
        %1986 = vmatpush2.bf16.msra.mxu0 0
        %1987 = vmatprep.subr.bf16.mxu0 0
        %1988 = vmatpush2.bf16.msra.mxu0 0
        %1989 = vmatprep.subr.bf16.mxu0 0
        %1990 = vmatpush2.bf16.msra.mxu0 0
        %1991 = vmatprep.subr.bf16.mxu0 0
        %1992 = vmatpush2.bf16.msra.mxu0 0
        %1993 = vmatprep.subr.bf16.mxu0 0
        %1994 = vmatpush2.bf16.msra.mxu0 0
        %1995 = vmatprep.subr.bf16.mxu0 0
        %1996 = vmatpush2.bf16.msra.mxu0 0
        %1997 = vmatprep.mubr.bf16.mxu0 0
        %1998 = vmatmul.mubr.bf16.gmra.mxu0 %v753
        %v1999 = vpop.f32.mrf.mxu0
        %v2000 = vadd.f32 0.0, %v1999
        %v2001 = vpop.f32.mrf.mxu0
        %v2002 = vpop.f32.mrf.mxu0
        %v2003 = vadd.f32 0.0, %v2002
        %v2004 = vpop.f32.mrf.mxu0
        %2005 = vmatprep.mubr.bf16.mxu0 0
        %2006 = vmatmul.mubr.bf16.gmra.mxu0 %v754
        %v2007 = vpop.f32.mrf.mxu0
        %v2008 = vadd.f32 0.0, %v2007
        %v2009 = vpop.f32.mrf.mxu0
        %v2010 = vpop.f32.mrf.mxu0
        %v2011 = vadd.f32 0.0, %v2010
        %v2012 = vpop.f32.mrf.mxu0
        %2013 = vdwg.mxu0
        %v2030 = vunpack.c.l.b16 %v931
        %v2031 = vunpack.c.l.b16 %v932
        %v2032 = vunpack.c.l.b16 %v933
        %v2033 = vunpack.c.l.b16 %v934
        %v2034 = vunpack.c.l.b16 %v935
        %v2035 = vunpack.c.l.b16 %v936
        %v2036 = vunpack.c.l.b16 %v937
        %v2037 = vunpack.c.l.b16 %v938
        %v2038 = vunpack.c.l.b16 %v939
        %v2039 = vunpack.c.l.b16 %v940
        %v2040 = vunpack.c.l.b16 %v941
        %v2041 = vunpack.c.l.b16 %v942
        %v2042 = vunpack.c.l.b16 %v943
        %v2043 = vunpack.c.l.b16 %v944
        %v2044 = vunpack.c.l.b16 %v945
        %v2045 = vunpack.c.l.b16 %v946
        %v2046 = vpack.c.b16 %v2031, %v2030
        %v2047 = vpack.c.b16 %v2033, %v2032
        %v2048 = vpack.c.b16 %v2035, %v2034
        %v2049 = vpack.c.b16 %v2037, %v2036
        %v2050 = vpack.c.b16 %v2039, %v2038
        %v2051 = vpack.c.b16 %v2041, %v2040
        %v2052 = vpack.c.b16 %v2043, %v2042
        %v2053 = vpack.c.b16 %v2045, %v2044
        %2062 = vmatprep.subr.bf16.mxu0 0
        %2063 = vmatpush1.bf16.msra.mxu0 %v2053
        %2064 = vmatprep.subr.bf16.mxu0 0
        %2065 = vmatpush1.bf16.msra.mxu0 %v2052
        %2066 = vmatprep.subr.bf16.mxu0 0
        %2067 = vmatpush1.bf16.msra.mxu0 %v2051
        %2068 = vmatprep.subr.bf16.mxu0 0
        %2069 = vmatpush1.bf16.msra.mxu0 %v2050
        %2070 = vmatprep.subr.bf16.mxu0 0
        %2071 = vmatpush1.bf16.msra.mxu0 %v2049
        %2072 = vmatprep.subr.bf16.mxu0 0
        %2073 = vmatpush1.bf16.msra.mxu0 %v2048
        %2074 = vmatprep.subr.bf16.mxu0 0
        %2075 = vmatpush1.bf16.msra.mxu0 %v2047
        %2076 = vmatprep.subr.bf16.mxu0 0
        %2077 = vmatpush1.bf16.msra.mxu0 %v2046
        %2078 = vmatprep.subr.bf16.mxu0 0
        %2079 = vmatpush2.bf16.msra.mxu0 0
        %2080 = vmatprep.subr.bf16.mxu0 0
        %2081 = vmatpush2.bf16.msra.mxu0 0
        %2082 = vmatprep.subr.bf16.mxu0 0
        %2083 = vmatpush2.bf16.msra.mxu0 0
        %2084 = vmatprep.subr.bf16.mxu0 0
        %2085 = vmatpush2.bf16.msra.mxu0 0
        %2086 = vmatprep.subr.bf16.mxu0 0
        %2087 = vmatpush2.bf16.msra.mxu0 0
        %2088 = vmatprep.subr.bf16.mxu0 0
        %2089 = vmatpush2.bf16.msra.mxu0 0
        %2090 = vmatprep.subr.bf16.mxu0 0
        %2091 = vmatpush2.bf16.msra.mxu0 0
        %2092 = vmatprep.subr.bf16.mxu0 0
        %2093 = vmatpush2.bf16.msra.mxu0 0
        %2094 = vmatprep.mubr.bf16.mxu0 0
        %2095 = vmatmul.mubr.bf16.gmra.mxu0 %v753
        %v2096 = vpop.f32.mrf.mxu0
        %v2097 = vadd.f32 0.0, %v2096
        %v2098 = vpop.f32.mrf.mxu0
        %v2099 = vpop.f32.mrf.mxu0
        %v2100 = vadd.f32 0.0, %v2099
        %v2101 = vpop.f32.mrf.mxu0
        %2102 = vmatprep.mubr.bf16.mxu0 0
        %2103 = vmatmul.mubr.bf16.gmra.mxu0 %v754
        %v2104 = vpop.f32.mrf.mxu0
        %v2105 = vadd.f32 0.0, %v2104
        %v2106 = vpop.f32.mrf.mxu0
        %v2107 = vpop.f32.mrf.mxu0
        %v2108 = vadd.f32 0.0, %v2107
        %v2109 = vpop.f32.mrf.mxu0
        %2110 = vdwg.mxu0
        %v2111 = vlaneseq
        %v2112 = vshrl.u32 %v2111, 7
        %v2113 = vadd.s32 %v2112, 8
        %v2114 = vlaneseq
        %v2115 = vand.u32 %v2114, 127
        %vm2116 = vcmp.ge.s32.totalorder %v2112, %v2115
        %vm2117 = vcmp.ge.s32.totalorder %v2113, %v2115
        %v2118 = vld [vmem:[%s642] sm:$0xf]
        %v2119 = vld [vmem:[%s642 + $0x4] sm:$0xf]
        %v2120 = vld [vmem:[%s642 + $0x8] sm:$0xf]
        %v2121 = vld [vmem:[%s642 + $0xc] sm:$0xf]
        %v2122 = vld [vmem:[%s642 + $0x10] sm:$0xf]
        %v2123 = vld [vmem:[%s642 + $0x14] sm:$0xf]
        %v2124 = vld [vmem:[%s642 + $0x18] sm:$0xf]
        %v2125 = vld [vmem:[%s642 + $0x1c] sm:$0xf]
        %v2126 = vld [vmem:[%s642 + $0x20] sm:$0xf]
        %v2127 = vld [vmem:[%s642 + $0x24] sm:$0xf]
        %v2128 = vld [vmem:[%s642 + $0x28] sm:$0xf]
        %v2129 = vld [vmem:[%s642 + $0x2c] sm:$0xf]
        %v2130 = vld [vmem:[%s642 + $0x30] sm:$0xf]
        %v2131 = vld [vmem:[%s642 + $0x34] sm:$0xf]
        %v2132 = vld [vmem:[%s642 + $0x38] sm:$0xf]
        %v2133 = vld [vmem:[%s642 + $0x3c] sm:$0xf]
        %v2134 = vpack.c.bf16 %v1033, %v1030
        %v2135 = vpack.c.bf16 %v1130, %v1127
        %v2136 = vpack.c.bf16 %v1227, %v1224
        %v2137 = vpack.c.bf16 %v1324, %v1321
        %v2138 = vpack.c.bf16 %v1421, %v1418
        %v2139 = vpack.c.bf16 %v1518, %v1515
        %v2140 = vpack.c.bf16 %v1615, %v1612
        %v2141 = vpack.c.bf16 %v1712, %v1709
        %v2142 = vpack.c.bf16 %v1809, %v1806
        %v2143 = vpack.c.bf16 %v1906, %v1903
        %v2144 = vpack.c.bf16 %v2003, %v2000
        %v2145 = vpack.c.bf16 %v2100, %v2097
        %vm2146 = vcmask 261120
        %v2148 = vsel %vm2146, %v2134, 0
        %v2151 = vsel %vm2146, %v2138, 0
        %2153 = vmatprep.subr.bf16.mxu0 0
        %2154 = vmatpush1.bf16.xpose.msra.mxu0 0
        %2155 = vmatprep.subr.bf16.mxu0 0
        %2156 = vmatpush1.bf16.xpose.msra.mxu0 0
        %2157 = vmatprep.subr.bf16.mxu0 0
        %2158 = vmatpush1.bf16.xpose.msra.mxu0 0
        %2159 = vmatprep.subr.bf16.mxu0 0
        %2160 = vmatpush1.bf16.xpose.msra.mxu0 0
        %2161 = vmatprep.subr.bf16.mxu0 0
        %2162 = vmatpush1.bf16.xpose.msra.mxu0 0
        %2163 = vmatprep.subr.bf16.mxu0 0
        %2164 = vmatpush1.bf16.xpose.msra.mxu0 0
        %2165 = vmatprep.subr.bf16.mxu0 0
        %2166 = vmatpush1.bf16.xpose.msra.mxu0 0
        %2167 = vmatprep.subr.bf16.mxu0 0
        %2168 = vmatpush1.bf16.xpose.msra.mxu0 %v2151
        %2169 = vmatprep.subr.bf16.mxu0 0
        %2170 = vmatpush2.bf16.xpose.msra.mxu0 0
        %2171 = vmatprep.subr.bf16.mxu0 0
        %2172 = vmatpush2.bf16.xpose.msra.mxu0 0
        %2173 = vmatprep.subr.bf16.mxu0 0
        %2174 = vmatpush2.bf16.xpose.msra.mxu0 0
        %2175 = vmatprep.subr.bf16.mxu0 0
        %2176 = vmatpush2.bf16.xpose.msra.mxu0 0
        %2177 = vmatprep.subr.bf16.mxu0 0
        %2178 = vmatpush2.bf16.xpose.msra.mxu0 0
        %2179 = vmatprep.subr.bf16.mxu0 0
        %2180 = vmatpush2.bf16.xpose.msra.mxu0 0
        %2181 = vmatprep.subr.bf16.mxu0 0
        %2182 = vmatpush2.bf16.xpose.msra.mxu0 0
        %2183 = vmatprep.subr.bf16.mxu0 0
        %2184 = vmatpush2.bf16.xpose.msra.mxu0 0
        %2185 = vmatprep.mubr.bf16.mxu0 0
        %2186 = vmatmul.mubr.bf16.gmra.mxu0 %v2148
        %v2187 = vpop.f32.mrf.mxu0
        %v2188 = vadd.f32 0.0, %v2187
        %v2189 = vpop.f32.mrf.mxu0
        %v2190 = vpop.f32.mrf.mxu0
        %v2191 = vadd.f32 0.0, %v2190
        %v2192 = vpop.f32.mrf.mxu0
        %2193 = vdwg.mxu0
        %v2195 = vsel %vm2146, %v2135, 0
        %v2198 = vsel %vm2146, %v2139, 0
        %2200 = vmatprep.subr.bf16.mxu0 0
        %2201 = vmatpush1.bf16.xpose.msra.mxu0 0
        %2202 = vmatprep.subr.bf16.mxu0 0
        %2203 = vmatpush1.bf16.xpose.msra.mxu0 0
        %2204 = vmatprep.subr.bf16.mxu0 0
        %2205 = vmatpush1.bf16.xpose.msra.mxu0 0
        %2206 = vmatprep.subr.bf16.mxu0 0
        %2207 = vmatpush1.bf16.xpose.msra.mxu0 0
        %2208 = vmatprep.subr.bf16.mxu0 0
        %2209 = vmatpush1.bf16.xpose.msra.mxu0 0
        %2210 = vmatprep.subr.bf16.mxu0 0
        %2211 = vmatpush1.bf16.xpose.msra.mxu0 0
        %2212 = vmatprep.subr.bf16.mxu0 0
        %2213 = vmatpush1.bf16.xpose.msra.mxu0 0
        %2214 = vmatprep.subr.bf16.mxu0 0
        %2215 = vmatpush1.bf16.xpose.msra.mxu0 %v2198
        %2216 = vmatprep.subr.bf16.mxu0 0
        %2217 = vmatpush2.bf16.xpose.msra.mxu0 0
        %2218 = vmatprep.subr.bf16.mxu0 0
        %2219 = vmatpush2.bf16.xpose.msra.mxu0 0
        %2220 = vmatprep.subr.bf16.mxu0 0
        %2221 = vmatpush2.bf16.xpose.msra.mxu0 0
        %2222 = vmatprep.subr.bf16.mxu0 0
        %2223 = vmatpush2.bf16.xpose.msra.mxu0 0
        %2224 = vmatprep.subr.bf16.mxu0 0
        %2225 = vmatpush2.bf16.xpose.msra.mxu0 0
        %2226 = vmatprep.subr.bf16.mxu0 0
        %2227 = vmatpush2.bf16.xpose.msra.mxu0 0
        %2228 = vmatprep.subr.bf16.mxu0 0
        %2229 = vmatpush2.bf16.xpose.msra.mxu0 0
        %2230 = vmatprep.subr.bf16.mxu0 0
        %2231 = vmatpush2.bf16.xpose.msra.mxu0 0
        %2232 = vmatprep.mubr.bf16.mxu0 0
        %2233 = vmatmul.mubr.bf16.gmra.mxu0 %v2195
        %v2234 = vpop.f32.mrf.mxu0
        %v2235 = vadd.f32 0.0, %v2234
        %v2236 = vpop.f32.mrf.mxu0
        %v2237 = vpop.f32.mrf.mxu0
        %v2238 = vadd.f32 0.0, %v2237
        %v2239 = vpop.f32.mrf.mxu0
        %2240 = vdwg.mxu0
        %v2242 = vsel %vm2146, %v2136, 0
        %v2245 = vsel %vm2146, %v2140, 0
        %2247 = vmatprep.subr.bf16.mxu0 0
        %2248 = vmatpush1.bf16.xpose.msra.mxu0 0
        %2249 = vmatprep.subr.bf16.mxu0 0
        %2250 = vmatpush1.bf16.xpose.msra.mxu0 0
        %2251 = vmatprep.subr.bf16.mxu0 0
        %2252 = vmatpush1.bf16.xpose.msra.mxu0 0
        %2253 = vmatprep.subr.bf16.mxu0 0
        %2254 = vmatpush1.bf16.xpose.msra.mxu0 0
        %2255 = vmatprep.subr.bf16.mxu0 0
        %2256 = vmatpush1.bf16.xpose.msra.mxu0 0
        %2257 = vmatprep.subr.bf16.mxu0 0
        %2258 = vmatpush1.bf16.xpose.msra.mxu0 0
        %2259 = vmatprep.subr.bf16.mxu0 0
        %2260 = vmatpush1.bf16.xpose.msra.mxu0 0
        %2261 = vmatprep.subr.bf16.mxu0 0
        %2262 = vmatpush1.bf16.xpose.msra.mxu0 %v2245
        %2263 = vmatprep.subr.bf16.mxu0 0
        %2264 = vmatpush2.bf16.xpose.msra.mxu0 0
        %2265 = vmatprep.subr.bf16.mxu0 0
        %2266 = vmatpush2.bf16.xpose.msra.mxu0 0
        %2267 = vmatprep.subr.bf16.mxu0 0
        %2268 = vmatpush2.bf16.xpose.msra.mxu0 0
        %2269 = vmatprep.subr.bf16.mxu0 0
        %2270 = vmatpush2.bf16.xpose.msra.mxu0 0
        %2271 = vmatprep.subr.bf16.mxu0 0
        %2272 = vmatpush2.bf16.xpose.msra.mxu0 0
        %2273 = vmatprep.subr.bf16.mxu0 0
        %2274 = vmatpush2.bf16.xpose.msra.mxu0 0
        %2275 = vmatprep.subr.bf16.mxu0 0
        %2276 = vmatpush2.bf16.xpose.msra.mxu0 0
        %2277 = vmatprep.subr.bf16.mxu0 0
        %2278 = vmatpush2.bf16.xpose.msra.mxu0 0
        %2279 = vmatprep.mubr.bf16.mxu0 0
        %2280 = vmatmul.mubr.bf16.gmra.mxu0 %v2242
        %v2281 = vpop.f32.mrf.mxu0
        %v2282 = vadd.f32 0.0, %v2281
        %v2283 = vpop.f32.mrf.mxu0
        %v2284 = vpop.f32.mrf.mxu0
        %v2285 = vadd.f32 0.0, %v2284
        %v2286 = vpop.f32.mrf.mxu0
        %2287 = vdwg.mxu0
        %v2289 = vsel %vm2146, %v2137, 0
        %v2292 = vsel %vm2146, %v2141, 0
        %2294 = vmatprep.subr.bf16.mxu0 0
        %2295 = vmatpush1.bf16.xpose.msra.mxu0 0
        %2296 = vmatprep.subr.bf16.mxu0 0
        %2297 = vmatpush1.bf16.xpose.msra.mxu0 0
        %2298 = vmatprep.subr.bf16.mxu0 0
        %2299 = vmatpush1.bf16.xpose.msra.mxu0 0
        %2300 = vmatprep.subr.bf16.mxu0 0
        %2301 = vmatpush1.bf16.xpose.msra.mxu0 0
        %2302 = vmatprep.subr.bf16.mxu0 0
        %2303 = vmatpush1.bf16.xpose.msra.mxu0 0
        %2304 = vmatprep.subr.bf16.mxu0 0
        %2305 = vmatpush1.bf16.xpose.msra.mxu0 0
        %2306 = vmatprep.subr.bf16.mxu0 0
        %2307 = vmatpush1.bf16.xpose.msra.mxu0 0
        %2308 = vmatprep.subr.bf16.mxu0 0
        %2309 = vmatpush1.bf16.xpose.msra.mxu0 %v2292
        %2310 = vmatprep.subr.bf16.mxu0 0
        %2311 = vmatpush2.bf16.xpose.msra.mxu0 0
        %2312 = vmatprep.subr.bf16.mxu0 0
        %2313 = vmatpush2.bf16.xpose.msra.mxu0 0
        %2314 = vmatprep.subr.bf16.mxu0 0
        %2315 = vmatpush2.bf16.xpose.msra.mxu0 0
        %2316 = vmatprep.subr.bf16.mxu0 0
        %2317 = vmatpush2.bf16.xpose.msra.mxu0 0
        %2318 = vmatprep.subr.bf16.mxu0 0
        %2319 = vmatpush2.bf16.xpose.msra.mxu0 0
        %2320 = vmatprep.subr.bf16.mxu0 0
        %2321 = vmatpush2.bf16.xpose.msra.mxu0 0
        %2322 = vmatprep.subr.bf16.mxu0 0
        %2323 = vmatpush2.bf16.xpose.msra.mxu0 0
        %2324 = vmatprep.subr.bf16.mxu0 0
        %2325 = vmatpush2.bf16.xpose.msra.mxu0 0
        %2326 = vmatprep.mubr.bf16.mxu0 0
        %2327 = vmatmul.mubr.bf16.gmra.mxu0 %v2289
        %v2328 = vpop.f32.mrf.mxu0
        %v2329 = vadd.f32 0.0, %v2328
        %v2330 = vpop.f32.mrf.mxu0
        %v2331 = vpop.f32.mrf.mxu0
        %v2332 = vadd.f32 0.0, %v2331
        %v2333 = vpop.f32.mrf.mxu0
        %2334 = vdwg.mxu0
        %v2335 = vsel %vm2116, 1, 0
        %v2336 = vsel %vm2117, 1, 0
        %vm2337 = vcmp.eq.s32.totalorder %v2335, 1
        %vm2338 = vcmp.eq.s32.totalorder %v2336, 1
        %v2339 = vsel %vm2337, %v2188, -1e+30
        %v2340 = vsel %vm2338, %v2191, -1e+30
        %v2341 = vsel %vm2337, %v2235, -1e+30
        %v2342 = vsel %vm2338, %v2238, -1e+30
        %v2343 = vsel %vm2337, %v2282, -1e+30
        %v2344 = vsel %vm2338, %v2285, -1e+30
        %v2345 = vsel %vm2337, %v2329, -1e+30
        %v2346 = vsel %vm2338, %v2332, -1e+30
        %vm2347 = vcmask 130048
        %v2348 = vsel %vm2347, %v2339, -inf
        %2349 = vmax.xlane.f32.xlu0 %v2348
        %v2350 = vpop.xlane.xlu0 %2349
        %v2351 = vsel %vm2347, %v2340, -inf
        %2352 = vmax.xlane.f32.xlu0 %v2351
        %v2353 = vpop.xlane.xlu0 %2352
        %v2354 = vsel %vm2347, %v2341, -inf
        %2355 = vmax.xlane.f32.xlu0 %v2354
        %v2356 = vpop.xlane.xlu0 %2355
        %v2357 = vsel %vm2347, %v2342, -inf
        %2358 = vmax.xlane.f32.xlu0 %v2357
        %v2359 = vpop.xlane.xlu0 %2358
        %v2360 = vsel %vm2347, %v2343, -inf
        %2361 = vmax.xlane.f32.xlu0 %v2360
        %v2362 = vpop.xlane.xlu0 %2361
        %v2363 = vsel %vm2347, %v2344, -inf
        %2364 = vmax.xlane.f32.xlu0 %v2363
        %v2365 = vpop.xlane.xlu0 %2364
        %v2366 = vsel %vm2347, %v2345, -inf
        %2367 = vmax.xlane.f32.xlu0 %v2366
        %v2368 = vpop.xlane.xlu0 %2367
        %v2369 = vsel %vm2347, %v2346, -inf
        %2370 = vmax.xlane.f32.xlu0 %v2369
        %v2371 = vpop.xlane.xlu0 %2370
        %v2372 = vsub.f32 %v2339, %v2350
        %v2373 = vsub.f32 %v2340, %v2353
        %v2374 = vsub.f32 %v2341, %v2356
        %v2375 = vsub.f32 %v2342, %v2359
        %v2376 = vsub.f32 %v2343, %v2362
        %v2377 = vsub.f32 %v2344, %v2365
        %v2378 = vsub.f32 %v2345, %v2368
        %v2379 = vsub.f32 %v2346, %v2371
        %v2380 = vmul.f32 %v2372, 1.442695
        %v2381 = vpow.pop %v2380
        %v2382 = vmul.f32 %v2373, 1.442695
        %v2383 = vpow.pop %v2382
        %v2384 = vmul.f32 %v2374, 1.442695
        %v2385 = vpow.pop %v2384
        %v2386 = vmul.f32 %v2375, 1.442695
        %v2387 = vpow.pop %v2386
        %v2388 = vmul.f32 %v2376, 1.442695
        %v2389 = vpow.pop %v2388
        %v2390 = vmul.f32 %v2377, 1.442695
        %v2391 = vpow.pop %v2390
        %v2392 = vmul.f32 %v2378, 1.442695
        %v2393 = vpow.pop %v2392
        %v2394 = vmul.f32 %v2379, 1.442695
        %v2395 = vpow.pop %v2394
        %v2396 = vsel %vm2347, %v2381, 0.0
        %2397 = vadd.xlane.f32.xlu0 %v2396
        %v2398 = vpop.xlane.xlu0 %2397
        %v2399 = vsel %vm2347, %v2383, 0.0
        %2400 = vadd.xlane.f32.xlu0 %v2399
        %v2401 = vpop.xlane.xlu0 %2400
        %v2402 = vsel %vm2347, %v2385, 0.0
        %2403 = vadd.xlane.f32.xlu0 %v2402
        %v2404 = vpop.xlane.xlu0 %2403
        %v2405 = vsel %vm2347, %v2387, 0.0
        %2406 = vadd.xlane.f32.xlu0 %v2405
        %v2407 = vpop.xlane.xlu0 %2406
        %v2408 = vsel %vm2347, %v2389, 0.0
        %2409 = vadd.xlane.f32.xlu0 %v2408
        %v2410 = vpop.xlane.xlu0 %2409
        %v2411 = vsel %vm2347, %v2391, 0.0
        %2412 = vadd.xlane.f32.xlu0 %v2411
        %v2413 = vpop.xlane.xlu0 %2412
        %v2414 = vsel %vm2347, %v2393, 0.0
        %2415 = vadd.xlane.f32.xlu0 %v2414
        %v2416 = vpop.xlane.xlu0 %2415
        %v2417 = vsel %vm2347, %v2395, 0.0
        %2418 = vadd.xlane.f32.xlu0 %v2417
        %v2419 = vpop.xlane.xlu0 %2418
        %v2420 = vrcp.pop %v2398
        %v2421 = vrcp.pop %v2401
        %v2422 = vrcp.pop %v2404
        %v2423 = vrcp.pop %v2407
        %v2424 = vrcp.pop %v2410
        %v2425 = vrcp.pop %v2413
        %v2426 = vrcp.pop %v2416
        %v2427 = vrcp.pop %v2419
        %v2428 = vmul.f32 %v2381, %v2420
        %v2429 = vmul.f32 %v2383, %v2421
        %v2430 = vmul.f32 %v2385, %v2422
        %v2431 = vmul.f32 %v2387, %v2423
        %v2432 = vmul.f32 %v2389, %v2424
        %v2433 = vmul.f32 %v2391, %v2425
        %v2434 = vmul.f32 %v2393, %v2426
        %v2435 = vmul.f32 %v2395, %v2427
        %v2436 = vpack.c.bf16 %v2429, %v2428
        %v2437 = vpack.c.bf16 %v2431, %v2430
        %v2438 = vpack.c.bf16 %v2433, %v2432
        %v2439 = vpack.c.bf16 %v2435, %v2434
        %v2441 = vsel %vm2347, %v2436, 0
        %2443 = vmatprep.subr.bf16.mxu0 0
        %2444 = vmatpush1.bf16.msra.mxu0 0
        %2445 = vmatprep.subr.bf16.mxu0 0
        %2446 = vmatpush1.bf16.msra.mxu0 0
        %2447 = vmatprep.subr.bf16.mxu0 0
        %2448 = vmatpush1.bf16.msra.mxu0 0
        %2449 = vmatprep.subr.bf16.mxu0 0
        %2450 = vmatpush1.bf16.msra.mxu0 0
        %2451 = vmatprep.subr.bf16.mxu0 0
        %2452 = vmatpush1.bf16.msra.mxu0 0
        %2453 = vmatprep.subr.bf16.mxu0 0
        %2454 = vmatpush1.bf16.msra.mxu0 0
        %2455 = vmatprep.subr.bf16.mxu0 0
        %2456 = vmatpush1.bf16.msra.mxu0 0
        %2457 = vmatprep.subr.bf16.mxu0 0
        %2458 = vmatpush1.bf16.msra.mxu0 %v2142
        %2459 = vmatprep.subr.bf16.mxu0 0
        %2460 = vmatpush2.bf16.msra.mxu0 0
        %2461 = vmatprep.subr.bf16.mxu0 0
        %2462 = vmatpush2.bf16.msra.mxu0 0
        %2463 = vmatprep.subr.bf16.mxu0 0
        %2464 = vmatpush2.bf16.msra.mxu0 0
        %2465 = vmatprep.subr.bf16.mxu0 0
        %2466 = vmatpush2.bf16.msra.mxu0 0
        %2467 = vmatprep.subr.bf16.mxu0 0
        %2468 = vmatpush2.bf16.msra.mxu0 0
        %2469 = vmatprep.subr.bf16.mxu0 0
        %2470 = vmatpush2.bf16.msra.mxu0 0
        %2471 = vmatprep.subr.bf16.mxu0 0
        %2472 = vmatpush2.bf16.msra.mxu0 0
        %2473 = vmatprep.subr.bf16.mxu0 0
        %2474 = vmatpush2.bf16.msra.mxu0 0
        %2475 = vmatprep.mubr.bf16.mxu0 0
        %2476 = vmatmul.mubr.bf16.gmra.mxu0 %v2441
        %v2477 = vpop.f32.mrf.mxu0
        %v2478 = vadd.f32 0.0, %v2477
        %v2479 = vpop.f32.mrf.mxu0
        %v2480 = vpop.f32.mrf.mxu0
        %v2481 = vadd.f32 0.0, %v2480
        %v2482 = vpop.f32.mrf.mxu0
        %2483 = vdwg.mxu0
        %v2485 = vsel %vm2347, %v2437, 0
        %2487 = vmatprep.subr.bf16.mxu0 0
        %2488 = vmatpush1.bf16.msra.mxu0 0
        %2489 = vmatprep.subr.bf16.mxu0 0
        %2490 = vmatpush1.bf16.msra.mxu0 0
        %2491 = vmatprep.subr.bf16.mxu0 0
        %2492 = vmatpush1.bf16.msra.mxu0 0
        %2493 = vmatprep.subr.bf16.mxu0 0
        %2494 = vmatpush1.bf16.msra.mxu0 0
        %2495 = vmatprep.subr.bf16.mxu0 0
        %2496 = vmatpush1.bf16.msra.mxu0 0
        %2497 = vmatprep.subr.bf16.mxu0 0
        %2498 = vmatpush1.bf16.msra.mxu0 0
        %2499 = vmatprep.subr.bf16.mxu0 0
        %2500 = vmatpush1.bf16.msra.mxu0 0
        %2501 = vmatprep.subr.bf16.mxu0 0
        %2502 = vmatpush1.bf16.msra.mxu0 %v2143
        %2503 = vmatprep.subr.bf16.mxu0 0
        %2504 = vmatpush2.bf16.msra.mxu0 0
        %2505 = vmatprep.subr.bf16.mxu0 0
        %2506 = vmatpush2.bf16.msra.mxu0 0
        %2507 = vmatprep.subr.bf16.mxu0 0
        %2508 = vmatpush2.bf16.msra.mxu0 0
        %2509 = vmatprep.subr.bf16.mxu0 0
        %2510 = vmatpush2.bf16.msra.mxu0 0
        %2511 = vmatprep.subr.bf16.mxu0 0
        %2512 = vmatpush2.bf16.msra.mxu0 0
        %2513 = vmatprep.subr.bf16.mxu0 0
        %2514 = vmatpush2.bf16.msra.mxu0 0
        %2515 = vmatprep.subr.bf16.mxu0 0
        %2516 = vmatpush2.bf16.msra.mxu0 0
        %2517 = vmatprep.subr.bf16.mxu0 0
        %2518 = vmatpush2.bf16.msra.mxu0 0
        %2519 = vmatprep.mubr.bf16.mxu0 0
        %2520 = vmatmul.mubr.bf16.gmra.mxu0 %v2485
        %v2521 = vpop.f32.mrf.mxu0
        %v2522 = vadd.f32 0.0, %v2521
        %v2523 = vpop.f32.mrf.mxu0
        %v2524 = vpop.f32.mrf.mxu0
        %v2525 = vadd.f32 0.0, %v2524
        %v2526 = vpop.f32.mrf.mxu0
        %2527 = vdwg.mxu0
        %v2529 = vsel %vm2347, %v2438, 0
        %2531 = vmatprep.subr.bf16.mxu0 0
        %2532 = vmatpush1.bf16.msra.mxu0 0
        %2533 = vmatprep.subr.bf16.mxu0 0
        %2534 = vmatpush1.bf16.msra.mxu0 0
        %2535 = vmatprep.subr.bf16.mxu0 0
        %2536 = vmatpush1.bf16.msra.mxu0 0
        %2537 = vmatprep.subr.bf16.mxu0 0
        %2538 = vmatpush1.bf16.msra.mxu0 0
        %2539 = vmatprep.subr.bf16.mxu0 0
        %2540 = vmatpush1.bf16.msra.mxu0 0
        %2541 = vmatprep.subr.bf16.mxu0 0
        %2542 = vmatpush1.bf16.msra.mxu0 0
        %2543 = vmatprep.subr.bf16.mxu0 0
        %2544 = vmatpush1.bf16.msra.mxu0 0
        %2545 = vmatprep.subr.bf16.mxu0 0
        %2546 = vmatpush1.bf16.msra.mxu0 %v2144
        %2547 = vmatprep.subr.bf16.mxu0 0
        %2548 = vmatpush2.bf16.msra.mxu0 0
        %2549 = vmatprep.subr.bf16.mxu0 0
        %2550 = vmatpush2.bf16.msra.mxu0 0
        %2551 = vmatprep.subr.bf16.mxu0 0
        %2552 = vmatpush2.bf16.msra.mxu0 0
        %2553 = vmatprep.subr.bf16.mxu0 0
        %2554 = vmatpush2.bf16.msra.mxu0 0
        %2555 = vmatprep.subr.bf16.mxu0 0
        %2556 = vmatpush2.bf16.msra.mxu0 0
        %2557 = vmatprep.subr.bf16.mxu0 0
        %2558 = vmatpush2.bf16.msra.mxu0 0
        %2559 = vmatprep.subr.bf16.mxu0 0
        %2560 = vmatpush2.bf16.msra.mxu0 0
        %2561 = vmatprep.subr.bf16.mxu0 0
        %2562 = vmatpush2.bf16.msra.mxu0 0
        %2563 = vmatprep.mubr.bf16.mxu0 0
        %2564 = vmatmul.mubr.bf16.gmra.mxu0 %v2529
        %v2565 = vpop.f32.mrf.mxu0
        %v2566 = vadd.f32 0.0, %v2565
        %v2567 = vpop.f32.mrf.mxu0
        %v2568 = vpop.f32.mrf.mxu0
        %v2569 = vadd.f32 0.0, %v2568
        %v2570 = vpop.f32.mrf.mxu0
        %2571 = vdwg.mxu0
        %v2573 = vsel %vm2347, %v2439, 0
        %2575 = vmatprep.subr.bf16.mxu0 0
        %2576 = vmatpush1.bf16.msra.mxu0 0
        %2577 = vmatprep.subr.bf16.mxu0 0
        %2578 = vmatpush1.bf16.msra.mxu0 0
        %2579 = vmatprep.subr.bf16.mxu0 0
        %2580 = vmatpush1.bf16.msra.mxu0 0
        %2581 = vmatprep.subr.bf16.mxu0 0
        %2582 = vmatpush1.bf16.msra.mxu0 0
        %2583 = vmatprep.subr.bf16.mxu0 0
        %2584 = vmatpush1.bf16.msra.mxu0 0
        %2585 = vmatprep.subr.bf16.mxu0 0
        %2586 = vmatpush1.bf16.msra.mxu0 0
        %2587 = vmatprep.subr.bf16.mxu0 0
        %2588 = vmatpush1.bf16.msra.mxu0 0
        %2589 = vmatprep.subr.bf16.mxu0 0
        %2590 = vmatpush1.bf16.msra.mxu0 %v2145
        %2591 = vmatprep.subr.bf16.mxu0 0
        %2592 = vmatpush2.bf16.msra.mxu0 0
        %2593 = vmatprep.subr.bf16.mxu0 0
        %2594 = vmatpush2.bf16.msra.mxu0 0
        %2595 = vmatprep.subr.bf16.mxu0 0
        %2596 = vmatpush2.bf16.msra.mxu0 0
        %2597 = vmatprep.subr.bf16.mxu0 0
        %2598 = vmatpush2.bf16.msra.mxu0 0
        %2599 = vmatprep.subr.bf16.mxu0 0
        %2600 = vmatpush2.bf16.msra.mxu0 0
        %2601 = vmatprep.subr.bf16.mxu0 0
        %2602 = vmatpush2.bf16.msra.mxu0 0
        %2603 = vmatprep.subr.bf16.mxu0 0
        %2604 = vmatpush2.bf16.msra.mxu0 0
        %2605 = vmatprep.subr.bf16.mxu0 0
        %2606 = vmatpush2.bf16.msra.mxu0 0
        %2607 = vmatprep.mubr.bf16.mxu0 0
        %2608 = vmatmul.mubr.bf16.gmra.mxu0 %v2573
        %v2609 = vpop.f32.mrf.mxu0
        %v2610 = vadd.f32 0.0, %v2609
        %v2611 = vpop.f32.mrf.mxu0
        %v2612 = vpop.f32.mrf.mxu0
        %v2613 = vadd.f32 0.0, %v2612
        %v2614 = vpop.f32.mrf.mxu0
        %2615 = vdwg.mxu0
        %v2616 = vpack.c.bf16 %v2481, %v2478
        %v2617 = vpack.c.bf16 %v2525, %v2522
        %v2618 = vpack.c.bf16 %v2569, %v2566
        %v2619 = vpack.c.bf16 %v2613, %v2610
        %v2624 = vunpack.c.l.b16 %v2118
        %v2625 = vunpack.c.l.b16 %v2119
        %v2626 = vunpack.c.l.b16 %v2120
        %v2627 = vunpack.c.l.b16 %v2121
        %v2628 = vpack.c.b16 %v2625, %v2624
        %v2629 = vpack.c.b16 %v2627, %v2626
        %v2633 = vsel %vm2146, %v2616, 0
        %2635 = vmatprep.subr.bf16.mxu0 0
        %2636 = vmatpush1.bf16.msra.mxu0 0
        %2637 = vmatprep.subr.bf16.mxu0 0
        %2638 = vmatpush1.bf16.msra.mxu0 0
        %2639 = vmatprep.subr.bf16.mxu0 0
        %2640 = vmatpush1.bf16.msra.mxu0 0
        %2641 = vmatprep.subr.bf16.mxu0 0
        %2642 = vmatpush1.bf16.msra.mxu0 0
        %2643 = vmatprep.subr.bf16.mxu0 0
        %2644 = vmatpush1.bf16.msra.mxu0 0
        %2645 = vmatprep.subr.bf16.mxu0 0
        %2646 = vmatpush1.bf16.msra.mxu0 0
        %2647 = vmatprep.subr.bf16.mxu0 0
        %2648 = vmatpush1.bf16.msra.mxu0 %v2629
        %2649 = vmatprep.subr.bf16.mxu0 0
        %2650 = vmatpush1.bf16.msra.mxu0 %v2628
        %2651 = vmatprep.subr.bf16.mxu0 0
        %2652 = vmatpush2.bf16.msra.mxu0 0
        %2653 = vmatprep.subr.bf16.mxu0 0
        %2654 = vmatpush2.bf16.msra.mxu0 0
        %2655 = vmatprep.subr.bf16.mxu0 0
        %2656 = vmatpush2.bf16.msra.mxu0 0
        %2657 = vmatprep.subr.bf16.mxu0 0
        %2658 = vmatpush2.bf16.msra.mxu0 0
        %2659 = vmatprep.subr.bf16.mxu0 0
        %2660 = vmatpush2.bf16.msra.mxu0 0
        %2661 = vmatprep.subr.bf16.mxu0 0
        %2662 = vmatpush2.bf16.msra.mxu0 0
        %2663 = vmatprep.subr.bf16.mxu0 0
        %2664 = vmatpush2.bf16.msra.mxu0 0
        %2665 = vmatprep.subr.bf16.mxu0 0
        %2666 = vmatpush2.bf16.msra.mxu0 0
        %2667 = vmatprep.mubr.bf16.mxu0 0
        %2668 = vmatmul.mubr.bf16.gmra.mxu0 %v2633
        %v2669 = vpop.f32.mrf.mxu0
        %v2670 = vadd.f32 0.0, %v2669
        %v2671 = vpop.f32.mrf.mxu0
        %v2672 = vpop.f32.mrf.mxu0
        %v2673 = vadd.f32 0.0, %v2672
        %v2674 = vpop.f32.mrf.mxu0
        %2675 = vdwg.mxu0
        %v2680 = vunpack.c.l.b16 %v2122
        %v2681 = vunpack.c.l.b16 %v2123
        %v2682 = vunpack.c.l.b16 %v2124
        %v2683 = vunpack.c.l.b16 %v2125
        %v2684 = vpack.c.b16 %v2681, %v2680
        %v2685 = vpack.c.b16 %v2683, %v2682
        %v2689 = vsel %vm2146, %v2617, 0
        %2691 = vmatprep.subr.bf16.mxu0 0
        %2692 = vmatpush1.bf16.msra.mxu0 0
        %2693 = vmatprep.subr.bf16.mxu0 0
        %2694 = vmatpush1.bf16.msra.mxu0 0
        %2695 = vmatprep.subr.bf16.mxu0 0
        %2696 = vmatpush1.bf16.msra.mxu0 0
        %2697 = vmatprep.subr.bf16.mxu0 0
        %2698 = vmatpush1.bf16.msra.mxu0 0
        %2699 = vmatprep.subr.bf16.mxu0 0
        %2700 = vmatpush1.bf16.msra.mxu0 0
        %2701 = vmatprep.subr.bf16.mxu0 0
        %2702 = vmatpush1.bf16.msra.mxu0 0
        %2703 = vmatprep.subr.bf16.mxu0 0
        %2704 = vmatpush1.bf16.msra.mxu0 %v2685
        %2705 = vmatprep.subr.bf16.mxu0 0
        %2706 = vmatpush1.bf16.msra.mxu0 %v2684
        %2707 = vmatprep.subr.bf16.mxu0 0
        %2708 = vmatpush2.bf16.msra.mxu0 0
        %2709 = vmatprep.subr.bf16.mxu0 0
        %2710 = vmatpush2.bf16.msra.mxu0 0
        %2711 = vmatprep.subr.bf16.mxu0 0
        %2712 = vmatpush2.bf16.msra.mxu0 0
        %2713 = vmatprep.subr.bf16.mxu0 0
        %2714 = vmatpush2.bf16.msra.mxu0 0
        %2715 = vmatprep.subr.bf16.mxu0 0
        %2716 = vmatpush2.bf16.msra.mxu0 0
        %2717 = vmatprep.subr.bf16.mxu0 0
        %2718 = vmatpush2.bf16.msra.mxu0 0
        %2719 = vmatprep.subr.bf16.mxu0 0
        %2720 = vmatpush2.bf16.msra.mxu0 0
        %2721 = vmatprep.subr.bf16.mxu0 0
        %2722 = vmatpush2.bf16.msra.mxu0 0
        %2723 = vmatprep.mubr.bf16.mxu0 0
        %2724 = vmatmul.mubr.bf16.gmra.mxu0 %v2689
        %v2725 = vpop.f32.mrf.mxu0
        %v2726 = vadd.f32 0.0, %v2725
        %v2727 = vpop.f32.mrf.mxu0
        %v2728 = vpop.f32.mrf.mxu0
        %v2729 = vadd.f32 0.0, %v2728
        %v2730 = vpop.f32.mrf.mxu0
        %2731 = vdwg.mxu0
        %v2736 = vunpack.c.l.b16 %v2126
        %v2737 = vunpack.c.l.b16 %v2127
        %v2738 = vunpack.c.l.b16 %v2128
        %v2739 = vunpack.c.l.b16 %v2129
        %v2740 = vpack.c.b16 %v2737, %v2736
        %v2741 = vpack.c.b16 %v2739, %v2738
        %v2745 = vsel %vm2146, %v2618, 0
        %2747 = vmatprep.subr.bf16.mxu0 0
        %2748 = vmatpush1.bf16.msra.mxu0 0
        %2749 = vmatprep.subr.bf16.mxu0 0
        %2750 = vmatpush1.bf16.msra.mxu0 0
        %2751 = vmatprep.subr.bf16.mxu0 0
        %2752 = vmatpush1.bf16.msra.mxu0 0
        %2753 = vmatprep.subr.bf16.mxu0 0
        %2754 = vmatpush1.bf16.msra.mxu0 0
        %2755 = vmatprep.subr.bf16.mxu0 0
        %2756 = vmatpush1.bf16.msra.mxu0 0
        %2757 = vmatprep.subr.bf16.mxu0 0
        %2758 = vmatpush1.bf16.msra.mxu0 0
        %2759 = vmatprep.subr.bf16.mxu0 0
        %2760 = vmatpush1.bf16.msra.mxu0 %v2741
        %2761 = vmatprep.subr.bf16.mxu0 0
        %2762 = vmatpush1.bf16.msra.mxu0 %v2740
        %2763 = vmatprep.subr.bf16.mxu0 0
        %2764 = vmatpush2.bf16.msra.mxu0 0
        %2765 = vmatprep.subr.bf16.mxu0 0
        %2766 = vmatpush2.bf16.msra.mxu0 0
        %2767 = vmatprep.subr.bf16.mxu0 0
        %2768 = vmatpush2.bf16.msra.mxu0 0
        %2769 = vmatprep.subr.bf16.mxu0 0
        %2770 = vmatpush2.bf16.msra.mxu0 0
        %2771 = vmatprep.subr.bf16.mxu0 0
        %2772 = vmatpush2.bf16.msra.mxu0 0
        %2773 = vmatprep.subr.bf16.mxu0 0
        %2774 = vmatpush2.bf16.msra.mxu0 0
        %2775 = vmatprep.subr.bf16.mxu0 0
        %2776 = vmatpush2.bf16.msra.mxu0 0
        %2777 = vmatprep.subr.bf16.mxu0 0
        %2778 = vmatpush2.bf16.msra.mxu0 0
        %2779 = vmatprep.mubr.bf16.mxu0 0
        %2780 = vmatmul.mubr.bf16.gmra.mxu0 %v2745
        %v2781 = vpop.f32.mrf.mxu0
        %v2782 = vadd.f32 0.0, %v2781
        %v2783 = vpop.f32.mrf.mxu0
        %v2784 = vpop.f32.mrf.mxu0
        %v2785 = vadd.f32 0.0, %v2784
        %v2786 = vpop.f32.mrf.mxu0
        %2787 = vdwg.mxu0
        %v2792 = vunpack.c.l.b16 %v2130
        %v2793 = vunpack.c.l.b16 %v2131
        %v2794 = vunpack.c.l.b16 %v2132
        %v2795 = vunpack.c.l.b16 %v2133
        %v2796 = vpack.c.b16 %v2793, %v2792
        %v2797 = vpack.c.b16 %v2795, %v2794
        %v2801 = vsel %vm2146, %v2619, 0
        %2803 = vmatprep.subr.bf16.mxu0 0
        %2804 = vmatpush1.bf16.msra.mxu0 0
        %2805 = vmatprep.subr.bf16.mxu0 0
        %2806 = vmatpush1.bf16.msra.mxu0 0
        %2807 = vmatprep.subr.bf16.mxu0 0
        %2808 = vmatpush1.bf16.msra.mxu0 0
        %2809 = vmatprep.subr.bf16.mxu0 0
        %2810 = vmatpush1.bf16.msra.mxu0 0
        %2811 = vmatprep.subr.bf16.mxu0 0
        %2812 = vmatpush1.bf16.msra.mxu0 0
        %2813 = vmatprep.subr.bf16.mxu0 0
        %2814 = vmatpush1.bf16.msra.mxu0 0
        %2815 = vmatprep.subr.bf16.mxu0 0
        %2816 = vmatpush1.bf16.msra.mxu0 %v2797
        %2817 = vmatprep.subr.bf16.mxu0 0
        %2818 = vmatpush1.bf16.msra.mxu0 %v2796
        %2819 = vmatprep.subr.bf16.mxu0 0
        %2820 = vmatpush2.bf16.msra.mxu0 0
        %2821 = vmatprep.subr.bf16.mxu0 0
        %2822 = vmatpush2.bf16.msra.mxu0 0
        %2823 = vmatprep.subr.bf16.mxu0 0
        %2824 = vmatpush2.bf16.msra.mxu0 0
        %2825 = vmatprep.subr.bf16.mxu0 0
        %2826 = vmatpush2.bf16.msra.mxu0 0
        %2827 = vmatprep.subr.bf16.mxu0 0
        %2828 = vmatpush2.bf16.msra.mxu0 0
        %2829 = vmatprep.subr.bf16.mxu0 0
        %2830 = vmatpush2.bf16.msra.mxu0 0
        %2831 = vmatprep.subr.bf16.mxu0 0
        %2832 = vmatpush2.bf16.msra.mxu0 0
        %2833 = vmatprep.subr.bf16.mxu0 0
        %2834 = vmatpush2.bf16.msra.mxu0 0
        %2835 = vmatprep.mubr.bf16.mxu0 0
        %2836 = vmatmul.mubr.bf16.gmra.mxu0 %v2801
        %v2837 = vpop.f32.mrf.mxu0
        %v2838 = vadd.f32 0.0, %v2837
        %v2839 = vpop.f32.mrf.mxu0
        %v2840 = vpop.f32.mrf.mxu0
        %v2841 = vadd.f32 0.0, %v2840
        %v2842 = vpop.f32.mrf.mxu0
        %2843 = vdwg.mxu0
        %v2844 = vadd.f32 %v2670, %v2726
        %v2845 = vadd.f32 %v2844, %v2782
        %v2846 = vadd.f32 %v2845, %v2838
        %v2847 = vadd.f32 %v2673, %v2729
        %v2848 = vadd.f32 %v2847, %v2785
        %v2849 = vadd.f32 %v2848, %v2841
        %v2850 = vpack.c.bf16 %v1041, %v1038
        %v2851 = vpack.c.bf16 %v1138, %v1135
        %v2852 = vpack.c.bf16 %v1235, %v1232
        %v2853 = vpack.c.bf16 %v1332, %v1329
        %v2854 = vpack.c.bf16 %v1429, %v1426
        %v2855 = vpack.c.bf16 %v1526, %v1523
        %v2856 = vpack.c.bf16 %v1623, %v1620
        %v2857 = vpack.c.bf16 %v1720, %v1717
        %v2858 = vpack.c.bf16 %v1817, %v1814
        %v2859 = vpack.c.bf16 %v1914, %v1911
        %v2860 = vpack.c.bf16 %v2011, %v2008
        %v2861 = vpack.c.bf16 %v2108, %v2105
        %v2863 = vsel %vm2146, %v2850, 0
        %v2866 = vsel %vm2146, %v2854, 0
        %2868 = vmatprep.subr.bf16.mxu0 0
        %2869 = vmatpush1.bf16.xpose.msra.mxu0 0
        %2870 = vmatprep.subr.bf16.mxu0 0
        %2871 = vmatpush1.bf16.xpose.msra.mxu0 0
        %2872 = vmatprep.subr.bf16.mxu0 0
        %2873 = vmatpush1.bf16.xpose.msra.mxu0 0
        %2874 = vmatprep.subr.bf16.mxu0 0
        %2875 = vmatpush1.bf16.xpose.msra.mxu0 0
        %2876 = vmatprep.subr.bf16.mxu0 0
        %2877 = vmatpush1.bf16.xpose.msra.mxu0 0
        %2878 = vmatprep.subr.bf16.mxu0 0
        %2879 = vmatpush1.bf16.xpose.msra.mxu0 0
        %2880 = vmatprep.subr.bf16.mxu0 0
        %2881 = vmatpush1.bf16.xpose.msra.mxu0 0
        %2882 = vmatprep.subr.bf16.mxu0 0
        %2883 = vmatpush1.bf16.xpose.msra.mxu0 %v2866
        %2884 = vmatprep.subr.bf16.mxu0 0
        %2885 = vmatpush2.bf16.xpose.msra.mxu0 0
        %2886 = vmatprep.subr.bf16.mxu0 0
        %2887 = vmatpush2.bf16.xpose.msra.mxu0 0
        %2888 = vmatprep.subr.bf16.mxu0 0
        %2889 = vmatpush2.bf16.xpose.msra.mxu0 0
        %2890 = vmatprep.subr.bf16.mxu0 0
        %2891 = vmatpush2.bf16.xpose.msra.mxu0 0
        %2892 = vmatprep.subr.bf16.mxu0 0
        %2893 = vmatpush2.bf16.xpose.msra.mxu0 0
        %2894 = vmatprep.subr.bf16.mxu0 0
        %2895 = vmatpush2.bf16.xpose.msra.mxu0 0
        %2896 = vmatprep.subr.bf16.mxu0 0
        %2897 = vmatpush2.bf16.xpose.msra.mxu0 0
        %2898 = vmatprep.subr.bf16.mxu0 0
        %2899 = vmatpush2.bf16.xpose.msra.mxu0 0
        %2900 = vmatprep.mubr.bf16.mxu0 0
        %2901 = vmatmul.mubr.bf16.gmra.mxu0 %v2863
        %v2902 = vpop.f32.mrf.mxu0
        %v2903 = vadd.f32 0.0, %v2902
        %v2904 = vpop.f32.mrf.mxu0
        %v2905 = vpop.f32.mrf.mxu0
        %v2906 = vadd.f32 0.0, %v2905
        %v2907 = vpop.f32.mrf.mxu0
        %2908 = vdwg.mxu0
        %v2910 = vsel %vm2146, %v2851, 0
        %v2913 = vsel %vm2146, %v2855, 0
        %2915 = vmatprep.subr.bf16.mxu0 0
        %2916 = vmatpush1.bf16.xpose.msra.mxu0 0
        %2917 = vmatprep.subr.bf16.mxu0 0
        %2918 = vmatpush1.bf16.xpose.msra.mxu0 0
        %2919 = vmatprep.subr.bf16.mxu0 0
        %2920 = vmatpush1.bf16.xpose.msra.mxu0 0
        %2921 = vmatprep.subr.bf16.mxu0 0
        %2922 = vmatpush1.bf16.xpose.msra.mxu0 0
        %2923 = vmatprep.subr.bf16.mxu0 0
        %2924 = vmatpush1.bf16.xpose.msra.mxu0 0
        %2925 = vmatprep.subr.bf16.mxu0 0
        %2926 = vmatpush1.bf16.xpose.msra.mxu0 0
        %2927 = vmatprep.subr.bf16.mxu0 0
        %2928 = vmatpush1.bf16.xpose.msra.mxu0 0
        %2929 = vmatprep.subr.bf16.mxu0 0
        %2930 = vmatpush1.bf16.xpose.msra.mxu0 %v2913
        %2931 = vmatprep.subr.bf16.mxu0 0
        %2932 = vmatpush2.bf16.xpose.msra.mxu0 0
        %2933 = vmatprep.subr.bf16.mxu0 0
        %2934 = vmatpush2.bf16.xpose.msra.mxu0 0
        %2935 = vmatprep.subr.bf16.mxu0 0
        %2936 = vmatpush2.bf16.xpose.msra.mxu0 0
        %2937 = vmatprep.subr.bf16.mxu0 0
        %2938 = vmatpush2.bf16.xpose.msra.mxu0 0
        %2939 = vmatprep.subr.bf16.mxu0 0
        %2940 = vmatpush2.bf16.xpose.msra.mxu0 0
        %2941 = vmatprep.subr.bf16.mxu0 0
        %2942 = vmatpush2.bf16.xpose.msra.mxu0 0
        %2943 = vmatprep.subr.bf16.mxu0 0
        %2944 = vmatpush2.bf16.xpose.msra.mxu0 0
        %2945 = vmatprep.subr.bf16.mxu0 0
        %2946 = vmatpush2.bf16.xpose.msra.mxu0 0
        %2947 = vmatprep.mubr.bf16.mxu0 0
        %2948 = vmatmul.mubr.bf16.gmra.mxu0 %v2910
        %v2949 = vpop.f32.mrf.mxu0
        %v2950 = vadd.f32 0.0, %v2949
        %v2951 = vpop.f32.mrf.mxu0
        %v2952 = vpop.f32.mrf.mxu0
        %v2953 = vadd.f32 0.0, %v2952
        %v2954 = vpop.f32.mrf.mxu0
        %2955 = vdwg.mxu0
        %v2957 = vsel %vm2146, %v2852, 0
        %v2960 = vsel %vm2146, %v2856, 0
        %2962 = vmatprep.subr.bf16.mxu0 0
        %2963 = vmatpush1.bf16.xpose.msra.mxu0 0
        %2964 = vmatprep.subr.bf16.mxu0 0
        %2965 = vmatpush1.bf16.xpose.msra.mxu0 0
        %2966 = vmatprep.subr.bf16.mxu0 0
        %2967 = vmatpush1.bf16.xpose.msra.mxu0 0
        %2968 = vmatprep.subr.bf16.mxu0 0
        %2969 = vmatpush1.bf16.xpose.msra.mxu0 0
        %2970 = vmatprep.subr.bf16.mxu0 0
        %2971 = vmatpush1.bf16.xpose.msra.mxu0 0
        %2972 = vmatprep.subr.bf16.mxu0 0
        %2973 = vmatpush1.bf16.xpose.msra.mxu0 0
        %2974 = vmatprep.subr.bf16.mxu0 0
        %2975 = vmatpush1.bf16.xpose.msra.mxu0 0
        %2976 = vmatprep.subr.bf16.mxu0 0
        %2977 = vmatpush1.bf16.xpose.msra.mxu0 %v2960
        %2978 = vmatprep.subr.bf16.mxu0 0
        %2979 = vmatpush2.bf16.xpose.msra.mxu0 0
        %2980 = vmatprep.subr.bf16.mxu0 0
        %2981 = vmatpush2.bf16.xpose.msra.mxu0 0
        %2982 = vmatprep.subr.bf16.mxu0 0
        %2983 = vmatpush2.bf16.xpose.msra.mxu0 0
        %2984 = vmatprep.subr.bf16.mxu0 0
        %2985 = vmatpush2.bf16.xpose.msra.mxu0 0
        %2986 = vmatprep.subr.bf16.mxu0 0
        %2987 = vmatpush2.bf16.xpose.msra.mxu0 0
        %2988 = vmatprep.subr.bf16.mxu0 0
        %2989 = vmatpush2.bf16.xpose.msra.mxu0 0
        %2990 = vmatprep.subr.bf16.mxu0 0
        %2991 = vmatpush2.bf16.xpose.msra.mxu0 0
        %2992 = vmatprep.subr.bf16.mxu0 0
        %2993 = vmatpush2.bf16.xpose.msra.mxu0 0
        %2994 = vmatprep.mubr.bf16.mxu0 0
        %2995 = vmatmul.mubr.bf16.gmra.mxu0 %v2957
        %v2996 = vpop.f32.mrf.mxu0
        %v2997 = vadd.f32 0.0, %v2996
        %v2998 = vpop.f32.mrf.mxu0
        %v2999 = vpop.f32.mrf.mxu0
        %v3000 = vadd.f32 0.0, %v2999
        %v3001 = vpop.f32.mrf.mxu0
        %3002 = vdwg.mxu0
        %v3004 = vsel %vm2146, %v2853, 0
        %v3007 = vsel %vm2146, %v2857, 0
        %3009 = vmatprep.subr.bf16.mxu0 0
        %3010 = vmatpush1.bf16.xpose.msra.mxu0 0
        %3011 = vmatprep.subr.bf16.mxu0 0
        %3012 = vmatpush1.bf16.xpose.msra.mxu0 0
        %3013 = vmatprep.subr.bf16.mxu0 0
        %3014 = vmatpush1.bf16.xpose.msra.mxu0 0
        %3015 = vmatprep.subr.bf16.mxu0 0
        %3016 = vmatpush1.bf16.xpose.msra.mxu0 0
        %3017 = vmatprep.subr.bf16.mxu0 0
        %3018 = vmatpush1.bf16.xpose.msra.mxu0 0
        %3019 = vmatprep.subr.bf16.mxu0 0
        %3020 = vmatpush1.bf16.xpose.msra.mxu0 0
        %3021 = vmatprep.subr.bf16.mxu0 0
        %3022 = vmatpush1.bf16.xpose.msra.mxu0 0
        %3023 = vmatprep.subr.bf16.mxu0 0
        %3024 = vmatpush1.bf16.xpose.msra.mxu0 %v3007
        %3025 = vmatprep.subr.bf16.mxu0 0
        %3026 = vmatpush2.bf16.xpose.msra.mxu0 0
        %3027 = vmatprep.subr.bf16.mxu0 0
        %3028 = vmatpush2.bf16.xpose.msra.mxu0 0
        %3029 = vmatprep.subr.bf16.mxu0 0
        %3030 = vmatpush2.bf16.xpose.msra.mxu0 0
        %3031 = vmatprep.subr.bf16.mxu0 0
        %3032 = vmatpush2.bf16.xpose.msra.mxu0 0
        %3033 = vmatprep.subr.bf16.mxu0 0
        %3034 = vmatpush2.bf16.xpose.msra.mxu0 0
        %3035 = vmatprep.subr.bf16.mxu0 0
        %3036 = vmatpush2.bf16.xpose.msra.mxu0 0
        %3037 = vmatprep.subr.bf16.mxu0 0
        %3038 = vmatpush2.bf16.xpose.msra.mxu0 0
        %3039 = vmatprep.subr.bf16.mxu0 0
        %3040 = vmatpush2.bf16.xpose.msra.mxu0 0
        %3041 = vmatprep.mubr.bf16.mxu0 0
        %3042 = vmatmul.mubr.bf16.gmra.mxu0 %v3004
        %v3043 = vpop.f32.mrf.mxu0
        %v3044 = vadd.f32 0.0, %v3043
        %v3045 = vpop.f32.mrf.mxu0
        %v3046 = vpop.f32.mrf.mxu0
        %v3047 = vadd.f32 0.0, %v3046
        %v3048 = vpop.f32.mrf.mxu0
        %3049 = vdwg.mxu0
        %v3050 = vsel %vm2337, %v2903, -1e+30
        %v3051 = vsel %vm2338, %v2906, -1e+30
        %v3052 = vsel %vm2337, %v2950, -1e+30
        %v3053 = vsel %vm2338, %v2953, -1e+30
        %v3054 = vsel %vm2337, %v2997, -1e+30
        %v3055 = vsel %vm2338, %v3000, -1e+30
        %v3056 = vsel %vm2337, %v3044, -1e+30
        %v3057 = vsel %vm2338, %v3047, -1e+30
        %v3058 = vsel %vm2347, %v3050, -inf
        %3059 = vmax.xlane.f32.xlu0 %v3058
        %v3060 = vpop.xlane.xlu0 %3059
        %v3061 = vsel %vm2347, %v3051, -inf
        %3062 = vmax.xlane.f32.xlu0 %v3061
        %v3063 = vpop.xlane.xlu0 %3062
        %v3064 = vsel %vm2347, %v3052, -inf
        %3065 = vmax.xlane.f32.xlu0 %v3064
        %v3066 = vpop.xlane.xlu0 %3065
        %v3067 = vsel %vm2347, %v3053, -inf
        %3068 = vmax.xlane.f32.xlu0 %v3067
        %v3069 = vpop.xlane.xlu0 %3068
        %v3070 = vsel %vm2347, %v3054, -inf
        %3071 = vmax.xlane.f32.xlu0 %v3070
        %v3072 = vpop.xlane.xlu0 %3071
        %v3073 = vsel %vm2347, %v3055, -inf
        %3074 = vmax.xlane.f32.xlu0 %v3073
        %v3075 = vpop.xlane.xlu0 %3074
        %v3076 = vsel %vm2347, %v3056, -inf
        %3077 = vmax.xlane.f32.xlu0 %v3076
        %v3078 = vpop.xlane.xlu0 %3077
        %v3079 = vsel %vm2347, %v3057, -inf
        %3080 = vmax.xlane.f32.xlu0 %v3079
        %v3081 = vpop.xlane.xlu0 %3080
        %v3082 = vsub.f32 %v3050, %v3060
        %v3083 = vsub.f32 %v3051, %v3063
        %v3084 = vsub.f32 %v3052, %v3066
        %v3085 = vsub.f32 %v3053, %v3069
        %v3086 = vsub.f32 %v3054, %v3072
        %v3087 = vsub.f32 %v3055, %v3075
        %v3088 = vsub.f32 %v3056, %v3078
        %v3089 = vsub.f32 %v3057, %v3081
        %v3090 = vmul.f32 %v3082, 1.442695
        %v3091 = vpow.pop %v3090
        %v3092 = vmul.f32 %v3083, 1.442695
        %v3093 = vpow.pop %v3092
        %v3094 = vmul.f32 %v3084, 1.442695
        %v3095 = vpow.pop %v3094
        %v3096 = vmul.f32 %v3085, 1.442695
        %v3097 = vpow.pop %v3096
        %v3098 = vmul.f32 %v3086, 1.442695
        %v3099 = vpow.pop %v3098
        %v3100 = vmul.f32 %v3087, 1.442695
        %v3101 = vpow.pop %v3100
        %v3102 = vmul.f32 %v3088, 1.442695
        %v3103 = vpow.pop %v3102
        %v3104 = vmul.f32 %v3089, 1.442695
        %v3105 = vpow.pop %v3104
        %v3106 = vsel %vm2347, %v3091, 0.0
        %3107 = vadd.xlane.f32.xlu0 %v3106
        %v3108 = vpop.xlane.xlu0 %3107
        %v3109 = vsel %vm2347, %v3093, 0.0
        %3110 = vadd.xlane.f32.xlu0 %v3109
        %v3111 = vpop.xlane.xlu0 %3110
        %v3112 = vsel %vm2347, %v3095, 0.0
        %3113 = vadd.xlane.f32.xlu0 %v3112
        %v3114 = vpop.xlane.xlu0 %3113
        %v3115 = vsel %vm2347, %v3097, 0.0
        %3116 = vadd.xlane.f32.xlu0 %v3115
        %v3117 = vpop.xlane.xlu0 %3116
        %v3118 = vsel %vm2347, %v3099, 0.0
        %3119 = vadd.xlane.f32.xlu0 %v3118
        %v3120 = vpop.xlane.xlu0 %3119
        %v3121 = vsel %vm2347, %v3101, 0.0
        %3122 = vadd.xlane.f32.xlu0 %v3121
        %v3123 = vpop.xlane.xlu0 %3122
        %v3124 = vsel %vm2347, %v3103, 0.0
        %3125 = vadd.xlane.f32.xlu0 %v3124
        %v3126 = vpop.xlane.xlu0 %3125
        %v3127 = vsel %vm2347, %v3105, 0.0
        %3128 = vadd.xlane.f32.xlu0 %v3127
        %v3129 = vpop.xlane.xlu0 %3128
        %v3130 = vrcp.pop %v3108
        %v3131 = vrcp.pop %v3111
        %v3132 = vrcp.pop %v3114
        %v3133 = vrcp.pop %v3117
        %v3134 = vrcp.pop %v3120
        %v3135 = vrcp.pop %v3123
        %v3136 = vrcp.pop %v3126
        %v3137 = vrcp.pop %v3129
        %v3138 = vmul.f32 %v3091, %v3130
        %v3139 = vmul.f32 %v3093, %v3131
        %v3140 = vmul.f32 %v3095, %v3132
        %v3141 = vmul.f32 %v3097, %v3133
        %v3142 = vmul.f32 %v3099, %v3134
        %v3143 = vmul.f32 %v3101, %v3135
        %v3144 = vmul.f32 %v3103, %v3136
        %v3145 = vmul.f32 %v3105, %v3137
        %v3146 = vpack.c.bf16 %v3139, %v3138
        %v3147 = vpack.c.bf16 %v3141, %v3140
        %v3148 = vpack.c.bf16 %v3143, %v3142
        %v3149 = vpack.c.bf16 %v3145, %v3144
        %v3151 = vsel %vm2347, %v3146, 0
        %3153 = vmatprep.subr.bf16.mxu0 0
        %3154 = vmatpush1.bf16.msra.mxu0 0
        %3155 = vmatprep.subr.bf16.mxu0 0
        %3156 = vmatpush1.bf16.msra.mxu0 0
        %3157 = vmatprep.subr.bf16.mxu0 0
        %3158 = vmatpush1.bf16.msra.mxu0 0
        %3159 = vmatprep.subr.bf16.mxu0 0
        %3160 = vmatpush1.bf16.msra.mxu0 0
        %3161 = vmatprep.subr.bf16.mxu0 0
        %3162 = vmatpush1.bf16.msra.mxu0 0
        %3163 = vmatprep.subr.bf16.mxu0 0
        %3164 = vmatpush1.bf16.msra.mxu0 0
        %3165 = vmatprep.subr.bf16.mxu0 0
        %3166 = vmatpush1.bf16.msra.mxu0 0
        %3167 = vmatprep.subr.bf16.mxu0 0
        %3168 = vmatpush1.bf16.msra.mxu0 %v2858
        %3169 = vmatprep.subr.bf16.mxu0 0
        %3170 = vmatpush2.bf16.msra.mxu0 0
        %3171 = vmatprep.subr.bf16.mxu0 0
        %3172 = vmatpush2.bf16.msra.mxu0 0
        %3173 = vmatprep.subr.bf16.mxu0 0
        %3174 = vmatpush2.bf16.msra.mxu0 0
        %3175 = vmatprep.subr.bf16.mxu0 0
        %3176 = vmatpush2.bf16.msra.mxu0 0
        %3177 = vmatprep.subr.bf16.mxu0 0
        %3178 = vmatpush2.bf16.msra.mxu0 0
        %3179 = vmatprep.subr.bf16.mxu0 0
        %3180 = vmatpush2.bf16.msra.mxu0 0
        %3181 = vmatprep.subr.bf16.mxu0 0
        %3182 = vmatpush2.bf16.msra.mxu0 0
        %3183 = vmatprep.subr.bf16.mxu0 0
        %3184 = vmatpush2.bf16.msra.mxu0 0
        %3185 = vmatprep.mubr.bf16.mxu0 0
        %3186 = vmatmul.mubr.bf16.gmra.mxu0 %v3151
        %v3187 = vpop.f32.mrf.mxu0
        %v3188 = vadd.f32 0.0, %v3187
        %v3189 = vpop.f32.mrf.mxu0
        %v3190 = vpop.f32.mrf.mxu0
        %v3191 = vadd.f32 0.0, %v3190
        %v3192 = vpop.f32.mrf.mxu0
        %3193 = vdwg.mxu0
        %v3195 = vsel %vm2347, %v3147, 0
        %3197 = vmatprep.subr.bf16.mxu0 0
        %3198 = vmatpush1.bf16.msra.mxu0 0
        %3199 = vmatprep.subr.bf16.mxu0 0
        %3200 = vmatpush1.bf16.msra.mxu0 0
        %3201 = vmatprep.subr.bf16.mxu0 0
        %3202 = vmatpush1.bf16.msra.mxu0 0
        %3203 = vmatprep.subr.bf16.mxu0 0
        %3204 = vmatpush1.bf16.msra.mxu0 0
        %3205 = vmatprep.subr.bf16.mxu0 0
        %3206 = vmatpush1.bf16.msra.mxu0 0
        %3207 = vmatprep.subr.bf16.mxu0 0
        %3208 = vmatpush1.bf16.msra.mxu0 0
        %3209 = vmatprep.subr.bf16.mxu0 0
        %3210 = vmatpush1.bf16.msra.mxu0 0
        %3211 = vmatprep.subr.bf16.mxu0 0
        %3212 = vmatpush1.bf16.msra.mxu0 %v2859
        %3213 = vmatprep.subr.bf16.mxu0 0
        %3214 = vmatpush2.bf16.msra.mxu0 0
        %3215 = vmatprep.subr.bf16.mxu0 0
        %3216 = vmatpush2.bf16.msra.mxu0 0
        %3217 = vmatprep.subr.bf16.mxu0 0
        %3218 = vmatpush2.bf16.msra.mxu0 0
        %3219 = vmatprep.subr.bf16.mxu0 0
        %3220 = vmatpush2.bf16.msra.mxu0 0
        %3221 = vmatprep.subr.bf16.mxu0 0
        %3222 = vmatpush2.bf16.msra.mxu0 0
        %3223 = vmatprep.subr.bf16.mxu0 0
        %3224 = vmatpush2.bf16.msra.mxu0 0
        %3225 = vmatprep.subr.bf16.mxu0 0
        %3226 = vmatpush2.bf16.msra.mxu0 0
        %3227 = vmatprep.subr.bf16.mxu0 0
        %3228 = vmatpush2.bf16.msra.mxu0 0
        %3229 = vmatprep.mubr.bf16.mxu0 0
        %3230 = vmatmul.mubr.bf16.gmra.mxu0 %v3195
        %v3231 = vpop.f32.mrf.mxu0
        %v3232 = vadd.f32 0.0, %v3231
        %v3233 = vpop.f32.mrf.mxu0
        %v3234 = vpop.f32.mrf.mxu0
        %v3235 = vadd.f32 0.0, %v3234
        %v3236 = vpop.f32.mrf.mxu0
        %3237 = vdwg.mxu0
        %v3239 = vsel %vm2347, %v3148, 0
        %3241 = vmatprep.subr.bf16.mxu0 0
        %3242 = vmatpush1.bf16.msra.mxu0 0
        %3243 = vmatprep.subr.bf16.mxu0 0
        %3244 = vmatpush1.bf16.msra.mxu0 0
        %3245 = vmatprep.subr.bf16.mxu0 0
        %3246 = vmatpush1.bf16.msra.mxu0 0
        %3247 = vmatprep.subr.bf16.mxu0 0
        %3248 = vmatpush1.bf16.msra.mxu0 0
        %3249 = vmatprep.subr.bf16.mxu0 0
        %3250 = vmatpush1.bf16.msra.mxu0 0
        %3251 = vmatprep.subr.bf16.mxu0 0
        %3252 = vmatpush1.bf16.msra.mxu0 0
        %3253 = vmatprep.subr.bf16.mxu0 0
        %3254 = vmatpush1.bf16.msra.mxu0 0
        %3255 = vmatprep.subr.bf16.mxu0 0
        %3256 = vmatpush1.bf16.msra.mxu0 %v2860
        %3257 = vmatprep.subr.bf16.mxu0 0
        %3258 = vmatpush2.bf16.msra.mxu0 0
        %3259 = vmatprep.subr.bf16.mxu0 0
        %3260 = vmatpush2.bf16.msra.mxu0 0
        %3261 = vmatprep.subr.bf16.mxu0 0
        %3262 = vmatpush2.bf16.msra.mxu0 0
        %3263 = vmatprep.subr.bf16.mxu0 0
        %3264 = vmatpush2.bf16.msra.mxu0 0
        %3265 = vmatprep.subr.bf16.mxu0 0
        %3266 = vmatpush2.bf16.msra.mxu0 0
        %3267 = vmatprep.subr.bf16.mxu0 0
        %3268 = vmatpush2.bf16.msra.mxu0 0
        %3269 = vmatprep.subr.bf16.mxu0 0
        %3270 = vmatpush2.bf16.msra.mxu0 0
        %3271 = vmatprep.subr.bf16.mxu0 0
        %3272 = vmatpush2.bf16.msra.mxu0 0
        %3273 = vmatprep.mubr.bf16.mxu0 0
        %3274 = vmatmul.mubr.bf16.gmra.mxu0 %v3239
        %v3275 = vpop.f32.mrf.mxu0
        %v3276 = vadd.f32 0.0, %v3275
        %v3277 = vpop.f32.mrf.mxu0
        %v3278 = vpop.f32.mrf.mxu0
        %v3279 = vadd.f32 0.0, %v3278
        %v3280 = vpop.f32.mrf.mxu0
        %3281 = vdwg.mxu0
        %v3283 = vsel %vm2347, %v3149, 0
        %3285 = vmatprep.subr.bf16.mxu0 0
        %3286 = vmatpush1.bf16.msra.mxu0 0
        %3287 = vmatprep.subr.bf16.mxu0 0
        %3288 = vmatpush1.bf16.msra.mxu0 0
        %3289 = vmatprep.subr.bf16.mxu0 0
        %3290 = vmatpush1.bf16.msra.mxu0 0
        %3291 = vmatprep.subr.bf16.mxu0 0
        %3292 = vmatpush1.bf16.msra.mxu0 0
        %3293 = vmatprep.subr.bf16.mxu0 0
        %3294 = vmatpush1.bf16.msra.mxu0 0
        %3295 = vmatprep.subr.bf16.mxu0 0
        %3296 = vmatpush1.bf16.msra.mxu0 0
        %3297 = vmatprep.subr.bf16.mxu0 0
        %3298 = vmatpush1.bf16.msra.mxu0 0
        %3299 = vmatprep.subr.bf16.mxu0 0
        %3300 = vmatpush1.bf16.msra.mxu0 %v2861
        %3301 = vmatprep.subr.bf16.mxu0 0
        %3302 = vmatpush2.bf16.msra.mxu0 0
        %3303 = vmatprep.subr.bf16.mxu0 0
        %3304 = vmatpush2.bf16.msra.mxu0 0
        %3305 = vmatprep.subr.bf16.mxu0 0
        %3306 = vmatpush2.bf16.msra.mxu0 0
        %3307 = vmatprep.subr.bf16.mxu0 0
        %3308 = vmatpush2.bf16.msra.mxu0 0
        %3309 = vmatprep.subr.bf16.mxu0 0
        %3310 = vmatpush2.bf16.msra.mxu0 0
        %3311 = vmatprep.subr.bf16.mxu0 0
        %3312 = vmatpush2.bf16.msra.mxu0 0
        %3313 = vmatprep.subr.bf16.mxu0 0
        %3314 = vmatpush2.bf16.msra.mxu0 0
        %3315 = vmatprep.subr.bf16.mxu0 0
        %3316 = vmatpush2.bf16.msra.mxu0 0
        %3317 = vmatprep.mubr.bf16.mxu0 0
        %3318 = vmatmul.mubr.bf16.gmra.mxu0 %v3283
        %v3319 = vpop.f32.mrf.mxu0
        %v3320 = vadd.f32 0.0, %v3319
        %v3321 = vpop.f32.mrf.mxu0
        %v3322 = vpop.f32.mrf.mxu0
        %v3323 = vadd.f32 0.0, %v3322
        %v3324 = vpop.f32.mrf.mxu0
        %3325 = vdwg.mxu0
        %v3326 = vpack.c.bf16 %v3191, %v3188
        %v3327 = vpack.c.bf16 %v3235, %v3232
        %v3328 = vpack.c.bf16 %v3279, %v3276
        %v3329 = vpack.c.bf16 %v3323, %v3320
        %v3331 = vsel %vm2146, %v3326, 0
        %3333 = vmatprep.subr.bf16.mxu0 0
        %3334 = vmatpush1.bf16.msra.mxu0 0
        %3335 = vmatprep.subr.bf16.mxu0 0
        %3336 = vmatpush1.bf16.msra.mxu0 0
        %3337 = vmatprep.subr.bf16.mxu0 0
        %3338 = vmatpush1.bf16.msra.mxu0 0
        %3339 = vmatprep.subr.bf16.mxu0 0
        %3340 = vmatpush1.bf16.msra.mxu0 0
        %3341 = vmatprep.subr.bf16.mxu0 0
        %3342 = vmatpush1.bf16.msra.mxu0 0
        %3343 = vmatprep.subr.bf16.mxu0 0
        %3344 = vmatpush1.bf16.msra.mxu0 0
        %3345 = vmatprep.subr.bf16.mxu0 0
        %3346 = vmatpush1.bf16.msra.mxu0 %v2629
        %3347 = vmatprep.subr.bf16.mxu0 0
        %3348 = vmatpush1.bf16.msra.mxu0 %v2628
        %3349 = vmatprep.subr.bf16.mxu0 0
        %3350 = vmatpush2.bf16.msra.mxu0 0
        %3351 = vmatprep.subr.bf16.mxu0 0
        %3352 = vmatpush2.bf16.msra.mxu0 0
        %3353 = vmatprep.subr.bf16.mxu0 0
        %3354 = vmatpush2.bf16.msra.mxu0 0
        %3355 = vmatprep.subr.bf16.mxu0 0
        %3356 = vmatpush2.bf16.msra.mxu0 0
        %3357 = vmatprep.subr.bf16.mxu0 0
        %3358 = vmatpush2.bf16.msra.mxu0 0
        %3359 = vmatprep.subr.bf16.mxu0 0
        %3360 = vmatpush2.bf16.msra.mxu0 0
        %3361 = vmatprep.subr.bf16.mxu0 0
        %3362 = vmatpush2.bf16.msra.mxu0 0
        %3363 = vmatprep.subr.bf16.mxu0 0
        %3364 = vmatpush2.bf16.msra.mxu0 0
        %3365 = vmatprep.mubr.bf16.mxu0 0
        %3366 = vmatmul.mubr.bf16.gmra.mxu0 %v3331
        %v3367 = vpop.f32.mrf.mxu0
        %v3368 = vadd.f32 0.0, %v3367
        %v3369 = vpop.f32.mrf.mxu0
        %v3370 = vpop.f32.mrf.mxu0
        %v3371 = vadd.f32 0.0, %v3370
        %v3372 = vpop.f32.mrf.mxu0
        %3373 = vdwg.mxu0
        %v3375 = vsel %vm2146, %v3327, 0
        %3377 = vmatprep.subr.bf16.mxu0 0
        %3378 = vmatpush1.bf16.msra.mxu0 0
        %3379 = vmatprep.subr.bf16.mxu0 0
        %3380 = vmatpush1.bf16.msra.mxu0 0
        %3381 = vmatprep.subr.bf16.mxu0 0
        %3382 = vmatpush1.bf16.msra.mxu0 0
        %3383 = vmatprep.subr.bf16.mxu0 0
        %3384 = vmatpush1.bf16.msra.mxu0 0
        %3385 = vmatprep.subr.bf16.mxu0 0
        %3386 = vmatpush1.bf16.msra.mxu0 0
        %3387 = vmatprep.subr.bf16.mxu0 0
        %3388 = vmatpush1.bf16.msra.mxu0 0
        %3389 = vmatprep.subr.bf16.mxu0 0
        %3390 = vmatpush1.bf16.msra.mxu0 %v2685
        %3391 = vmatprep.subr.bf16.mxu0 0
        %3392 = vmatpush1.bf16.msra.mxu0 %v2684
        %3393 = vmatprep.subr.bf16.mxu0 0
        %3394 = vmatpush2.bf16.msra.mxu0 0
        %3395 = vmatprep.subr.bf16.mxu0 0
        %3396 = vmatpush2.bf16.msra.mxu0 0
        %3397 = vmatprep.subr.bf16.mxu0 0
        %3398 = vmatpush2.bf16.msra.mxu0 0
        %3399 = vmatprep.subr.bf16.mxu0 0
        %3400 = vmatpush2.bf16.msra.mxu0 0
        %3401 = vmatprep.subr.bf16.mxu0 0
        %3402 = vmatpush2.bf16.msra.mxu0 0
        %3403 = vmatprep.subr.bf16.mxu0 0
        %3404 = vmatpush2.bf16.msra.mxu0 0
        %3405 = vmatprep.subr.bf16.mxu0 0
        %3406 = vmatpush2.bf16.msra.mxu0 0
        %3407 = vmatprep.subr.bf16.mxu0 0
        %3408 = vmatpush2.bf16.msra.mxu0 0
        %3409 = vmatprep.mubr.bf16.mxu0 0
        %3410 = vmatmul.mubr.bf16.gmra.mxu0 %v3375
        %v3411 = vpop.f32.mrf.mxu0
        %v3412 = vadd.f32 0.0, %v3411
        %v3413 = vpop.f32.mrf.mxu0
        %v3414 = vpop.f32.mrf.mxu0
        %v3415 = vadd.f32 0.0, %v3414
        %v3416 = vpop.f32.mrf.mxu0
        %3417 = vdwg.mxu0
        %v3419 = vsel %vm2146, %v3328, 0
        %3421 = vmatprep.subr.bf16.mxu0 0
        %3422 = vmatpush1.bf16.msra.mxu0 0
        %3423 = vmatprep.subr.bf16.mxu0 0
        %3424 = vmatpush1.bf16.msra.mxu0 0
        %3425 = vmatprep.subr.bf16.mxu0 0
        %3426 = vmatpush1.bf16.msra.mxu0 0
        %3427 = vmatprep.subr.bf16.mxu0 0
        %3428 = vmatpush1.bf16.msra.mxu0 0
        %3429 = vmatprep.subr.bf16.mxu0 0
        %3430 = vmatpush1.bf16.msra.mxu0 0
        %3431 = vmatprep.subr.bf16.mxu0 0
        %3432 = vmatpush1.bf16.msra.mxu0 0
        %3433 = vmatprep.subr.bf16.mxu0 0
        %3434 = vmatpush1.bf16.msra.mxu0 %v2741
        %3435 = vmatprep.subr.bf16.mxu0 0
        %3436 = vmatpush1.bf16.msra.mxu0 %v2740
        %3437 = vmatprep.subr.bf16.mxu0 0
        %3438 = vmatpush2.bf16.msra.mxu0 0
        %3439 = vmatprep.subr.bf16.mxu0 0
        %3440 = vmatpush2.bf16.msra.mxu0 0
        %3441 = vmatprep.subr.bf16.mxu0 0
        %3442 = vmatpush2.bf16.msra.mxu0 0
        %3443 = vmatprep.subr.bf16.mxu0 0
        %3444 = vmatpush2.bf16.msra.mxu0 0
        %3445 = vmatprep.subr.bf16.mxu0 0
        %3446 = vmatpush2.bf16.msra.mxu0 0
        %3447 = vmatprep.subr.bf16.mxu0 0
        %3448 = vmatpush2.bf16.msra.mxu0 0
        %3449 = vmatprep.subr.bf16.mxu0 0
        %3450 = vmatpush2.bf16.msra.mxu0 0
        %3451 = vmatprep.subr.bf16.mxu0 0
        %3452 = vmatpush2.bf16.msra.mxu0 0
        %3453 = vmatprep.mubr.bf16.mxu0 0
        %3454 = vmatmul.mubr.bf16.gmra.mxu0 %v3419
        %v3455 = vpop.f32.mrf.mxu0
        %v3456 = vadd.f32 0.0, %v3455
        %v3457 = vpop.f32.mrf.mxu0
        %v3458 = vpop.f32.mrf.mxu0
        %v3459 = vadd.f32 0.0, %v3458
        %v3460 = vpop.f32.mrf.mxu0
        %3461 = vdwg.mxu0
        %v3463 = vsel %vm2146, %v3329, 0
        %3465 = vmatprep.subr.bf16.mxu0 0
        %3466 = vmatpush1.bf16.msra.mxu0 0
        %3467 = vmatprep.subr.bf16.mxu0 0
        %3468 = vmatpush1.bf16.msra.mxu0 0
        %3469 = vmatprep.subr.bf16.mxu0 0
        %3470 = vmatpush1.bf16.msra.mxu0 0
        %3471 = vmatprep.subr.bf16.mxu0 0
        %3472 = vmatpush1.bf16.msra.mxu0 0
        %3473 = vmatprep.subr.bf16.mxu0 0
        %3474 = vmatpush1.bf16.msra.mxu0 0
        %3475 = vmatprep.subr.bf16.mxu0 0
        %3476 = vmatpush1.bf16.msra.mxu0 0
        %3477 = vmatprep.subr.bf16.mxu0 0
        %3478 = vmatpush1.bf16.msra.mxu0 %v2797
        %3479 = vmatprep.subr.bf16.mxu0 0
        %3480 = vmatpush1.bf16.msra.mxu0 %v2796
        %3481 = vmatprep.subr.bf16.mxu0 0
        %3482 = vmatpush2.bf16.msra.mxu0 0
        %3483 = vmatprep.subr.bf16.mxu0 0
        %3484 = vmatpush2.bf16.msra.mxu0 0
        %3485 = vmatprep.subr.bf16.mxu0 0
        %3486 = vmatpush2.bf16.msra.mxu0 0
        %3487 = vmatprep.subr.bf16.mxu0 0
        %3488 = vmatpush2.bf16.msra.mxu0 0
        %3489 = vmatprep.subr.bf16.mxu0 0
        %3490 = vmatpush2.bf16.msra.mxu0 0
        %3491 = vmatprep.subr.bf16.mxu0 0
        %3492 = vmatpush2.bf16.msra.mxu0 0
        %3493 = vmatprep.subr.bf16.mxu0 0
        %3494 = vmatpush2.bf16.msra.mxu0 0
        %3495 = vmatprep.subr.bf16.mxu0 0
        %3496 = vmatpush2.bf16.msra.mxu0 0
        %3497 = vmatprep.mubr.bf16.mxu0 0
        %3498 = vmatmul.mubr.bf16.gmra.mxu0 %v3463
        %v3499 = vpop.f32.mrf.mxu0
        %v3500 = vadd.f32 0.0, %v3499
        %v3501 = vpop.f32.mrf.mxu0
        %v3502 = vpop.f32.mrf.mxu0
        %v3503 = vadd.f32 0.0, %v3502
        %v3504 = vpop.f32.mrf.mxu0
        %3505 = vdwg.mxu0
        %v3506 = vadd.f32 %v3368, %v3412
        %v3507 = vadd.f32 %v3506, %v3456
        %v3508 = vadd.f32 %v3507, %v3500
        %v3509 = vadd.f32 %v3371, %v3415
        %v3510 = vadd.f32 %v3509, %v3459
        %v3511 = vadd.f32 %v3510, %v3503
        %v3512 = vld [vmem:[%s645] sm:$0x1]
        %v3514 = vlaneseq
        %v3515 = vshrl.u32 %v3514, 7
        %v3516 = vsub.s32 0, %v3515
        %v3517 = vrot.slane %v3512, %v3516
        %v3519 = vadd.f32 %v2846, %v3517
        %v3520 = vadd.f32 %v2849, %v3517
        %v3521 = vadd.f32 %v3508, %v3517
        %v3522 = vadd.f32 %v3511, %v3517
        %v3523 = vadd.f32 %v682, %v3519
        %v3524 = vadd.f32 %v683, %v3520
        %v3525 = vadd.f32 %v684, %v3521
        %v3526 = vadd.f32 %v685, %v3522
        %v3527 = vld [vmem:[%s648] sm:$0x1]
        %v3528 = vld [vmem:[%s651] sm:$0x1]
        %3529 = vadd.xlane.f32.xlu0 %v3523
        %v3530 = vpop.xlane.xlu0 %3529
        %3531 = vadd.xlane.f32.xlu0 %v3524
        %v3532 = vpop.xlane.xlu0 %3531
        %3533 = vadd.xlane.f32.xlu0 %v3525
        %v3534 = vpop.xlane.xlu0 %3533
        %3535 = vadd.xlane.f32.xlu0 %v3526
        %v3536 = vpop.xlane.xlu0 %3535
        %v3537 = vmul.f32 %v3530, %v696
        %v3538 = vmul.f32 %v3532, %v696
        %v3539 = vmul.f32 %v3534, %v696
        %v3540 = vmul.f32 %v3536, %v696
        %v3541 = vsub.f32 %v3523, %v3537
        %v3542 = vsub.f32 %v3524, %v3538
        %v3543 = vsub.f32 %v3525, %v3539
        %v3544 = vsub.f32 %v3526, %v3540
        %v3545 = vmul.f32 %v3541, %v3541
        %v3546 = vmul.f32 %v3542, %v3542
        %v3547 = vmul.f32 %v3543, %v3543
        %v3548 = vmul.f32 %v3544, %v3544
        %3549 = vadd.xlane.f32.xlu0 %v3545
        %v3550 = vpop.xlane.xlu0 %3549
        %3551 = vadd.xlane.f32.xlu0 %v3546
        %v3552 = vpop.xlane.xlu0 %3551
        %3553 = vadd.xlane.f32.xlu0 %v3547
        %v3554 = vpop.xlane.xlu0 %3553
        %3555 = vadd.xlane.f32.xlu0 %v3548
        %v3556 = vpop.xlane.xlu0 %3555
        %v3557 = vmul.f32 %v3550, %v696
        %v3558 = vmul.f32 %v3552, %v696
        %v3559 = vmul.f32 %v3554, %v696
        %v3560 = vmul.f32 %v3556, %v696
        %v3561 = vadd.f32 %v3557, 1e-05
        %v3562 = vadd.f32 %v3558, 1e-05
        %v3563 = vadd.f32 %v3559, 1e-05
        %v3564 = vadd.f32 %v3560, 1e-05
        %v3565 = vrsqrt.pop %v3561
        %v3566 = vrsqrt.pop %v3562
        %v3567 = vrsqrt.pop %v3563
        %v3568 = vrsqrt.pop %v3564
        %v3569 = vmul.f32 %v3541, %v3565
        %v3570 = vmul.f32 %v3542, %v3566
        %v3571 = vmul.f32 %v3543, %v3567
        %v3572 = vmul.f32 %v3544, %v3568
        %v3574 = vlaneseq
        %v3575 = vshrl.u32 %v3574, 7
        %v3576 = vsub.s32 0, %v3575
        %v3577 = vrot.slane %v3527, %v3576
        %v3579 = vmul.f32 %v3569, %v3577
        %v3580 = vmul.f32 %v3570, %v3577
        %v3581 = vmul.f32 %v3571, %v3577
        %v3582 = vmul.f32 %v3572, %v3577
        %v3584 = vlaneseq
        %v3585 = vshrl.u32 %v3584, 7
        %v3586 = vsub.s32 0, %v3585
        %v3587 = vrot.slane %v3528, %v3586
        %v3589 = vadd.f32 %v3579, %v3587
        %v3590 = vadd.f32 %v3580, %v3587
        %v3591 = vadd.f32 %v3581, %v3587
        %v3592 = vadd.f32 %v3582, %v3587
        %v3593 = vpack.c.bf16 %v3590, %v3589
        %v3594 = vpack.c.bf16 %v3592, %v3591
        %v3595 = vld [vmem:[%s656] sm:$0xff]
        %v3596 = vld [vmem:[%s656 + $0x8] sm:$0xff]
        %v3597 = vld [vmem:[%s656 + $0x10] sm:$0xff]
        %v3598 = vld [vmem:[%s656 + $0x18] sm:$0xff]
        %v3599 = vld [vmem:[%s656 + $0x20] sm:$0xff]
        %v3600 = vld [vmem:[%s656 + $0x28] sm:$0xff]
        %v3601 = vld [vmem:[%s656 + $0x30] sm:$0xff]
        %v3602 = vld [vmem:[%s656 + $0x38] sm:$0xff]
        %v3603 = vld [vmem:[%s656 + $0x40] sm:$0xff]
        %v3604 = vld [vmem:[%s656 + $0x48] sm:$0xff]
        %v3605 = vld [vmem:[%s656 + $0x50] sm:$0xff]
        %v3606 = vld [vmem:[%s656 + $0x58] sm:$0xff]
        %v3607 = vld [vmem:[%s656 + $0x60] sm:$0xff]
        %v3608 = vld [vmem:[%s656 + $0x68] sm:$0xff]
        %v3609 = vld [vmem:[%s656 + $0x70] sm:$0xff]
        %v3610 = vld [vmem:[%s656 + $0x78] sm:$0xff]
        %v3611 = vld [vmem:[%s656 + $0x80] sm:$0xff]
        %v3612 = vld [vmem:[%s656 + $0x88] sm:$0xff]
        %v3613 = vld [vmem:[%s656 + $0x90] sm:$0xff]
        %v3614 = vld [vmem:[%s656 + $0x98] sm:$0xff]
        %v3615 = vld [vmem:[%s656 + $0xa0] sm:$0xff]
        %v3616 = vld [vmem:[%s656 + $0xa8] sm:$0xff]
        %v3617 = vld [vmem:[%s656 + $0xb0] sm:$0xff]
        %v3618 = vld [vmem:[%s656 + $0xb8] sm:$0xff]
        %v3619 = vld [vmem:[%s656 + $0xc0] sm:$0xff]
        %v3620 = vld [vmem:[%s656 + $0xc8] sm:$0xff]
        %v3621 = vld [vmem:[%s656 + $0xd0] sm:$0xff]
        %v3622 = vld [vmem:[%s656 + $0xd8] sm:$0xff]
        %v3623 = vld [vmem:[%s656 + $0xe0] sm:$0xff]
        %v3624 = vld [vmem:[%s656 + $0xe8] sm:$0xff]
        %v3625 = vld [vmem:[%s656 + $0xf0] sm:$0xff]
        %v3626 = vld [vmem:[%s656 + $0xf8] sm:$0xff]
        %v3627 = vld [vmem:[%s660] sm:$0xf]
        %v3629 = vlaneseq
        %v3630 = vshrl.u32 %v3629, 7
        %v3631 = vsub.s32 0, %v3630
        %v3632 = vrot.slane %v3627, %v3631
        %v3633 = vlaneseq
        %v3634 = vshrl.u32 %v3633, 7
        %v3635 = vsub.s32 1, %v3634
        %v3636 = vrot.slane %v3627, %v3635
        %v3637 = vlaneseq
        %v3638 = vshrl.u32 %v3637, 7
        %v3639 = vsub.s32 2, %v3638
        %v3640 = vrot.slane %v3627, %v3639
        %v3641 = vlaneseq
        %v3642 = vshrl.u32 %v3641, 7
        %v3643 = vsub.s32 3, %v3642
        %v3644 = vrot.slane %v3627, %v3643
        %v3681 = vunpack.c.l.b16 %v3595
        %v3682 = vunpack.c.h.b16 %v3595
        %v3683 = vunpack.c.l.b16 %v3596
        %v3684 = vunpack.c.h.b16 %v3596
        %v3685 = vunpack.c.l.b16 %v3597
        %v3686 = vunpack.c.h.b16 %v3597
        %v3687 = vunpack.c.l.b16 %v3598
        %v3688 = vunpack.c.h.b16 %v3598
        %v3689 = vunpack.c.l.b16 %v3599
        %v3690 = vunpack.c.h.b16 %v3599
        %v3691 = vunpack.c.l.b16 %v3600
        %v3692 = vunpack.c.h.b16 %v3600
        %v3693 = vunpack.c.l.b16 %v3601
        %v3694 = vunpack.c.h.b16 %v3601
        %v3695 = vunpack.c.l.b16 %v3602
        %v3696 = vunpack.c.h.b16 %v3602
        %v3697 = vunpack.c.l.b16 %v3603
        %v3698 = vunpack.c.h.b16 %v3603
        %v3699 = vunpack.c.l.b16 %v3604
        %v3700 = vunpack.c.h.b16 %v3604
        %v3701 = vunpack.c.l.b16 %v3605
        %v3702 = vunpack.c.h.b16 %v3605
        %v3703 = vunpack.c.l.b16 %v3606
        %v3704 = vunpack.c.h.b16 %v3606
        %v3705 = vunpack.c.l.b16 %v3607
        %v3706 = vunpack.c.h.b16 %v3607
        %v3707 = vunpack.c.l.b16 %v3608
        %v3708 = vunpack.c.h.b16 %v3608
        %v3709 = vunpack.c.l.b16 %v3609
        %v3710 = vunpack.c.h.b16 %v3609
        %v3711 = vunpack.c.l.b16 %v3610
        %v3712 = vunpack.c.h.b16 %v3610
        %v3713 = vunpack.c.l.b16 %v3611
        %v3714 = vunpack.c.h.b16 %v3611
        %v3715 = vunpack.c.l.b16 %v3612
        %v3716 = vunpack.c.h.b16 %v3612
        %v3717 = vunpack.c.l.b16 %v3613
        %v3718 = vunpack.c.h.b16 %v3613
        %v3719 = vunpack.c.l.b16 %v3614
        %v3720 = vunpack.c.h.b16 %v3614
        %v3721 = vunpack.c.l.b16 %v3615
        %v3722 = vunpack.c.h.b16 %v3615
        %v3723 = vunpack.c.l.b16 %v3616
        %v3724 = vunpack.c.h.b16 %v3616
        %v3725 = vunpack.c.l.b16 %v3617
        %v3726 = vunpack.c.h.b16 %v3617
        %v3727 = vunpack.c.l.b16 %v3618
        %v3728 = vunpack.c.h.b16 %v3618
        %v3729 = vunpack.c.l.b16 %v3619
        %v3730 = vunpack.c.h.b16 %v3619
        %v3731 = vunpack.c.l.b16 %v3620
        %v3732 = vunpack.c.h.b16 %v3620
        %v3733 = vunpack.c.l.b16 %v3621
        %v3734 = vunpack.c.h.b16 %v3621
        %v3735 = vunpack.c.l.b16 %v3622
        %v3736 = vunpack.c.h.b16 %v3622
        %v3737 = vunpack.c.l.b16 %v3623
        %v3738 = vunpack.c.h.b16 %v3623
        %v3739 = vunpack.c.l.b16 %v3624
        %v3740 = vunpack.c.h.b16 %v3624
        %v3741 = vunpack.c.l.b16 %v3625
        %v3742 = vunpack.c.h.b16 %v3625
        %v3743 = vunpack.c.l.b16 %v3626
        %v3744 = vunpack.c.h.b16 %v3626
        %v3745 = vpack.c.b16 %v3685, %v3681
        %v3746 = vpack.c.b16 %v3686, %v3682
        %v3747 = vpack.c.b16 %v3687, %v3683
        %v3748 = vpack.c.b16 %v3688, %v3684
        %v3749 = vpack.c.b16 %v3693, %v3689
        %v3750 = vpack.c.b16 %v3694, %v3690
        %v3751 = vpack.c.b16 %v3695, %v3691
        %v3752 = vpack.c.b16 %v3696, %v3692
        %v3753 = vpack.c.b16 %v3701, %v3697
        %v3754 = vpack.c.b16 %v3702, %v3698
        %v3755 = vpack.c.b16 %v3703, %v3699
        %v3756 = vpack.c.b16 %v3704, %v3700
        %v3757 = vpack.c.b16 %v3709, %v3705
        %v3758 = vpack.c.b16 %v3710, %v3706
        %v3759 = vpack.c.b16 %v3711, %v3707
        %v3760 = vpack.c.b16 %v3712, %v3708
        %v3761 = vpack.c.b16 %v3717, %v3713
        %v3762 = vpack.c.b16 %v3718, %v3714
        %v3763 = vpack.c.b16 %v3719, %v3715
        %v3764 = vpack.c.b16 %v3720, %v3716
        %v3765 = vpack.c.b16 %v3725, %v3721
        %v3766 = vpack.c.b16 %v3726, %v3722
        %v3767 = vpack.c.b16 %v3727, %v3723
        %v3768 = vpack.c.b16 %v3728, %v3724
        %v3769 = vpack.c.b16 %v3733, %v3729
        %v3770 = vpack.c.b16 %v3734, %v3730
        %v3771 = vpack.c.b16 %v3735, %v3731
        %v3772 = vpack.c.b16 %v3736, %v3732
        %v3773 = vpack.c.b16 %v3741, %v3737
        %v3774 = vpack.c.b16 %v3742, %v3738
        %v3775 = vpack.c.b16 %v3743, %v3739
        %v3776 = vpack.c.b16 %v3744, %v3740
        %3809 = vmatprep.subr.bf16.mxu0 %v3774
        %3810 = vmatpush1.bf16.msra.mxu0 %v3773
        %3811 = vmatprep.subr.bf16.mxu0 %v3770
        %3812 = vmatpush1.bf16.msra.mxu0 %v3769
        %3813 = vmatprep.subr.bf16.mxu0 %v3766
        %3814 = vmatpush1.bf16.msra.mxu0 %v3765
        %3815 = vmatprep.subr.bf16.mxu0 %v3762
        %3816 = vmatpush1.bf16.msra.mxu0 %v3761
        %3817 = vmatprep.subr.bf16.mxu0 %v3758
        %3818 = vmatpush1.bf16.msra.mxu0 %v3757
        %3819 = vmatprep.subr.bf16.mxu0 %v3754
        %3820 = vmatpush1.bf16.msra.mxu0 %v3753
        %3821 = vmatprep.subr.bf16.mxu0 %v3750
        %3822 = vmatpush1.bf16.msra.mxu0 %v3749
        %3823 = vmatprep.subr.bf16.mxu0 %v3746
        %3824 = vmatpush1.bf16.msra.mxu0 %v3745
        %3825 = vmatprep.subr.bf16.mxu0 0
        %3826 = vmatpush2.bf16.msra.mxu0 0
        %3827 = vmatprep.subr.bf16.mxu0 0
        %3828 = vmatpush2.bf16.msra.mxu0 0
        %3829 = vmatprep.subr.bf16.mxu0 0
        %3830 = vmatpush2.bf16.msra.mxu0 0
        %3831 = vmatprep.subr.bf16.mxu0 0
        %3832 = vmatpush2.bf16.msra.mxu0 0
        %3833 = vmatprep.subr.bf16.mxu0 0
        %3834 = vmatpush2.bf16.msra.mxu0 0
        %3835 = vmatprep.subr.bf16.mxu0 0
        %3836 = vmatpush2.bf16.msra.mxu0 0
        %3837 = vmatprep.subr.bf16.mxu0 0
        %3838 = vmatpush2.bf16.msra.mxu0 0
        %3839 = vmatprep.subr.bf16.mxu0 0
        %3840 = vmatpush2.bf16.msra.mxu0 0
        %3841 = vmatprep.mubr.bf16.mxu0 0
        %3842 = vmatmul.mubr.bf16.gmra.mxu0 %v3593
        %v3843 = vpop.f32.mrf.mxu0
        %v3844 = vadd.f32 %v3632, %v3843
        %v3845 = vpop.f32.mrf.mxu0
        %v3846 = vadd.f32 %v3636, %v3845
        %v3847 = vpop.f32.mrf.mxu0
        %v3848 = vadd.f32 %v3632, %v3847
        %v3849 = vpop.f32.mrf.mxu0
        %v3850 = vadd.f32 %v3636, %v3849
        %3851 = vmatprep.mubr.bf16.mxu0 0
        %3852 = vmatmul.mubr.bf16.gmra.mxu0 %v3594
        %v3853 = vpop.f32.mrf.mxu0
        %v3854 = vadd.f32 %v3632, %v3853
        %v3855 = vpop.f32.mrf.mxu0
        %v3856 = vadd.f32 %v3636, %v3855
        %v3857 = vpop.f32.mrf.mxu0
        %v3858 = vadd.f32 %v3632, %v3857
        %v3859 = vpop.f32.mrf.mxu0
        %v3860 = vadd.f32 %v3636, %v3859
        %3861 = vdwg.mxu0
        %3862 = vmatprep.subr.bf16.mxu0 %v3776
        %3863 = vmatpush1.bf16.msra.mxu0 %v3775
        %3864 = vmatprep.subr.bf16.mxu0 %v3772
        %3865 = vmatpush1.bf16.msra.mxu0 %v3771
        %3866 = vmatprep.subr.bf16.mxu0 %v3768
        %3867 = vmatpush1.bf16.msra.mxu0 %v3767
        %3868 = vmatprep.subr.bf16.mxu0 %v3764
        %3869 = vmatpush1.bf16.msra.mxu0 %v3763
        %3870 = vmatprep.subr.bf16.mxu0 %v3760
        %3871 = vmatpush1.bf16.msra.mxu0 %v3759
        %3872 = vmatprep.subr.bf16.mxu0 %v3756
        %3873 = vmatpush1.bf16.msra.mxu0 %v3755
        %3874 = vmatprep.subr.bf16.mxu0 %v3752
        %3875 = vmatpush1.bf16.msra.mxu0 %v3751
        %3876 = vmatprep.subr.bf16.mxu0 %v3748
        %3877 = vmatpush1.bf16.msra.mxu0 %v3747
        %3878 = vmatprep.subr.bf16.mxu0 0
        %3879 = vmatpush2.bf16.msra.mxu0 0
        %3880 = vmatprep.subr.bf16.mxu0 0
        %3881 = vmatpush2.bf16.msra.mxu0 0
        %3882 = vmatprep.subr.bf16.mxu0 0
        %3883 = vmatpush2.bf16.msra.mxu0 0
        %3884 = vmatprep.subr.bf16.mxu0 0
        %3885 = vmatpush2.bf16.msra.mxu0 0
        %3886 = vmatprep.subr.bf16.mxu0 0
        %3887 = vmatpush2.bf16.msra.mxu0 0
        %3888 = vmatprep.subr.bf16.mxu0 0
        %3889 = vmatpush2.bf16.msra.mxu0 0
        %3890 = vmatprep.subr.bf16.mxu0 0
        %3891 = vmatpush2.bf16.msra.mxu0 0
        %3892 = vmatprep.subr.bf16.mxu0 0
        %3893 = vmatpush2.bf16.msra.mxu0 0
        %3894 = vmatprep.mubr.bf16.mxu0 0
        %3895 = vmatmul.mubr.bf16.gmra.mxu0 %v3593
        %v3896 = vpop.f32.mrf.mxu0
        %v3897 = vadd.f32 %v3640, %v3896
        %v3898 = vpop.f32.mrf.mxu0
        %v3899 = vadd.f32 %v3644, %v3898
        %v3900 = vpop.f32.mrf.mxu0
        %v3901 = vadd.f32 %v3640, %v3900
        %v3902 = vpop.f32.mrf.mxu0
        %v3903 = vadd.f32 %v3644, %v3902
        %3904 = vmatprep.mubr.bf16.mxu0 0
        %3905 = vmatmul.mubr.bf16.gmra.mxu0 %v3594
        %v3906 = vpop.f32.mrf.mxu0
        %v3907 = vadd.f32 %v3640, %v3906
        %v3908 = vpop.f32.mrf.mxu0
        %v3909 = vadd.f32 %v3644, %v3908
        %v3910 = vpop.f32.mrf.mxu0
        %v3911 = vadd.f32 %v3640, %v3910
        %v3912 = vpop.f32.mrf.mxu0
        %v3913 = vadd.f32 %v3644, %v3912
        %3914 = vdwg.mxu0
        %v3915 = vmax.f32 %v3844, 0.0
        %v3916 = vmax.f32 %v3846, 0.0
        %v3917 = vmax.f32 %v3897, 0.0
        %v3918 = vmax.f32 %v3899, 0.0
        %v3919 = vmax.f32 %v3848, 0.0
        %v3920 = vmax.f32 %v3850, 0.0
        %v3921 = vmax.f32 %v3901, 0.0
        %v3922 = vmax.f32 %v3903, 0.0
        %v3923 = vmax.f32 %v3854, 0.0
        %v3924 = vmax.f32 %v3856, 0.0
        %v3925 = vmax.f32 %v3907, 0.0
        %v3926 = vmax.f32 %v3909, 0.0
        %v3927 = vmax.f32 %v3858, 0.0
        %v3928 = vmax.f32 %v3860, 0.0
        %v3929 = vmax.f32 %v3911, 0.0
        %v3930 = vmax.f32 %v3913, 0.0
        %v3931 = vpack.c.bf16 %v3919, %v3915
        %v3932 = vpack.c.bf16 %v3920, %v3916
        %v3933 = vpack.c.bf16 %v3921, %v3917
        %v3934 = vpack.c.bf16 %v3922, %v3918
        %v3935 = vpack.c.bf16 %v3927, %v3923
        %v3936 = vpack.c.bf16 %v3928, %v3924
        %v3937 = vpack.c.bf16 %v3929, %v3925
        %v3938 = vpack.c.bf16 %v3930, %v3926
        %v3939 = vld [vmem:[%s665] sm:$0xf]
        %v3940 = vld [vmem:[%s665 + $0x4] sm:$0xf]
        %v3941 = vld [vmem:[%s665 + $0x8] sm:$0xf]
        %v3942 = vld [vmem:[%s665 + $0xc] sm:$0xf]
        %v3943 = vld [vmem:[%s665 + $0x10] sm:$0xf]
        %v3944 = vld [vmem:[%s665 + $0x14] sm:$0xf]
        %v3945 = vld [vmem:[%s665 + $0x18] sm:$0xf]
        %v3946 = vld [vmem:[%s665 + $0x1c] sm:$0xf]
        %v3947 = vld [vmem:[%s665 + $0x20] sm:$0xf]
        %v3948 = vld [vmem:[%s665 + $0x24] sm:$0xf]
        %v3949 = vld [vmem:[%s665 + $0x28] sm:$0xf]
        %v3950 = vld [vmem:[%s665 + $0x2c] sm:$0xf]
        %v3951 = vld [vmem:[%s665 + $0x30] sm:$0xf]
        %v3952 = vld [vmem:[%s665 + $0x34] sm:$0xf]
        %v3953 = vld [vmem:[%s665 + $0x38] sm:$0xf]
        %v3954 = vld [vmem:[%s665 + $0x3c] sm:$0xf]
        %v3955 = vld [vmem:[%s665 + $0x40] sm:$0xf]
        %v3956 = vld [vmem:[%s665 + $0x44] sm:$0xf]
        %v3957 = vld [vmem:[%s665 + $0x48] sm:$0xf]
        %v3958 = vld [vmem:[%s665 + $0x4c] sm:$0xf]
        %v3959 = vld [vmem:[%s665 + $0x50] sm:$0xf]
        %v3960 = vld [vmem:[%s665 + $0x54] sm:$0xf]
        %v3961 = vld [vmem:[%s665 + $0x58] sm:$0xf]
        %v3962 = vld [vmem:[%s665 + $0x5c] sm:$0xf]
        %v3963 = vld [vmem:[%s665 + $0x60] sm:$0xf]
        %v3964 = vld [vmem:[%s665 + $0x64] sm:$0xf]
        %v3965 = vld [vmem:[%s665 + $0x68] sm:$0xf]
        %v3966 = vld [vmem:[%s665 + $0x6c] sm:$0xf]
        %v3967 = vld [vmem:[%s665 + $0x70] sm:$0xf]
        %v3968 = vld [vmem:[%s665 + $0x74] sm:$0xf]
        %v3969 = vld [vmem:[%s665 + $0x78] sm:$0xf]
        %v3970 = vld [vmem:[%s665 + $0x7c] sm:$0xf]
        %v3971 = vld [vmem:[%s665 + $0x80] sm:$0xf]
        %v3972 = vld [vmem:[%s665 + $0x84] sm:$0xf]
        %v3973 = vld [vmem:[%s665 + $0x88] sm:$0xf]
        %v3974 = vld [vmem:[%s665 + $0x8c] sm:$0xf]
        %v3975 = vld [vmem:[%s665 + $0x90] sm:$0xf]
        %v3976 = vld [vmem:[%s665 + $0x94] sm:$0xf]
        %v3977 = vld [vmem:[%s665 + $0x98] sm:$0xf]
        %v3978 = vld [vmem:[%s665 + $0x9c] sm:$0xf]
        %v3979 = vld [vmem:[%s665 + $0xa0] sm:$0xf]
        %v3980 = vld [vmem:[%s665 + $0xa4] sm:$0xf]
        %v3981 = vld [vmem:[%s665 + $0xa8] sm:$0xf]
        %v3982 = vld [vmem:[%s665 + $0xac] sm:$0xf]
        %v3983 = vld [vmem:[%s665 + $0xb0] sm:$0xf]
        %v3984 = vld [vmem:[%s665 + $0xb4] sm:$0xf]
        %v3985 = vld [vmem:[%s665 + $0xb8] sm:$0xf]
        %v3986 = vld [vmem:[%s665 + $0xbc] sm:$0xf]
        %v3987 = vld [vmem:[%s665 + $0xc0] sm:$0xf]
        %v3988 = vld [vmem:[%s665 + $0xc4] sm:$0xf]
        %v3989 = vld [vmem:[%s665 + $0xc8] sm:$0xf]
        %v3990 = vld [vmem:[%s665 + $0xcc] sm:$0xf]
        %v3991 = vld [vmem:[%s665 + $0xd0] sm:$0xf]
        %v3992 = vld [vmem:[%s665 + $0xd4] sm:$0xf]
        %v3993 = vld [vmem:[%s665 + $0xd8] sm:$0xf]
        %v3994 = vld [vmem:[%s665 + $0xdc] sm:$0xf]
        %v3995 = vld [vmem:[%s665 + $0xe0] sm:$0xf]
        %v3996 = vld [vmem:[%s665 + $0xe4] sm:$0xf]
        %v3997 = vld [vmem:[%s665 + $0xe8] sm:$0xf]
        %v3998 = vld [vmem:[%s665 + $0xec] sm:$0xf]
        %v3999 = vld [vmem:[%s665 + $0xf0] sm:$0xf]
        %v4000 = vld [vmem:[%s665 + $0xf4] sm:$0xf]
        %v4001 = vld [vmem:[%s665 + $0xf8] sm:$0xf]
        %v4002 = vld [vmem:[%s665 + $0xfc] sm:$0xf]
        %v4003 = vld [vmem:[%s668] sm:$0x1]
        %v4005 = vlaneseq
        %v4006 = vshrl.u32 %v4005, 7
        %v4007 = vsub.s32 0, %v4006
        %v4008 = vrot.slane %v4003, %v4007
        %v4074 = vunpack.c.l.b16 %v3939
        %v4075 = vunpack.c.l.b16 %v3940
        %v4076 = vunpack.c.l.b16 %v3941
        %v4077 = vunpack.c.l.b16 %v3942
        %v4078 = vunpack.c.l.b16 %v3943
        %v4079 = vunpack.c.l.b16 %v3944
        %v4080 = vunpack.c.l.b16 %v3945
        %v4081 = vunpack.c.l.b16 %v3946
        %v4082 = vunpack.c.l.b16 %v3947
        %v4083 = vunpack.c.l.b16 %v3948
        %v4084 = vunpack.c.l.b16 %v3949
        %v4085 = vunpack.c.l.b16 %v3950
        %v4086 = vunpack.c.l.b16 %v3951
        %v4087 = vunpack.c.l.b16 %v3952
        %v4088 = vunpack.c.l.b16 %v3953
        %v4089 = vunpack.c.l.b16 %v3954
        %v4090 = vunpack.c.l.b16 %v3955
        %v4091 = vunpack.c.l.b16 %v3956
        %v4092 = vunpack.c.l.b16 %v3957
        %v4093 = vunpack.c.l.b16 %v3958
        %v4094 = vunpack.c.l.b16 %v3959
        %v4095 = vunpack.c.l.b16 %v3960
        %v4096 = vunpack.c.l.b16 %v3961
        %v4097 = vunpack.c.l.b16 %v3962
        %v4098 = vunpack.c.l.b16 %v3963
        %v4099 = vunpack.c.l.b16 %v3964
        %v4100 = vunpack.c.l.b16 %v3965
        %v4101 = vunpack.c.l.b16 %v3966
        %v4102 = vunpack.c.l.b16 %v3967
        %v4103 = vunpack.c.l.b16 %v3968
        %v4104 = vunpack.c.l.b16 %v3969
        %v4105 = vunpack.c.l.b16 %v3970
        %v4106 = vunpack.c.l.b16 %v3971
        %v4107 = vunpack.c.l.b16 %v3972
        %v4108 = vunpack.c.l.b16 %v3973
        %v4109 = vunpack.c.l.b16 %v3974
        %v4110 = vunpack.c.l.b16 %v3975
        %v4111 = vunpack.c.l.b16 %v3976
        %v4112 = vunpack.c.l.b16 %v3977
        %v4113 = vunpack.c.l.b16 %v3978
        %v4114 = vunpack.c.l.b16 %v3979
        %v4115 = vunpack.c.l.b16 %v3980
        %v4116 = vunpack.c.l.b16 %v3981
        %v4117 = vunpack.c.l.b16 %v3982
        %v4118 = vunpack.c.l.b16 %v3983
        %v4119 = vunpack.c.l.b16 %v3984
        %v4120 = vunpack.c.l.b16 %v3985
        %v4121 = vunpack.c.l.b16 %v3986
        %v4122 = vunpack.c.l.b16 %v3987
        %v4123 = vunpack.c.l.b16 %v3988
        %v4124 = vunpack.c.l.b16 %v3989
        %v4125 = vunpack.c.l.b16 %v3990
        %v4126 = vunpack.c.l.b16 %v3991
        %v4127 = vunpack.c.l.b16 %v3992
        %v4128 = vunpack.c.l.b16 %v3993
        %v4129 = vunpack.c.l.b16 %v3994
        %v4130 = vunpack.c.l.b16 %v3995
        %v4131 = vunpack.c.l.b16 %v3996
        %v4132 = vunpack.c.l.b16 %v3997
        %v4133 = vunpack.c.l.b16 %v3998
        %v4134 = vunpack.c.l.b16 %v3999
        %v4135 = vunpack.c.l.b16 %v4000
        %v4136 = vunpack.c.l.b16 %v4001
        %v4137 = vunpack.c.l.b16 %v4002
        %v4138 = vpack.c.b16 %v4075, %v4074
        %v4139 = vpack.c.b16 %v4077, %v4076
        %v4140 = vpack.c.b16 %v4079, %v4078
        %v4141 = vpack.c.b16 %v4081, %v4080
        %v4142 = vpack.c.b16 %v4083, %v4082
        %v4143 = vpack.c.b16 %v4085, %v4084
        %v4144 = vpack.c.b16 %v4087, %v4086
        %v4145 = vpack.c.b16 %v4089, %v4088
        %v4146 = vpack.c.b16 %v4091, %v4090
        %v4147 = vpack.c.b16 %v4093, %v4092
        %v4148 = vpack.c.b16 %v4095, %v4094
        %v4149 = vpack.c.b16 %v4097, %v4096
        %v4150 = vpack.c.b16 %v4099, %v4098
        %v4151 = vpack.c.b16 %v4101, %v4100
        %v4152 = vpack.c.b16 %v4103, %v4102
        %v4153 = vpack.c.b16 %v4105, %v4104
        %v4154 = vpack.c.b16 %v4107, %v4106
        %v4155 = vpack.c.b16 %v4109, %v4108
        %v4156 = vpack.c.b16 %v4111, %v4110
        %v4157 = vpack.c.b16 %v4113, %v4112
        %v4158 = vpack.c.b16 %v4115, %v4114
        %v4159 = vpack.c.b16 %v4117, %v4116
        %v4160 = vpack.c.b16 %v4119, %v4118
        %v4161 = vpack.c.b16 %v4121, %v4120
        %v4162 = vpack.c.b16 %v4123, %v4122
        %v4163 = vpack.c.b16 %v4125, %v4124
        %v4164 = vpack.c.b16 %v4127, %v4126
        %v4165 = vpack.c.b16 %v4129, %v4128
        %v4166 = vpack.c.b16 %v4131, %v4130
        %v4167 = vpack.c.b16 %v4133, %v4132
        %v4168 = vpack.c.b16 %v4135, %v4134
        %v4169 = vpack.c.b16 %v4137, %v4136
        %4202 = vmatprep.subr.bf16.mxu0 0
        %4203 = vmatpush1.bf16.msra.mxu0 %v4145
        %4204 = vmatprep.subr.bf16.mxu0 0
        %4205 = vmatpush1.bf16.msra.mxu0 %v4144
        %4206 = vmatprep.subr.bf16.mxu0 0
        %4207 = vmatpush1.bf16.msra.mxu0 %v4143
        %4208 = vmatprep.subr.bf16.mxu0 0
        %4209 = vmatpush1.bf16.msra.mxu0 %v4142
        %4210 = vmatprep.subr.bf16.mxu0 0
        %4211 = vmatpush1.bf16.msra.mxu0 %v4141
        %4212 = vmatprep.subr.bf16.mxu0 0
        %4213 = vmatpush1.bf16.msra.mxu0 %v4140
        %4214 = vmatprep.subr.bf16.mxu0 0
        %4215 = vmatpush1.bf16.msra.mxu0 %v4139
        %4216 = vmatprep.subr.bf16.mxu0 0
        %4217 = vmatpush1.bf16.msra.mxu0 %v4138
        %4218 = vmatprep.subr.bf16.mxu0 0
        %4219 = vmatpush2.bf16.msra.mxu0 %v4153
        %4220 = vmatprep.subr.bf16.mxu0 0
        %4221 = vmatpush2.bf16.msra.mxu0 %v4152
        %4222 = vmatprep.subr.bf16.mxu0 0
        %4223 = vmatpush2.bf16.msra.mxu0 %v4151
        %4224 = vmatprep.subr.bf16.mxu0 0
        %4225 = vmatpush2.bf16.msra.mxu0 %v4150
        %4226 = vmatprep.subr.bf16.mxu0 0
        %4227 = vmatpush2.bf16.msra.mxu0 %v4149
        %4228 = vmatprep.subr.bf16.mxu0 0
        %4229 = vmatpush2.bf16.msra.mxu0 %v4148
        %4230 = vmatprep.subr.bf16.mxu0 0
        %4231 = vmatpush2.bf16.msra.mxu0 %v4147
        %4232 = vmatprep.subr.bf16.mxu0 0
        %4233 = vmatpush2.bf16.msra.mxu0 %v4146
        %4234 = vmatprep.mubr.bf16.mxu0 %v3932
        %4235 = vmatmul.mubr.bf16.gmra.mxu0 %v3931
        %v4236 = vpop.f32.mrf.mxu0
        %v4237 = vadd.f32 %v4008, %v4236
        %v4238 = vpop.f32.mrf.mxu0
        %v4239 = vpop.f32.mrf.mxu0
        %v4240 = vadd.f32 %v4008, %v4239
        %v4241 = vpop.f32.mrf.mxu0
        %4242 = vmatprep.mubr.bf16.mxu0 %v3936
        %4243 = vmatmul.mubr.bf16.gmra.mxu0 %v3935
        %v4244 = vpop.f32.mrf.mxu0
        %v4245 = vadd.f32 %v4008, %v4244
        %v4246 = vpop.f32.mrf.mxu0
        %v4247 = vpop.f32.mrf.mxu0
        %v4248 = vadd.f32 %v4008, %v4247
        %v4249 = vpop.f32.mrf.mxu0
        %4250 = vdwg.mxu0
        %4251 = vmatprep.subr.bf16.mxu0 0
        %4252 = vmatpush1.bf16.msra.mxu0 %v4161
        %4253 = vmatprep.subr.bf16.mxu0 0
        %4254 = vmatpush1.bf16.msra.mxu0 %v4160
        %4255 = vmatprep.subr.bf16.mxu0 0
        %4256 = vmatpush1.bf16.msra.mxu0 %v4159
        %4257 = vmatprep.subr.bf16.mxu0 0
        %4258 = vmatpush1.bf16.msra.mxu0 %v4158
        %4259 = vmatprep.subr.bf16.mxu0 0
        %4260 = vmatpush1.bf16.msra.mxu0 %v4157
        %4261 = vmatprep.subr.bf16.mxu0 0
        %4262 = vmatpush1.bf16.msra.mxu0 %v4156
        %4263 = vmatprep.subr.bf16.mxu0 0
        %4264 = vmatpush1.bf16.msra.mxu0 %v4155
        %4265 = vmatprep.subr.bf16.mxu0 0
        %4266 = vmatpush1.bf16.msra.mxu0 %v4154
        %4267 = vmatprep.subr.bf16.mxu0 0
        %4268 = vmatpush2.bf16.msra.mxu0 %v4169
        %4269 = vmatprep.subr.bf16.mxu0 0
        %4270 = vmatpush2.bf16.msra.mxu0 %v4168
        %4271 = vmatprep.subr.bf16.mxu0 0
        %4272 = vmatpush2.bf16.msra.mxu0 %v4167
        %4273 = vmatprep.subr.bf16.mxu0 0
        %4274 = vmatpush2.bf16.msra.mxu0 %v4166
        %4275 = vmatprep.subr.bf16.mxu0 0
        %4276 = vmatpush2.bf16.msra.mxu0 %v4165
        %4277 = vmatprep.subr.bf16.mxu0 0
        %4278 = vmatpush2.bf16.msra.mxu0 %v4164
        %4279 = vmatprep.subr.bf16.mxu0 0
        %4280 = vmatpush2.bf16.msra.mxu0 %v4163
        %4281 = vmatprep.subr.bf16.mxu0 0
        %4282 = vmatpush2.bf16.msra.mxu0 %v4162
        %4283 = vmatprep.mubr.bf16.mxu0 %v3934
        %4284 = vmatmul.mubr.bf16.gmra.mxu0 %v3933
        %v4285 = vpop.f32.mrf.mxu0
        %v4286 = vadd.f32 %v4237, %v4285
        %v4287 = vpop.f32.mrf.mxu0
        %v4288 = vpop.f32.mrf.mxu0
        %v4289 = vadd.f32 %v4240, %v4288
        %v4290 = vpop.f32.mrf.mxu0
        %4291 = vmatprep.mubr.bf16.mxu0 %v3938
        %4292 = vmatmul.mubr.bf16.gmra.mxu0 %v3937
        %v4293 = vpop.f32.mrf.mxu0
        %v4294 = vadd.f32 %v4245, %v4293
        %v4295 = vpop.f32.mrf.mxu0
        %v4296 = vpop.f32.mrf.mxu0
        %v4297 = vadd.f32 %v4248, %v4296
        %v4298 = vpop.f32.mrf.mxu0
        %4299 = vdwg.mxu0
        %v4300 = vadd.f32 %v3523, %v4286
        %v4301 = vadd.f32 %v3524, %v4289
        %v4302 = vadd.f32 %v3525, %v4294
        %v4303 = vadd.f32 %v3526, %v4297
        %4304 = vst [vmem:[#allocation2] sm:$0xff] %v4300
        %4305 = vst [vmem:[#allocation2 + $0x8] sm:$0xff] %v4301
        %4306 = vst [vmem:[#allocation2 + $0x10] sm:$0xff] %v4302
        %4307 = vst [vmem:[#allocation2 + $0x18] sm:$0xff] %v4303
        %p4308 = scmp.eq.s32.totalorder %s28, 1
        // Predicated region
        $region89: #{tiny_gpt_forward.1} parent=83 // pred_check
          %p4309 = pneg %p4308
        $region90: #{tiny_gpt_forward.1} parent=83 // pred_check_branch
          %4311 = sbr.rel (%p4309) target = $region92
        $region91: #{tiny_gpt_forward.1} parent=83 // pred_region
          %v4312 = vld [vmem:[%s12] sm:$0x1]
          %v4313 = vld [vmem:[%s13] sm:$0x1]
          %4314 = vadd.xlane.f32.xlu0 %v4300
          %v4315 = vpop.xlane.xlu0 %4314
          %4316 = vadd.xlane.f32.xlu0 %v4301
          %v4317 = vpop.xlane.xlu0 %4316
          %4318 = vadd.xlane.f32.xlu0 %v4302
          %v4319 = vpop.xlane.xlu0 %4318
          %4320 = vadd.xlane.f32.xlu0 %v4303
          %v4321 = vpop.xlane.xlu0 %4320
          %v4322 = vmul.f32 %v4315, %v696
          %v4323 = vmul.f32 %v4317, %v696
          %v4324 = vmul.f32 %v4319, %v696
          %v4325 = vmul.f32 %v4321, %v696
          %v4326 = vsub.f32 %v4300, %v4322
          %v4327 = vsub.f32 %v4301, %v4323
          %v4328 = vsub.f32 %v4302, %v4324
          %v4329 = vsub.f32 %v4303, %v4325
          %v4330 = vmul.f32 %v4326, %v4326
          %v4331 = vmul.f32 %v4327, %v4327
          %v4332 = vmul.f32 %v4328, %v4328
          %v4333 = vmul.f32 %v4329, %v4329
          %4334 = vadd.xlane.f32.xlu0 %v4330
          %v4335 = vpop.xlane.xlu0 %4334
          %4336 = vadd.xlane.f32.xlu0 %v4331
          %v4337 = vpop.xlane.xlu0 %4336
          %4338 = vadd.xlane.f32.xlu0 %v4332
          %v4339 = vpop.xlane.xlu0 %4338
          %4340 = vadd.xlane.f32.xlu0 %v4333
          %v4341 = vpop.xlane.xlu0 %4340
          %v4342 = vmul.f32 %v4335, %v696
          %v4343 = vmul.f32 %v4337, %v696
          %v4344 = vmul.f32 %v4339, %v696
          %v4345 = vmul.f32 %v4341, %v696
          %v4346 = vadd.f32 %v4342, 1e-05
          %v4347 = vadd.f32 %v4343, 1e-05
          %v4348 = vadd.f32 %v4344, 1e-05
          %v4349 = vadd.f32 %v4345, 1e-05
          %v4350 = vrsqrt.pop %v4346
          %v4351 = vrsqrt.pop %v4347
          %v4352 = vrsqrt.pop %v4348
          %v4353 = vrsqrt.pop %v4349
          %v4354 = vmul.f32 %v4326, %v4350
          %v4355 = vmul.f32 %v4327, %v4351
          %v4356 = vmul.f32 %v4328, %v4352
          %v4357 = vmul.f32 %v4329, %v4353
          %v4359 = vlaneseq
          %v4360 = vshrl.u32 %v4359, 7
          %v4361 = vsub.s32 0, %v4360
          %v4362 = vrot.slane %v4312, %v4361
          %v4364 = vmul.f32 %v4354, %v4362
          %v4365 = vmul.f32 %v4355, %v4362
          %v4366 = vmul.f32 %v4356, %v4362
          %v4367 = vmul.f32 %v4357, %v4362
          %v4369 = vlaneseq
          %v4370 = vshrl.u32 %v4369, 7
          %v4371 = vsub.s32 0, %v4370
          %v4372 = vrot.slane %v4313, %v4371
          %v4374 = vadd.f32 %v4364, %v4372
          %v4375 = vadd.f32 %v4365, %v4372
          %v4376 = vadd.f32 %v4366, %v4372
          %v4377 = vadd.f32 %v4367, %v4372
          %v4378 = vpack.c.bf16 %v4375, %v4374
          %v4379 = vpack.c.bf16 %v4377, %v4376
          %v4380 = vld [vmem:[%s14] sm:$0xf]
          %v4381 = vld [vmem:[%s14 + $0x4] sm:$0xf]
          %v4382 = vld [vmem:[%s14 + $0x8] sm:$0xf]
          %v4383 = vld [vmem:[%s14 + $0xc] sm:$0xf]
          %v4384 = vld [vmem:[%s14 + $0x10] sm:$0xf]
          %v4385 = vld [vmem:[%s14 + $0x14] sm:$0xf]
          %v4386 = vld [vmem:[%s14 + $0x18] sm:$0xf]
          %v4387 = vld [vmem:[%s14 + $0x1c] sm:$0xf]
          %v4388 = vld [vmem:[%s14 + $0x20] sm:$0xf]
          %v4389 = vld [vmem:[%s14 + $0x24] sm:$0xf]
          %v4390 = vld [vmem:[%s14 + $0x28] sm:$0xf]
          %v4391 = vld [vmem:[%s14 + $0x2c] sm:$0xf]
          %v4392 = vld [vmem:[%s14 + $0x30] sm:$0xf]
          %v4393 = vld [vmem:[%s14 + $0x34] sm:$0xf]
          %v4394 = vld [vmem:[%s14 + $0x38] sm:$0xf]
          %v4395 = vld [vmem:[%s14 + $0x3c] sm:$0xf]
          %v4396 = vld [vmem:[%s15] sm:$0x1]
          %v4398 = vlaneseq
          %v4399 = vshrl.u32 %v4398, 7
          %v4400 = vsub.s32 0, %v4399
          %v4401 = vrot.slane %v4396, %v4400
          %v4419 = vunpack.c.l.b16 %v4380
          %v4420 = vunpack.c.l.b16 %v4381
          %v4421 = vunpack.c.l.b16 %v4382
          %v4422 = vunpack.c.l.b16 %v4383
          %v4423 = vunpack.c.l.b16 %v4384
          %v4424 = vunpack.c.l.b16 %v4385
          %v4425 = vunpack.c.l.b16 %v4386
          %v4426 = vunpack.c.l.b16 %v4387
          %v4427 = vunpack.c.l.b16 %v4388
          %v4428 = vunpack.c.l.b16 %v4389
          %v4429 = vunpack.c.l.b16 %v4390
          %v4430 = vunpack.c.l.b16 %v4391
          %v4431 = vunpack.c.l.b16 %v4392
          %v4432 = vunpack.c.l.b16 %v4393
          %v4433 = vunpack.c.l.b16 %v4394
          %v4434 = vunpack.c.l.b16 %v4395
          %v4435 = vpack.c.b16 %v4420, %v4419
          %v4436 = vpack.c.b16 %v4422, %v4421
          %v4437 = vpack.c.b16 %v4424, %v4423
          %v4438 = vpack.c.b16 %v4426, %v4425
          %v4439 = vpack.c.b16 %v4428, %v4427
          %v4440 = vpack.c.b16 %v4430, %v4429
          %v4441 = vpack.c.b16 %v4432, %v4431
          %v4442 = vpack.c.b16 %v4434, %v4433
          %4451 = vmatprep.subr.bf16.mxu0 0
          %4452 = vmatpush1.bf16.msra.mxu0 %v4442
          %4453 = vmatprep.subr.bf16.mxu0 0
          %4454 = vmatpush1.bf16.msra.mxu0 %v4441
          %4455 = vmatprep.subr.bf16.mxu0 0
          %4456 = vmatpush1.bf16.msra.mxu0 %v4440
          %4457 = vmatprep.subr.bf16.mxu0 0
          %4458 = vmatpush1.bf16.msra.mxu0 %v4439
          %4459 = vmatprep.subr.bf16.mxu0 0
          %4460 = vmatpush1.bf16.msra.mxu0 %v4438
          %4461 = vmatprep.subr.bf16.mxu0 0
          %4462 = vmatpush1.bf16.msra.mxu0 %v4437
          %4463 = vmatprep.subr.bf16.mxu0 0
          %4464 = vmatpush1.bf16.msra.mxu0 %v4436
          %4465 = vmatprep.subr.bf16.mxu0 0
          %4466 = vmatpush1.bf16.msra.mxu0 %v4435
          %4467 = vmatprep.subr.bf16.mxu0 0
          %4468 = vmatpush2.bf16.msra.mxu0 0
          %4469 = vmatprep.subr.bf16.mxu0 0
          %4470 = vmatpush2.bf16.msra.mxu0 0
          %4471 = vmatprep.subr.bf16.mxu0 0
          %4472 = vmatpush2.bf16.msra.mxu0 0
          %4473 = vmatprep.subr.bf16.mxu0 0
          %4474 = vmatpush2.bf16.msra.mxu0 0
          %4475 = vmatprep.subr.bf16.mxu0 0
          %4476 = vmatpush2.bf16.msra.mxu0 0
          %4477 = vmatprep.subr.bf16.mxu0 0
          %4478 = vmatpush2.bf16.msra.mxu0 0
          %4479 = vmatprep.subr.bf16.mxu0 0
          %4480 = vmatpush2.bf16.msra.mxu0 0
          %4481 = vmatprep.subr.bf16.mxu0 0
          %4482 = vmatpush2.bf16.msra.mxu0 0
          %4483 = vmatprep.mubr.bf16.mxu0 0
          %4484 = vmatmul.mubr.bf16.gmra.mxu0 %v4378
          %v4485 = vpop.f32.mrf.mxu0
          %v4486 = vadd.f32 %v4401, %v4485
          %v4487 = vpop.f32.mrf.mxu0
          %v4488 = vpop.f32.mrf.mxu0
          %v4489 = vadd.f32 %v4401, %v4488
          %v4490 = vpop.f32.mrf.mxu0
          %4491 = vmatprep.mubr.bf16.mxu0 0
          %4492 = vmatmul.mubr.bf16.gmra.mxu0 %v4379
          %v4493 = vpop.f32.mrf.mxu0
          %v4494 = vadd.f32 %v4401, %v4493
          %v4495 = vpop.f32.mrf.mxu0
          %v4496 = vpop.f32.mrf.mxu0
          %v4497 = vadd.f32 %v4401, %v4496
          %v4498 = vpop.f32.mrf.mxu0
          %4499 = vdwg.mxu0
          %4500 = vst [vmem:[#allocation3] sm:$0xff] %v4486
          %4501 = vst [vmem:[#allocation3 + $0x8] sm:$0xff] %v4489
          %4502 = vst [vmem:[#allocation3 + $0x10] sm:$0xff] %v4494
          %4503 = vst [vmem:[#allocation3 + $0x18] sm:$0xff] %v4497
        $region92: #{tiny_gpt_forward.1} parent=83 // pred_fallthru
          _
        // Predicated region
        $region93: #{tiny_gpt_forward.1} parent=83 // pred_check
          %p4504 = pneg %p432
        $region94: #{tiny_gpt_forward.1} parent=83 // pred_check_branch
          %4506 = sbr.rel (%p4504) target = $region96
        $region95: #{tiny_gpt_forward.1} parent=83 // pred_region
          %s4508 = ssub.s32 512, 512
          %4509 = vsyncadd [#allocation4], %s4508
          %s4510 = sshll.u32 [#allocation3], 4
          %s4511 = int_to_ptr.vmem [resolvable:$true] %s4510
          %4516 = dma.vmem_to_hbm [thread:$0]  %s4511, 512, %s16, [#allocation4], 128, 128, 8
        $region96: #{tiny_gpt_forward.1} parent=83 // pred_fallthru
          _
        // Predicated region
        $region97: #{tiny_gpt_forward.1} parent=83 // pred_check
          %p4517 = pneg %p432
        $region98: #{tiny_gpt_forward.1} parent=83 // pred_check_branch
          %4519 = sbr.rel (%p4517) target = $region100
        $region99: #{tiny_gpt_forward.1} parent=83 // pred_region
          %4520 = dma.done [#allocation4], 512
        $region100: #{tiny_gpt_forward.1} parent=83 // pred_fallthru
          _
      $region84: #{tiny_gpt_forward.1} parent=5 // pred_fallthru
        _
      %p4521 = scmp.le.s32.totalorder 2, %s23
      // Predicated region
      $region101: #{tiny_gpt_forward.1} parent=5 // pred_check
        %p4522 = pneg %p4521
      $region102: #{tiny_gpt_forward.1} parent=5 // pred_check_branch
        %4524 = sbr.rel (%p4522) target = $region104
      $region103: #{tiny_gpt_forward.1} parent=5 // pred_region
        %s4525 = ssub.s32 %s23, 2
      $region104: #{tiny_gpt_forward.1} parent=5 // pred_fallthru
        _
    $region6: #{tiny_gpt_forward.1} parent=1 // loop_footer
      %s27 = sadd.s32 1, %s23
    $region7: #{tiny_gpt_forward.1} parent=1 // loop_footer_branch
      %22 = sbr.rel target = $region3
    $region8: #{tiny_gpt_forward.1} parent=1 // loop_exit
      _
    %4526 = vsyncpa [#allocation4], 1
    %s4527 = scalar_lea.sflag [#allocation4], 1
    %4528 = vsyncpa %s4527, 1

</llo_original>
